<compile_context>
chip_gen: v7x
topology: tpu7x:2x2x1
jax: 0.10.0
libtpu: 0.0.40
codegen_flags: <defaults>
</compile_context>

<pallas_src>
import jax
import jax.numpy as jnp
from jax.experimental import pallas as pl
from jax.experimental.pallas import tpu as pltpu


def _ceil_to(x, m):
    return -(-x // m) * m


# -----------------------------------------------------------------------------
# Fully fused forward:
#   conv1+relu -> conv2+relu -> channel-major flatten -> liner1+relu -> liner3+relu
#   -> linear_only_x1+relu -> linear_a2 -> sigmoid
# -----------------------------------------------------------------------------
def lncrnadeep_forward(x_ncl, params, *, batch_tile=16, l_tile=512):
    assert batch_tile % 8 == 0 and l_tile % 128 == 0

    seq_len = params["seq_len"]
    x1 = x_ncl[:, 0:4, 0:seq_len].astype(jnp.float32)     # (B, 4, L), NCL
    B, Cin, Lin = x1.shape

    w1c = params["conv1_w"]                                # (64, 4, 10)
    w2c = params["conv2_w"]                                # (32, 64, 10)
    Cout1, _, K1 = w1c.shape
    Cout2, _, K2 = w2c.shape
    L1 = Lin - K1 + 1
    L2 = L1 - K2 + 1
    H1 = params["liner1_w"].shape[0]                       # 64

    # ---- batch tiling ----
    bt = B if B <= batch_tile else batch_tile              # bt == B_pad, or bt % 8 == 0
    B_pad = _ceil_to(B, bt)

    # ---- L tiling (lane-dense, 128-aligned chunks of the conv2 output) ----
    LT = min(l_tile, _ceil_to(L2, 128))
    L2_pad = _ceil_to(L2, LT)
    n_l = L2_pad // LT
    lc1 = LT + K2 - 1                                      # conv1 cols needed per chunk
    lcin = lc1 + K1 - 1                                    # input cols needed per chunk
    Lin_pad = L2_pad + K1 + K2 - 2

    # Zero-pad batch and sequence.  Padded sequence positions produce nonzero conv
    # outputs (bias+relu) but are multiplied by zero liner1 rows below -> exact.
    x_p = jnp.pad(x1, ((0, B_pad - B), (0, 0), (0, Lin_pad - Lin)))

    # Pre-slice overlapping input windows per L-chunk (layout plumbing only; keeps the
    # kernel free of dynamic lane-offset loads).  (B_pad, n_l, Cin, lcin)
    x_chunks = jnp.stack(
        [x_p[:, :, l * LT: l * LT + lcin] for l in range(n_l)], axis=1)

    # conv weights in im2col layout, row index = k*C + c (matches in-kernel concat order)
    w1_mat = jnp.transpose(w1c, (0, 2, 1)).reshape(Cout1, K1 * Cin)      # (64, 40)
    w2_mat = jnp.transpose(w2c, (0, 2, 1)).reshape(Cout2, K2 * Cout1)    # (32, 640)
    b1 = params["conv1_b"].reshape(Cout1, 1)
    b2 = params["conv2_b"].reshape(Cout2, 1)

    # liner1 weight (64, 32*L2) -> (32, L2, 64) -> zero rows interleaved per channel
    # block up to L2_pad (matches the channel-major flatten c*L2 + l).
    wl1 = params["liner1_w"].T.reshape(Cout2, L2, H1)
    wl1 = jnp.pad(wl1, ((0, 0), (0, L2_pad - L2), (0, 0)))               # (32, L2_pad, 64)
    bl1 = params["liner1_b"].reshape(1, H1)

    w3 = params["liner3_w"].T                              # (64, 10)
    b3 = params["liner3_b"][None, :]
    wx = params["lin_only_x1_w"].T                         # (10, 8)
    bx = params["lin_only_x1_b"][None, :]
    wa = params["linear_a2_w"].T                           # (8, 1)
    ba = params["linear_a2_b"][None, :]

    def kernel(x_ref, w1_ref, b1_ref, w2_ref, b2_ref, wl1_ref, bl1_ref,
               w3_ref, b3_ref, wx_ref, bx_ref, wa_ref, ba_ref,
               o_ref, acc_ref, h2_ref):
        l = pl.program_id(1)

        @pl.when(l == 0)
        def _():
            acc_ref[...] = jnp.zeros_like(acc_ref)

        # Hoisted (shared across the per-sample loop).
        w1m = w1_ref[...]
        b1v = b1_ref[...]
        w2m = w2_ref[...]
        b2v = b2_ref[...]

        # --- conv1 + conv2 for every sample of this batch tile, this L-chunk only ---
        def per_sample(s, carry):
            xs = x_ref[s]                                           # (Cin, lcin)
            # conv1 as one im2col dot (contraction Cin*K1 = 40)
            cols1 = jnp.concatenate([xs[:, k:k + lc1] for k in range(K1)], axis=0)
            h1c = jnp.maximum(
                jnp.dot(w1m, cols1, preferred_element_type=jnp.float32) + b1v, 0.0)
            # conv2 as one im2col dot (contraction Cout1*K2 = 640)
            cols2 = jnp.concatenate([h1c[:, k:k + LT] for k in range(K2)], axis=0)
            h2c = jnp.maximum(
                jnp.dot(w2m, cols2, preferred_element_type=jnp.float32) + b2v, 0.0)
            h2_ref[s] = h2c                                         # (Cout2, LT)
            return carry

        jax.lax.fori_loop(0, bt, per_sample, 0)

        # --- liner1 partial for this chunk (channel-major flatten) ---
        # sum_c (bt, LT) @ (LT, H1); each dot has a 128-aligned contraction.
        part = jnp.zeros((bt, H1), jnp.float32)
        for c in range(Cout2):
            part = part + jnp.dot(h2_ref[:, c, :], wl1_ref[c],
                                  preferred_element_type=jnp.float32)
        acc_ref[...] += part

        # --- tiny MLP tail + sigmoid on the last chunk only ---
        @pl.when(l == pl.num_programs(1) - 1)
        def _():
            h = jnp.maximum(acc_ref[...] + bl1_ref[...], 0.0)            # liner1 + relu
            h = jnp.maximum(
                jnp.dot(h, w3_ref[...], preferred_element_type=jnp.float32)
                + b3_ref[...], 0.0)                                      # liner3 + relu
            h = jnp.maximum(
                jnp.dot(h, wx_ref[...], preferred_element_type=jnp.float32)
                + bx_ref[...], 0.0)                                      # linear_only_x1 + relu
            z = jnp.dot(h, wa_ref[...],
                        preferred_element_type=jnp.float32) + ba_ref[...]  # linear_a2
            o_ref[...] = jax.nn.sigmoid(z)

    out = pl.pallas_call(
        kernel,
        out_shape=jax.ShapeDtypeStruct((B_pad, 1), jnp.float32),
        grid=(B_pad // bt, n_l),
        in_specs=[
            pl.BlockSpec((bt, None, Cin, lcin), lambda i, l: (i, l, 0, 0)),   # x chunks
            pl.BlockSpec((Cout1, K1 * Cin), lambda i, l: (0, 0)),             # conv1 w
            pl.BlockSpec((Cout1, 1), lambda i, l: (0, 0)),                    # conv1 b
            pl.BlockSpec((Cout2, K2 * Cout1), lambda i, l: (0, 0)),           # conv2 w
            pl.BlockSpec((Cout2, 1), lambda i, l: (0, 0)),                    # conv2 b
            pl.BlockSpec((Cout2, LT, H1), lambda i, l: (0, l, 0)),            # liner1 w slab
            pl.BlockSpec((1, H1), lambda i, l: (0, 0)),                       # liner1 b
            pl.BlockSpec(w3.shape, lambda i, l: (0, 0)),
            pl.BlockSpec(b3.shape, lambda i, l: (0, 0)),
            pl.BlockSpec(wx.shape, lambda i, l: (0, 0)),
            pl.BlockSpec(bx.shape, lambda i, l: (0, 0)),
            pl.BlockSpec(wa.shape, lambda i, l: (0, 0)),
            pl.BlockSpec(ba.shape, lambda i, l: (0, 0)),
        ],
        out_specs=pl.BlockSpec((bt, 1), lambda i, l: (i, 0)),
        scratch_shapes=[
            pltpu.VMEM((bt, H1), jnp.float32),          # liner1 accumulator (across l)
            pltpu.VMEM((bt, Cout2, LT), jnp.float32),   # conv2 outputs for this chunk
        ],
        compiler_params=pltpu.CompilerParams(
            dimension_semantics=("parallel", "arbitrary"),
            vmem_limit_bytes=32 * 1024 * 1024),
    )(x_chunks, w1_mat, b1, w2_mat, b2, wl1, bl1, w3, b3, wx, bx, wa, ba)
    return out[:B]


# -----------------------------------------------------------------------------
# Pure-JAX reference for correctness checking.
# -----------------------------------------------------------------------------
def reference_forward(x_ncl, params):
    seq_len = params["seq_len"]
    x1 = x_ncl[:, 0:4, 0:seq_len]
    x1 = jax.nn.relu(jax.lax.conv_general_dilated(
        x1, params["conv1_w"], (1,), "VALID",
        dimension_numbers=("NCH", "OIH", "NCH")) + params["conv1_b"][None, :, None])
    x1 = jax.nn.relu(jax.lax.conv_general_dilated(
        x1, params["conv2_w"], (1,), "VALID",
        dimension_numbers=("NCH", "OIH", "NCH")) + params["conv2_b"][None, :, None])
    x1 = x1.reshape(x1.shape[0], -1)
    x1 = jax.nn.relu(x1 @ params["liner1_w"].T + params["liner1_b"])
    x1 = jax.nn.relu(x1 @ params["liner3_w"].T + params["liner3_b"])
    x3 = jax.nn.relu(x1 @ params["lin_only_x1_w"].T + params["lin_only_x1_b"])
    x3 = x3 @ params["linear_a2_w"].T + params["linear_a2_b"]
    return jax.nn.sigmoid(x3)


def make_params(key, seq_len):
    K = 10
    L1 = (seq_len - K) + 1
    L2 = (L1 - K) + 1
    ks = jax.random.split(key, 12)
    s = 0.05
    return {
        "seq_len": seq_len,
        "conv1_w": s * jax.random.normal(ks[0], (64, 4, K), jnp.float32),
        "conv1_b": s * jax.random.normal(ks[1], (64,), jnp.float32),
        "conv2_w": s * jax.random.normal(ks[2], (32, 64, K), jnp.float32),
        "conv2_b": s * jax.random.normal(ks[3], (32,), jnp.float32),
        "liner1_w": s * jax.random.normal(ks[4], (64, 32 * L2), jnp.float32),
        "liner1_b": s * jax.random.normal(ks[5], (64,), jnp.float32),
        "liner3_w": s * jax.random.normal(ks[6], (10, 64), jnp.float32),
        "liner3_b": s * jax.random.normal(ks[7], (10,), jnp.float32),
        "lin_only_x1_w": s * jax.random.normal(ks[8], (8, 10), jnp.float32),
        "lin_only_x1_b": s * jax.random.normal(ks[9], (8,), jnp.float32),
        "linear_a2_w": s * jax.random.normal(ks[10], (1, 8), jnp.float32),
        "linear_a2_b": s * jax.random.normal(ks[11], (1,), jnp.float32),
    }
    # TODO(synk): lstm / rnn / liner2 / linear_1 / linear_2 / linear_a1 / linear_only_x2
    # exist in __init__ but are unused on the ENCODING_TYPE==1 forward path; omitted.


if __name__ == "__main__":
    key = jax.random.PRNGKey(0)
    k_x, k_p = jax.random.split(key)

    B, C_in, seq_len = 2, 4, 64          # scaled-down stand-in for (B, 4, 3000)
    x = jax.random.normal(k_x, (B, C_in, seq_len), jnp.float32)
    params = make_params(k_p, seq_len)

    out = jax.block_until_ready(lncrnadeep_forward(x, params))
    ref = jax.block_until_ready(reference_forward(x, params))

    assert out.shape == (B, 1)
    assert jnp.allclose(out, ref, atol=5e-5, rtol=5e-5)

    print("KERNEL_OK")
</pallas_src>

<mosaic_0001>
module attributes {stable_mosaic.version = 11 : i64} {
  func.func @kernel(%arg0: i32, %arg1: i32, %arg2: memref<2x1x4x146xf32, #tpu.memory_space<vmem>>, %arg3: memref<64x40xf32, #tpu.memory_space<vmem>>, %arg4: memref<64x1xf32, #tpu.memory_space<vmem>>, %arg5: memref<32x640xf32, #tpu.memory_space<vmem>>, %arg6: memref<32x1xf32, #tpu.memory_space<vmem>>, %arg7: memref<32x128x64xf32, #tpu.memory_space<vmem>>, %arg8: memref<1x64xf32, #tpu.memory_space<vmem>>, %arg9: memref<64x10xf32, #tpu.memory_space<vmem>>, %arg10: memref<1x10xf32, #tpu.memory_space<vmem>>, %arg11: memref<10x8xf32, #tpu.memory_space<vmem>>, %arg12: memref<1x8xf32, #tpu.memory_space<vmem>>, %arg13: memref<8x1xf32, #tpu.memory_space<vmem>>, %arg14: memref<1x1xf32, #tpu.memory_space<vmem>>, %arg15: memref<2x1xf32, #tpu.memory_space<vmem>>, %arg16: memref<2x64xf32, #tpu.memory_space<vmem>>, %arg17: memref<2x32x128xf32, #tpu.memory_space<vmem>>) attributes {dimension_semantics = [#tpu.dimension_semantics<parallel>, #tpu.dimension_semantics<arbitrary>], iteration_bounds = array<i64: 1, 1>, scalar_prefetch = 0 : i64, scratch_operands = 2 : i64, tpu.core_type = #tpu.core_type<tc>, window_params = [{transform_indices = @transform_0, window_bounds = array<i64: 2, 1, 4, 146>}, {pipeline_mode = #tpu.pipeline_mode<synchronous>, transform_indices = @transform_1, window_bounds = array<i64: 64, 40>}, {pipeline_mode = #tpu.pipeline_mode<synchronous>, transform_indices = @transform_2, window_bounds = array<i64: 64, 1>}, {pipeline_mode = #tpu.pipeline_mode<synchronous>, transform_indices = @transform_3, window_bounds = array<i64: 32, 640>}, {pipeline_mode = #tpu.pipeline_mode<synchronous>, transform_indices = @transform_4, window_bounds = array<i64: 32, 1>}, {transform_indices = @transform_5, window_bounds = array<i64: 32, 128, 64>}, {pipeline_mode = #tpu.pipeline_mode<synchronous>, transform_indices = @transform_6, window_bounds = array<i64: 1, 64>}, {pipeline_mode = #tpu.pipeline_mode<synchronous>, transform_indices = @transform_7, window_bounds = array<i64: 64, 10>}, {pipeline_mode = #tpu.pipeline_mode<synchronous>, transform_indices = @transform_8, window_bounds = array<i64: 1, 10>}, {pipeline_mode = #tpu.pipeline_mode<synchronous>, transform_indices = @transform_9, window_bounds = array<i64: 10, 8>}, {pipeline_mode = #tpu.pipeline_mode<synchronous>, transform_indices = @transform_10, window_bounds = array<i64: 1, 8>}, {pipeline_mode = #tpu.pipeline_mode<synchronous>, transform_indices = @transform_11, window_bounds = array<i64: 8, 1>}, {pipeline_mode = #tpu.pipeline_mode<synchronous>, transform_indices = @transform_12, window_bounds = array<i64: 1, 1>}, {transform_indices = @transform_13, window_bounds = array<i64: 2, 1>}]} {
    %c0_i32 = arith.constant 0 : i32
    %0 = arith.cmpi eq, %arg1, %c0_i32 : i32
    %1 = arith.extui %0 : i1 to i32
    %c0_i32_0 = arith.constant 0 : i32
    %2 = arith.cmpi ne, %1, %c0_i32_0 : i32
    scf.if %2 {
      %cst_209 = arith.constant 0.000000e+00 : f32
      %207 = vector.broadcast %cst_209 : f32 to vector<2x64xf32>
      %c0_210 = arith.constant 0 : index
      %c0_211 = arith.constant 0 : index
      %208 = vector.load %arg16[%c0_210, %c0_211] : memref<2x64xf32, #tpu.memory_space<vmem>>, vector<2x64xf32>
      tpu.vector_store %arg16[%c0_210, %c0_211], %207 {strides = array<i32>} : memref<2x64xf32, #tpu.memory_space<vmem>>, vector<2x64xf32>,
    } else {
    }
    %c0 = arith.constant 0 : index
    %c0_1 = arith.constant 0 : index
    %3 = vector.load %arg3[%c0, %c0_1] : memref<64x40xf32, #tpu.memory_space<vmem>>, vector<64x40xf32>
    %c0_2 = arith.constant 0 : index
    %c0_3 = arith.constant 0 : index
    %4 = vector.load %arg4[%c0_2, %c0_3] : memref<64x1xf32, #tpu.memory_space<vmem>>, vector<64x1xf32>
    %c0_4 = arith.constant 0 : index
    %c0_5 = arith.constant 0 : index
    %5 = vector.load %arg5[%c0_4, %c0_5] : memref<32x640xf32, #tpu.memory_space<vmem>>, vector<32x640xf32>
    %c0_6 = arith.constant 0 : index
    %c0_7 = arith.constant 0 : index
    %6 = vector.load %arg6[%c0_6, %c0_7] : memref<32x1xf32, #tpu.memory_space<vmem>>, vector<32x1xf32>
    %c0_i32_8 = arith.constant 0 : i32
    %c2_i32 = arith.constant 2 : i32
    %7 = arith.addi %c0_i32_8, %c2_i32 : i32
    %c1_i32 = arith.constant 1 : i32
    scf.for %arg18 = %c0_i32_8 to %7 step %c1_i32  : i32 {
      %207 = arith.index_cast %arg18 : i32 to index
      %c0_209 = arith.constant 0 : index
      %c0_210 = arith.constant 0 : index
      %c0_211 = arith.constant 0 : index
      %208 = vector.load %arg2[%207, %c0_209, %c0_210, %c0_211] : memref<2x1x4x146xf32, #tpu.memory_space<vmem>>, vector<1x1x4x146xf32>
      %209 = vector.shape_cast %208 : vector<1x1x4x146xf32> to vector<4x146xf32>
      %210 = vector.extract_strided_slice %209 {offsets = [0, 0], sizes = [4, 137], strides = [1, 1]} : vector<4x146xf32> to vector<4x137xf32>
      %211 = vector.extract_strided_slice %209 {offsets = [0, 1], sizes = [4, 137], strides = [1, 1]} : vector<4x146xf32> to vector<4x137xf32>
      %212 = vector.extract_strided_slice %209 {offsets = [0, 2], sizes = [4, 137], strides = [1, 1]} : vector<4x146xf32> to vector<4x137xf32>
      %213 = vector.extract_strided_slice %209 {offsets = [0, 3], sizes = [4, 137], strides = [1, 1]} : vector<4x146xf32> to vector<4x137xf32>
      %214 = vector.extract_strided_slice %209 {offsets = [0, 4], sizes = [4, 137], strides = [1, 1]} : vector<4x146xf32> to vector<4x137xf32>
      %215 = vector.extract_strided_slice %209 {offsets = [0, 5], sizes = [4, 137], strides = [1, 1]} : vector<4x146xf32> to vector<4x137xf32>
      %216 = vector.extract_strided_slice %209 {offsets = [0, 6], sizes = [4, 137], strides = [1, 1]} : vector<4x146xf32> to vector<4x137xf32>
      %217 = vector.extract_strided_slice %209 {offsets = [0, 7], sizes = [4, 137], strides = [1, 1]} : vector<4x146xf32> to vector<4x137xf32>
      %218 = vector.extract_strided_slice %209 {offsets = [0, 8], sizes = [4, 137], strides = [1, 1]} : vector<4x146xf32> to vector<4x137xf32>
      %219 = vector.extract_strided_slice %209 {offsets = [0, 9], sizes = [4, 137], strides = [1, 1]} : vector<4x146xf32> to vector<4x137xf32>
      %220 = tpu.concatenate %210, %211, %212, %213, %214, %215, %216, %217, %218, %219 in 0 : vector<4x137xf32>, vector<4x137xf32>, vector<4x137xf32>, vector<4x137xf32>, vector<4x137xf32>, vector<4x137xf32>, vector<4x137xf32>, vector<4x137xf32>, vector<4x137xf32>, vector<4x137xf32> -> vector<40x137xf32>
      %cst_212 = arith.constant dense<0.000000e+00> : vector<64x137xf32>
      %221 = tpu.matmul %3, %220, %cst_212 {dimension_numbers = #tpu.dot_dimension_numbers<[1], [0], [0], [1], [0, 0, 1, 1], [], []>} : vector<64x40xf32>, vector<40x137xf32>, vector<64x137xf32> -> vector<64x137xf32>
      %222 = vector.broadcast %4 : vector<64x1xf32> to vector<64x137xf32>
      %223 = arith.addf %221, %222 : vector<64x137xf32>
      %cst_213 = arith.constant 0.000000e+00 : f32
      %224 = vector.broadcast %cst_213 : f32 to vector<64x137xf32>
      %225 = arith.maximumf %223, %224 : vector<64x137xf32>
      %226 = vector.extract_strided_slice %225 {offsets = [0, 0], sizes = [64, 128], strides = [1, 1]} : vector<64x137xf32> to vector<64x128xf32>
      %227 = vector.extract_strided_slice %225 {offsets = [0, 1], sizes = [64, 128], strides = [1, 1]} : vector<64x137xf32> to vector<64x128xf32>
      %228 = vector.extract_strided_slice %225 {offsets = [0, 2], sizes = [64, 128], strides = [1, 1]} : vector<64x137xf32> to vector<64x128xf32>
      %229 = vector.extract_strided_slice %225 {offsets = [0, 3], sizes = [64, 128], strides = [1, 1]} : vector<64x137xf32> to vector<64x128xf32>
      %230 = vector.extract_strided_slice %225 {offsets = [0, 4], sizes = [64, 128], strides = [1, 1]} : vector<64x137xf32> to vector<64x128xf32>
      %231 = vector.extract_strided_slice %225 {offsets = [0, 5], sizes = [64, 128], strides = [1, 1]} : vector<64x137xf32> to vector<64x128xf32>
      %232 = vector.extract_strided_slice %225 {offsets = [0, 6], sizes = [64, 128], strides = [1, 1]} : vector<64x137xf32> to vector<64x128xf32>
      %233 = vector.extract_strided_slice %225 {offsets = [0, 7], sizes = [64, 128], strides = [1, 1]} : vector<64x137xf32> to vector<64x128xf32>
      %234 = vector.extract_strided_slice %225 {offsets = [0, 8], sizes = [64, 128], strides = [1, 1]} : vector<64x137xf32> to vector<64x128xf32>
      %235 = vector.extract_strided_slice %225 {offsets = [0, 9], sizes = [64, 128], strides = [1, 1]} : vector<64x137xf32> to vector<64x128xf32>
      %236 = tpu.concatenate %226, %227, %228, %229, %230, %231, %232, %233, %234, %235 in 0 : vector<64x128xf32>, vector<64x128xf32>, vector<64x128xf32>, vector<64x128xf32>, vector<64x128xf32>, vector<64x128xf32>, vector<64x128xf32>, vector<64x128xf32>, vector<64x128xf32>, vector<64x128xf32> -> vector<640x128xf32>
      %cst_214 = arith.constant dense<0.000000e+00> : vector<32x128xf32>
      %237 = tpu.matmul %5, %236, %cst_214 {dimension_numbers = #tpu.dot_dimension_numbers<[1], [0], [0], [1], [0, 0, 1, 1], [], []>} : vector<32x640xf32>, vector<640x128xf32>, vector<32x128xf32> -> vector<32x128xf32>
      %238 = vector.broadcast %6 : vector<32x1xf32> to vector<32x128xf32>
      %239 = arith.addf %237, %238 : vector<32x128xf32>
      %cst_215 = arith.constant 0.000000e+00 : f32
      %240 = vector.broadcast %cst_215 : f32 to vector<32x128xf32>
      %241 = arith.maximumf %239, %240 : vector<32x128xf32>
      %242 = arith.index_cast %arg18 : i32 to index
      %c0_216 = arith.constant 0 : index
      %c0_217 = arith.constant 0 : index
      %243 = vector.load %arg17[%242, %c0_216, %c0_217] : memref<2x32x128xf32, #tpu.memory_space<vmem>>, vector<1x32x128xf32>
      %244 = vector.shape_cast %243 : vector<1x32x128xf32> to vector<32x128xf32>
      %245 = vector.shape_cast %241 : vector<32x128xf32> to vector<1x32x128xf32>
      tpu.vector_store %arg17[%242, %c0_216, %c0_217], %245 {strides = array<i32>} : memref<2x32x128xf32, #tpu.memory_space<vmem>>, vector<1x32x128xf32>,
    }
    %c2_i32_9 = arith.constant 2 : i32
    %cst = arith.constant 0.000000e+00 : f32
    %8 = vector.broadcast %cst : f32 to vector<2x64xf32>
    %c0_10 = arith.constant 0 : index
    %c0_11 = arith.constant 0 : index
    %c0_12 = arith.constant 0 : index
    %9 = vector.load %arg17[%c0_10, %c0_11, %c0_12] : memref<2x32x128xf32, #tpu.memory_space<vmem>>, vector<2x1x128xf32>
    %10 = vector.shape_cast %9 : vector<2x1x128xf32> to vector<2x128xf32>
    %c0_13 = arith.constant 0 : index
    %c0_14 = arith.constant 0 : index
    %c0_15 = arith.constant 0 : index
    %11 = vector.load %arg7[%c0_13, %c0_14, %c0_15] : memref<32x128x64xf32, #tpu.memory_space<vmem>>, vector<1x128x64xf32>
    %12 = vector.shape_cast %11 : vector<1x128x64xf32> to vector<128x64xf32>
    %cst_16 = arith.constant dense<0.000000e+00> : vector<2x64xf32>
    %13 = tpu.matmul %10, %12, %cst_16 {dimension_numbers = #tpu.dot_dimension_numbers<[1], [0], [0], [1], [0, 0, 1, 1], [], []>} : vector<2x128xf32>, vector<128x64xf32>, vector<2x64xf32> -> vector<2x64xf32>
    %14 = arith.addf %8, %13 : vector<2x64xf32>
    %c0_17 = arith.constant 0 : index
    %c1 = arith.constant 1 : index
    %c0_18 = arith.constant 0 : index
    %15 = vector.load %arg17[%c0_17, %c1, %c0_18] : memref<2x32x128xf32, #tpu.memory_space<vmem>>, vector<2x1x128xf32>
    %16 = vector.shape_cast %15 : vector<2x1x128xf32> to vector<2x128xf32>
    %c1_19 = arith.constant 1 : index
    %c0_20 = arith.constant 0 : index
    %c0_21 = arith.constant 0 : index
    %17 = vector.load %arg7[%c1_19, %c0_20, %c0_21] : memref<32x128x64xf32, #tpu.memory_space<vmem>>, vector<1x128x64xf32>
    %18 = vector.shape_cast %17 : vector<1x128x64xf32> to vector<128x64xf32>
    %cst_22 = arith.constant dense<0.000000e+00> : vector<2x64xf32>
    %19 = tpu.matmul %16, %18, %cst_22 {dimension_numbers = #tpu.dot_dimension_numbers<[1], [0], [0], [1], [0, 0, 1, 1], [], []>} : vector<2x128xf32>, vector<128x64xf32>, vector<2x64xf32> -> vector<2x64xf32>
    %20 = arith.addf %14, %19 : vector<2x64xf32>
    %c0_23 = arith.constant 0 : index
    %c2 = arith.constant 2 : index
    %c0_24 = arith.constant 0 : index
    %21 = vector.load %arg17[%c0_23, %c2, %c0_24] : memref<2x32x128xf32, #tpu.memory_space<vmem>>, vector<2x1x128xf32>
    %22 = vector.shape_cast %21 : vector<2x1x128xf32> to vector<2x128xf32>
    %c2_25 = arith.constant 2 : index
    %c0_26 = arith.constant 0 : index
    %c0_27 = arith.constant 0 : index
    %23 = vector.load %arg7[%c2_25, %c0_26, %c0_27] : memref<32x128x64xf32, #tpu.memory_space<vmem>>, vector<1x128x64xf32>
    %24 = vector.shape_cast %23 : vector<1x128x64xf32> to vector<128x64xf32>
    %cst_28 = arith.constant dense<0.000000e+00> : vector<2x64xf32>
    %25 = tpu.matmul %22, %24, %cst_28 {dimension_numbers = #tpu.dot_dimension_numbers<[1], [0], [0], [1], [0, 0, 1, 1], [], []>} : vector<2x128xf32>, vector<128x64xf32>, vector<2x64xf32> -> vector<2x64xf32>
    %26 = arith.addf %20, %25 : vector<2x64xf32>
    %c0_29 = arith.constant 0 : index
    %c3 = arith.constant 3 : index
    %c0_30 = arith.constant 0 : index
    %27 = vector.load %arg17[%c0_29, %c3, %c0_30] : memref<2x32x128xf32, #tpu.memory_space<vmem>>, vector<2x1x128xf32>
    %28 = vector.shape_cast %27 : vector<2x1x128xf32> to vector<2x128xf32>
    %c3_31 = arith.constant 3 : index
    %c0_32 = arith.constant 0 : index
    %c0_33 = arith.constant 0 : index
    %29 = vector.load %arg7[%c3_31, %c0_32, %c0_33] : memref<32x128x64xf32, #tpu.memory_space<vmem>>, vector<1x128x64xf32>
    %30 = vector.shape_cast %29 : vector<1x128x64xf32> to vector<128x64xf32>
    %cst_34 = arith.constant dense<0.000000e+00> : vector<2x64xf32>
    %31 = tpu.matmul %28, %30, %cst_34 {dimension_numbers = #tpu.dot_dimension_numbers<[1], [0], [0], [1], [0, 0, 1, 1], [], []>} : vector<2x128xf32>, vector<128x64xf32>, vector<2x64xf32> -> vector<2x64xf32>
    %32 = arith.addf %26, %31 : vector<2x64xf32>
    %c0_35 = arith.constant 0 : index
    %c4 = arith.constant 4 : index
    %c0_36 = arith.constant 0 : index
    %33 = vector.load %arg17[%c0_35, %c4, %c0_36] : memref<2x32x128xf32, #tpu.memory_space<vmem>>, vector<2x1x128xf32>
    %34 = vector.shape_cast %33 : vector<2x1x128xf32> to vector<2x128xf32>
    %c4_37 = arith.constant 4 : index
    %c0_38 = arith.constant 0 : index
    %c0_39 = arith.constant 0 : index
    %35 = vector.load %arg7[%c4_37, %c0_38, %c0_39] : memref<32x128x64xf32, #tpu.memory_space<vmem>>, vector<1x128x64xf32>
    %36 = vector.shape_cast %35 : vector<1x128x64xf32> to vector<128x64xf32>
    %cst_40 = arith.constant dense<0.000000e+00> : vector<2x64xf32>
    %37 = tpu.matmul %34, %36, %cst_40 {dimension_numbers = #tpu.dot_dimension_numbers<[1], [0], [0], [1], [0, 0, 1, 1], [], []>} : vector<2x128xf32>, vector<128x64xf32>, vector<2x64xf32> -> vector<2x64xf32>
    %38 = arith.addf %32, %37 : vector<2x64xf32>
    %c0_41 = arith.constant 0 : index
    %c5 = arith.constant 5 : index
    %c0_42 = arith.constant 0 : index
    %39 = vector.load %arg17[%c0_41, %c5, %c0_42] : memref<2x32x128xf32, #tpu.memory_space<vmem>>, vector<2x1x128xf32>
    %40 = vector.shape_cast %39 : vector<2x1x128xf32> to vector<2x128xf32>
    %c5_43 = arith.constant 5 : index
    %c0_44 = arith.constant 0 : index
    %c0_45 = arith.constant 0 : index
    %41 = vector.load %arg7[%c5_43, %c0_44, %c0_45] : memref<32x128x64xf32, #tpu.memory_space<vmem>>, vector<1x128x64xf32>
    %42 = vector.shape_cast %41 : vector<1x128x64xf32> to vector<128x64xf32>
    %cst_46 = arith.constant dense<0.000000e+00> : vector<2x64xf32>
    %43 = tpu.matmul %40, %42, %cst_46 {dimension_numbers = #tpu.dot_dimension_numbers<[1], [0], [0], [1], [0, 0, 1, 1], [], []>} : vector<2x128xf32>, vector<128x64xf32>, vector<2x64xf32> -> vector<2x64xf32>
    %44 = arith.addf %38, %43 : vector<2x64xf32>
    %c0_47 = arith.constant 0 : index
    %c6 = arith.constant 6 : index
    %c0_48 = arith.constant 0 : index
    %45 = vector.load %arg17[%c0_47, %c6, %c0_48] : memref<2x32x128xf32, #tpu.memory_space<vmem>>, vector<2x1x128xf32>
    %46 = vector.shape_cast %45 : vector<2x1x128xf32> to vector<2x128xf32>
    %c6_49 = arith.constant 6 : index
    %c0_50 = arith.constant 0 : index
    %c0_51 = arith.constant 0 : index
    %47 = vector.load %arg7[%c6_49, %c0_50, %c0_51] : memref<32x128x64xf32, #tpu.memory_space<vmem>>, vector<1x128x64xf32>
    %48 = vector.shape_cast %47 : vector<1x128x64xf32> to vector<128x64xf32>
    %cst_52 = arith.constant dense<0.000000e+00> : vector<2x64xf32>
    %49 = tpu.matmul %46, %48, %cst_52 {dimension_numbers = #tpu.dot_dimension_numbers<[1], [0], [0], [1], [0, 0, 1, 1], [], []>} : vector<2x128xf32>, vector<128x64xf32>, vector<2x64xf32> -> vector<2x64xf32>
    %50 = arith.addf %44, %49 : vector<2x64xf32>
    %c0_53 = arith.constant 0 : index
    %c7 = arith.constant 7 : index
    %c0_54 = arith.constant 0 : index
    %51 = vector.load %arg17[%c0_53, %c7, %c0_54] : memref<2x32x128xf32, #tpu.memory_space<vmem>>, vector<2x1x128xf32>
    %52 = vector.shape_cast %51 : vector<2x1x128xf32> to vector<2x128xf32>
    %c7_55 = arith.constant 7 : index
    %c0_56 = arith.constant 0 : index
    %c0_57 = arith.constant 0 : index
    %53 = vector.load %arg7[%c7_55, %c0_56, %c0_57] : memref<32x128x64xf32, #tpu.memory_space<vmem>>, vector<1x128x64xf32>
    %54 = vector.shape_cast %53 : vector<1x128x64xf32> to vector<128x64xf32>
    %cst_58 = arith.constant dense<0.000000e+00> : vector<2x64xf32>
    %55 = tpu.matmul %52, %54, %cst_58 {dimension_numbers = #tpu.dot_dimension_numbers<[1], [0], [0], [1], [0, 0, 1, 1], [], []>} : vector<2x128xf32>, vector<128x64xf32>, vector<2x64xf32> -> vector<2x64xf32>
    %56 = arith.addf %50, %55 : vector<2x64xf32>
    %c0_59 = arith.constant 0 : index
    %c8 = arith.constant 8 : index
    %c0_60 = arith.constant 0 : index
    %57 = vector.load %arg17[%c0_59, %c8, %c0_60] : memref<2x32x128xf32, #tpu.memory_space<vmem>>, vector<2x1x128xf32>
    %58 = vector.shape_cast %57 : vector<2x1x128xf32> to vector<2x128xf32>
    %c8_61 = arith.constant 8 : index
    %c0_62 = arith.constant 0 : index
    %c0_63 = arith.constant 0 : index
    %59 = vector.load %arg7[%c8_61, %c0_62, %c0_63] : memref<32x128x64xf32, #tpu.memory_space<vmem>>, vector<1x128x64xf32>
    %60 = vector.shape_cast %59 : vector<1x128x64xf32> to vector<128x64xf32>
    %cst_64 = arith.constant dense<0.000000e+00> : vector<2x64xf32>
    %61 = tpu.matmul %58, %60, %cst_64 {dimension_numbers = #tpu.dot_dimension_numbers<[1], [0], [0], [1], [0, 0, 1, 1], [], []>} : vector<2x128xf32>, vector<128x64xf32>, vector<2x64xf32> -> vector<2x64xf32>
    %62 = arith.addf %56, %61 : vector<2x64xf32>
    %c0_65 = arith.constant 0 : index
    %c9 = arith.constant 9 : index
    %c0_66 = arith.constant 0 : index
    %63 = vector.load %arg17[%c0_65, %c9, %c0_66] : memref<2x32x128xf32, #tpu.memory_space<vmem>>, vector<2x1x128xf32>
    %64 = vector.shape_cast %63 : vector<2x1x128xf32> to vector<2x128xf32>
    %c9_67 = arith.constant 9 : index
    %c0_68 = arith.constant 0 : index
    %c0_69 = arith.constant 0 : index
    %65 = vector.load %arg7[%c9_67, %c0_68, %c0_69] : memref<32x128x64xf32, #tpu.memory_space<vmem>>, vector<1x128x64xf32>
    %66 = vector.shape_cast %65 : vector<1x128x64xf32> to vector<128x64xf32>
    %cst_70 = arith.constant dense<0.000000e+00> : vector<2x64xf32>
    %67 = tpu.matmul %64, %66, %cst_70 {dimension_numbers = #tpu.dot_dimension_numbers<[1], [0], [0], [1], [0, 0, 1, 1], [], []>} : vector<2x128xf32>, vector<128x64xf32>, vector<2x64xf32> -> vector<2x64xf32>
    %68 = arith.addf %62, %67 : vector<2x64xf32>
    %c0_71 = arith.constant 0 : index
    %c10 = arith.constant 10 : index
    %c0_72 = arith.constant 0 : index
    %69 = vector.load %arg17[%c0_71, %c10, %c0_72] : memref<2x32x128xf32, #tpu.memory_space<vmem>>, vector<2x1x128xf32>
    %70 = vector.shape_cast %69 : vector<2x1x128xf32> to vector<2x128xf32>
    %c10_73 = arith.constant 10 : index
    %c0_74 = arith.constant 0 : index
    %c0_75 = arith.constant 0 : index
    %71 = vector.load %arg7[%c10_73, %c0_74, %c0_75] : memref<32x128x64xf32, #tpu.memory_space<vmem>>, vector<1x128x64xf32>
    %72 = vector.shape_cast %71 : vector<1x128x64xf32> to vector<128x64xf32>
    %cst_76 = arith.constant dense<0.000000e+00> : vector<2x64xf32>
    %73 = tpu.matmul %70, %72, %cst_76 {dimension_numbers = #tpu.dot_dimension_numbers<[1], [0], [0], [1], [0, 0, 1, 1], [], []>} : vector<2x128xf32>, vector<128x64xf32>, vector<2x64xf32> -> vector<2x64xf32>
    %74 = arith.addf %68, %73 : vector<2x64xf32>
    %c0_77 = arith.constant 0 : index
    %c11 = arith.constant 11 : index
    %c0_78 = arith.constant 0 : index
    %75 = vector.load %arg17[%c0_77, %c11, %c0_78] : memref<2x32x128xf32, #tpu.memory_space<vmem>>, vector<2x1x128xf32>
    %76 = vector.shape_cast %75 : vector<2x1x128xf32> to vector<2x128xf32>
    %c11_79 = arith.constant 11 : index
    %c0_80 = arith.constant 0 : index
    %c0_81 = arith.constant 0 : index
    %77 = vector.load %arg7[%c11_79, %c0_80, %c0_81] : memref<32x128x64xf32, #tpu.memory_space<vmem>>, vector<1x128x64xf32>
    %78 = vector.shape_cast %77 : vector<1x128x64xf32> to vector<128x64xf32>
    %cst_82 = arith.constant dense<0.000000e+00> : vector<2x64xf32>
    %79 = tpu.matmul %76, %78, %cst_82 {dimension_numbers = #tpu.dot_dimension_numbers<[1], [0], [0], [1], [0, 0, 1, 1], [], []>} : vector<2x128xf32>, vector<128x64xf32>, vector<2x64xf32> -> vector<2x64xf32>
    %80 = arith.addf %74, %79 : vector<2x64xf32>
    %c0_83 = arith.constant 0 : index
    %c12 = arith.constant 12 : index
    %c0_84 = arith.constant 0 : index
    %81 = vector.load %arg17[%c0_83, %c12, %c0_84] : memref<2x32x128xf32, #tpu.memory_space<vmem>>, vector<2x1x128xf32>
    %82 = vector.shape_cast %81 : vector<2x1x128xf32> to vector<2x128xf32>
    %c12_85 = arith.constant 12 : index
    %c0_86 = arith.constant 0 : index
    %c0_87 = arith.constant 0 : index
    %83 = vector.load %arg7[%c12_85, %c0_86, %c0_87] : memref<32x128x64xf32, #tpu.memory_space<vmem>>, vector<1x128x64xf32>
    %84 = vector.shape_cast %83 : vector<1x128x64xf32> to vector<128x64xf32>
    %cst_88 = arith.constant dense<0.000000e+00> : vector<2x64xf32>
    %85 = tpu.matmul %82, %84, %cst_88 {dimension_numbers = #tpu.dot_dimension_numbers<[1], [0], [0], [1], [0, 0, 1, 1], [], []>} : vector<2x128xf32>, vector<128x64xf32>, vector<2x64xf32> -> vector<2x64xf32>
    %86 = arith.addf %80, %85 : vector<2x64xf32>
    %c0_89 = arith.constant 0 : index
    %c13 = arith.constant 13 : index
    %c0_90 = arith.constant 0 : index
    %87 = vector.load %arg17[%c0_89, %c13, %c0_90] : memref<2x32x128xf32, #tpu.memory_space<vmem>>, vector<2x1x128xf32>
    %88 = vector.shape_cast %87 : vector<2x1x128xf32> to vector<2x128xf32>
    %c13_91 = arith.constant 13 : index
    %c0_92 = arith.constant 0 : index
    %c0_93 = arith.constant 0 : index
    %89 = vector.load %arg7[%c13_91, %c0_92, %c0_93] : memref<32x128x64xf32, #tpu.memory_space<vmem>>, vector<1x128x64xf32>
    %90 = vector.shape_cast %89 : vector<1x128x64xf32> to vector<128x64xf32>
    %cst_94 = arith.constant dense<0.000000e+00> : vector<2x64xf32>
    %91 = tpu.matmul %88, %90, %cst_94 {dimension_numbers = #tpu.dot_dimension_numbers<[1], [0], [0], [1], [0, 0, 1, 1], [], []>} : vector<2x128xf32>, vector<128x64xf32>, vector<2x64xf32> -> vector<2x64xf32>
    %92 = arith.addf %86, %91 : vector<2x64xf32>
    %c0_95 = arith.constant 0 : index
    %c14 = arith.constant 14 : index
    %c0_96 = arith.constant 0 : index
    %93 = vector.load %arg17[%c0_95, %c14, %c0_96] : memref<2x32x128xf32, #tpu.memory_space<vmem>>, vector<2x1x128xf32>
    %94 = vector.shape_cast %93 : vector<2x1x128xf32> to vector<2x128xf32>
    %c14_97 = arith.constant 14 : index
    %c0_98 = arith.constant 0 : index
    %c0_99 = arith.constant 0 : index
    %95 = vector.load %arg7[%c14_97, %c0_98, %c0_99] : memref<32x128x64xf32, #tpu.memory_space<vmem>>, vector<1x128x64xf32>
    %96 = vector.shape_cast %95 : vector<1x128x64xf32> to vector<128x64xf32>
    %cst_100 = arith.constant dense<0.000000e+00> : vector<2x64xf32>
    %97 = tpu.matmul %94, %96, %cst_100 {dimension_numbers = #tpu.dot_dimension_numbers<[1], [0], [0], [1], [0, 0, 1, 1], [], []>} : vector<2x128xf32>, vector<128x64xf32>, vector<2x64xf32> -> vector<2x64xf32>
    %98 = arith.addf %92, %97 : vector<2x64xf32>
    %c0_101 = arith.constant 0 : index
    %c15 = arith.constant 15 : index
    %c0_102 = arith.constant 0 : index
    %99 = vector.load %arg17[%c0_101, %c15, %c0_102] : memref<2x32x128xf32, #tpu.memory_space<vmem>>, vector<2x1x128xf32>
    %100 = vector.shape_cast %99 : vector<2x1x128xf32> to vector<2x128xf32>
    %c15_103 = arith.constant 15 : index
    %c0_104 = arith.constant 0 : index
    %c0_105 = arith.constant 0 : index
    %101 = vector.load %arg7[%c15_103, %c0_104, %c0_105] : memref<32x128x64xf32, #tpu.memory_space<vmem>>, vector<1x128x64xf32>
    %102 = vector.shape_cast %101 : vector<1x128x64xf32> to vector<128x64xf32>
    %cst_106 = arith.constant dense<0.000000e+00> : vector<2x64xf32>
    %103 = tpu.matmul %100, %102, %cst_106 {dimension_numbers = #tpu.dot_dimension_numbers<[1], [0], [0], [1], [0, 0, 1, 1], [], []>} : vector<2x128xf32>, vector<128x64xf32>, vector<2x64xf32> -> vector<2x64xf32>
    %104 = arith.addf %98, %103 : vector<2x64xf32>
    %c0_107 = arith.constant 0 : index
    %c16 = arith.constant 16 : index
    %c0_108 = arith.constant 0 : index
    %105 = vector.load %arg17[%c0_107, %c16, %c0_108] : memref<2x32x128xf32, #tpu.memory_space<vmem>>, vector<2x1x128xf32>
    %106 = vector.shape_cast %105 : vector<2x1x128xf32> to vector<2x128xf32>
    %c16_109 = arith.constant 16 : index
    %c0_110 = arith.constant 0 : index
    %c0_111 = arith.constant 0 : index
    %107 = vector.load %arg7[%c16_109, %c0_110, %c0_111] : memref<32x128x64xf32, #tpu.memory_space<vmem>>, vector<1x128x64xf32>
    %108 = vector.shape_cast %107 : vector<1x128x64xf32> to vector<128x64xf32>
    %cst_112 = arith.constant dense<0.000000e+00> : vector<2x64xf32>
    %109 = tpu.matmul %106, %108, %cst_112 {dimension_numbers = #tpu.dot_dimension_numbers<[1], [0], [0], [1], [0, 0, 1, 1], [], []>} : vector<2x128xf32>, vector<128x64xf32>, vector<2x64xf32> -> vector<2x64xf32>
    %110 = arith.addf %104, %109 : vector<2x64xf32>
    %c0_113 = arith.constant 0 : index
    %c17 = arith.constant 17 : index
    %c0_114 = arith.constant 0 : index
    %111 = vector.load %arg17[%c0_113, %c17, %c0_114] : memref<2x32x128xf32, #tpu.memory_space<vmem>>, vector<2x1x128xf32>
    %112 = vector.shape_cast %111 : vector<2x1x128xf32> to vector<2x128xf32>
    %c17_115 = arith.constant 17 : index
    %c0_116 = arith.constant 0 : index
    %c0_117 = arith.constant 0 : index
    %113 = vector.load %arg7[%c17_115, %c0_116, %c0_117] : memref<32x128x64xf32, #tpu.memory_space<vmem>>, vector<1x128x64xf32>
    %114 = vector.shape_cast %113 : vector<1x128x64xf32> to vector<128x64xf32>
    %cst_118 = arith.constant dense<0.000000e+00> : vector<2x64xf32>
    %115 = tpu.matmul %112, %114, %cst_118 {dimension_numbers = #tpu.dot_dimension_numbers<[1], [0], [0], [1], [0, 0, 1, 1], [], []>} : vector<2x128xf32>, vector<128x64xf32>, vector<2x64xf32> -> vector<2x64xf32>
    %116 = arith.addf %110, %115 : vector<2x64xf32>
    %c0_119 = arith.constant 0 : index
    %c18 = arith.constant 18 : index
    %c0_120 = arith.constant 0 : index
    %117 = vector.load %arg17[%c0_119, %c18, %c0_120] : memref<2x32x128xf32, #tpu.memory_space<vmem>>, vector<2x1x128xf32>
    %118 = vector.shape_cast %117 : vector<2x1x128xf32> to vector<2x128xf32>
    %c18_121 = arith.constant 18 : index
    %c0_122 = arith.constant 0 : index
    %c0_123 = arith.constant 0 : index
    %119 = vector.load %arg7[%c18_121, %c0_122, %c0_123] : memref<32x128x64xf32, #tpu.memory_space<vmem>>, vector<1x128x64xf32>
    %120 = vector.shape_cast %119 : vector<1x128x64xf32> to vector<128x64xf32>
    %cst_124 = arith.constant dense<0.000000e+00> : vector<2x64xf32>
    %121 = tpu.matmul %118, %120, %cst_124 {dimension_numbers = #tpu.dot_dimension_numbers<[1], [0], [0], [1], [0, 0, 1, 1], [], []>} : vector<2x128xf32>, vector<128x64xf32>, vector<2x64xf32> -> vector<2x64xf32>
    %122 = arith.addf %116, %121 : vector<2x64xf32>
    %c0_125 = arith.constant 0 : index
    %c19 = arith.constant 19 : index
    %c0_126 = arith.constant 0 : index
    %123 = vector.load %arg17[%c0_125, %c19, %c0_126] : memref<2x32x128xf32, #tpu.memory_space<vmem>>, vector<2x1x128xf32>
    %124 = vector.shape_cast %123 : vector<2x1x128xf32> to vector<2x128xf32>
    %c19_127 = arith.constant 19 : index
    %c0_128 = arith.constant 0 : index
    %c0_129 = arith.constant 0 : index
    %125 = vector.load %arg7[%c19_127, %c0_128, %c0_129] : memref<32x128x64xf32, #tpu.memory_space<vmem>>, vector<1x128x64xf32>
    %126 = vector.shape_cast %125 : vector<1x128x64xf32> to vector<128x64xf32>
    %cst_130 = arith.constant dense<0.000000e+00> : vector<2x64xf32>
    %127 = tpu.matmul %124, %126, %cst_130 {dimension_numbers = #tpu.dot_dimension_numbers<[1], [0], [0], [1], [0, 0, 1, 1], [], []>} : vector<2x128xf32>, vector<128x64xf32>, vector<2x64xf32> -> vector<2x64xf32>
    %128 = arith.addf %122, %127 : vector<2x64xf32>
    %c0_131 = arith.constant 0 : index
    %c20 = arith.constant 20 : index
    %c0_132 = arith.constant 0 : index
    %129 = vector.load %arg17[%c0_131, %c20, %c0_132] : memref<2x32x128xf32, #tpu.memory_space<vmem>>, vector<2x1x128xf32>
    %130 = vector.shape_cast %129 : vector<2x1x128xf32> to vector<2x128xf32>
    %c20_133 = arith.constant 20 : index
    %c0_134 = arith.constant 0 : index
    %c0_135 = arith.constant 0 : index
    %131 = vector.load %arg7[%c20_133, %c0_134, %c0_135] : memref<32x128x64xf32, #tpu.memory_space<vmem>>, vector<1x128x64xf32>
    %132 = vector.shape_cast %131 : vector<1x128x64xf32> to vector<128x64xf32>
    %cst_136 = arith.constant dense<0.000000e+00> : vector<2x64xf32>
    %133 = tpu.matmul %130, %132, %cst_136 {dimension_numbers = #tpu.dot_dimension_numbers<[1], [0], [0], [1], [0, 0, 1, 1], [], []>} : vector<2x128xf32>, vector<128x64xf32>, vector<2x64xf32> -> vector<2x64xf32>
    %134 = arith.addf %128, %133 : vector<2x64xf32>
    %c0_137 = arith.constant 0 : index
    %c21 = arith.constant 21 : index
    %c0_138 = arith.constant 0 : index
    %135 = vector.load %arg17[%c0_137, %c21, %c0_138] : memref<2x32x128xf32, #tpu.memory_space<vmem>>, vector<2x1x128xf32>
    %136 = vector.shape_cast %135 : vector<2x1x128xf32> to vector<2x128xf32>
    %c21_139 = arith.constant 21 : index
    %c0_140 = arith.constant 0 : index
    %c0_141 = arith.constant 0 : index
    %137 = vector.load %arg7[%c21_139, %c0_140, %c0_141] : memref<32x128x64xf32, #tpu.memory_space<vmem>>, vector<1x128x64xf32>
    %138 = vector.shape_cast %137 : vector<1x128x64xf32> to vector<128x64xf32>
    %cst_142 = arith.constant dense<0.000000e+00> : vector<2x64xf32>
    %139 = tpu.matmul %136, %138, %cst_142 {dimension_numbers = #tpu.dot_dimension_numbers<[1], [0], [0], [1], [0, 0, 1, 1], [], []>} : vector<2x128xf32>, vector<128x64xf32>, vector<2x64xf32> -> vector<2x64xf32>
    %140 = arith.addf %134, %139 : vector<2x64xf32>
    %c0_143 = arith.constant 0 : index
    %c22 = arith.constant 22 : index
    %c0_144 = arith.constant 0 : index
    %141 = vector.load %arg17[%c0_143, %c22, %c0_144] : memref<2x32x128xf32, #tpu.memory_space<vmem>>, vector<2x1x128xf32>
    %142 = vector.shape_cast %141 : vector<2x1x128xf32> to vector<2x128xf32>
    %c22_145 = arith.constant 22 : index
    %c0_146 = arith.constant 0 : index
    %c0_147 = arith.constant 0 : index
    %143 = vector.load %arg7[%c22_145, %c0_146, %c0_147] : memref<32x128x64xf32, #tpu.memory_space<vmem>>, vector<1x128x64xf32>
    %144 = vector.shape_cast %143 : vector<1x128x64xf32> to vector<128x64xf32>
    %cst_148 = arith.constant dense<0.000000e+00> : vector<2x64xf32>
    %145 = tpu.matmul %142, %144, %cst_148 {dimension_numbers = #tpu.dot_dimension_numbers<[1], [0], [0], [1], [0, 0, 1, 1], [], []>} : vector<2x128xf32>, vector<128x64xf32>, vector<2x64xf32> -> vector<2x64xf32>
    %146 = arith.addf %140, %145 : vector<2x64xf32>
    %c0_149 = arith.constant 0 : index
    %c23 = arith.constant 23 : index
    %c0_150 = arith.constant 0 : index
    %147 = vector.load %arg17[%c0_149, %c23, %c0_150] : memref<2x32x128xf32, #tpu.memory_space<vmem>>, vector<2x1x128xf32>
    %148 = vector.shape_cast %147 : vector<2x1x128xf32> to vector<2x128xf32>
    %c23_151 = arith.constant 23 : index
    %c0_152 = arith.constant 0 : index
    %c0_153 = arith.constant 0 : index
    %149 = vector.load %arg7[%c23_151, %c0_152, %c0_153] : memref<32x128x64xf32, #tpu.memory_space<vmem>>, vector<1x128x64xf32>
    %150 = vector.shape_cast %149 : vector<1x128x64xf32> to vector<128x64xf32>
    %cst_154 = arith.constant dense<0.000000e+00> : vector<2x64xf32>
    %151 = tpu.matmul %148, %150, %cst_154 {dimension_numbers = #tpu.dot_dimension_numbers<[1], [0], [0], [1], [0, 0, 1, 1], [], []>} : vector<2x128xf32>, vector<128x64xf32>, vector<2x64xf32> -> vector<2x64xf32>
    %152 = arith.addf %146, %151 : vector<2x64xf32>
    %c0_155 = arith.constant 0 : index
    %c24 = arith.constant 24 : index
    %c0_156 = arith.constant 0 : index
    %153 = vector.load %arg17[%c0_155, %c24, %c0_156] : memref<2x32x128xf32, #tpu.memory_space<vmem>>, vector<2x1x128xf32>
    %154 = vector.shape_cast %153 : vector<2x1x128xf32> to vector<2x128xf32>
    %c24_157 = arith.constant 24 : index
    %c0_158 = arith.constant 0 : index
    %c0_159 = arith.constant 0 : index
    %155 = vector.load %arg7[%c24_157, %c0_158, %c0_159] : memref<32x128x64xf32, #tpu.memory_space<vmem>>, vector<1x128x64xf32>
    %156 = vector.shape_cast %155 : vector<1x128x64xf32> to vector<128x64xf32>
    %cst_160 = arith.constant dense<0.000000e+00> : vector<2x64xf32>
    %157 = tpu.matmul %154, %156, %cst_160 {dimension_numbers = #tpu.dot_dimension_numbers<[1], [0], [0], [1], [0, 0, 1, 1], [], []>} : vector<2x128xf32>, vector<128x64xf32>, vector<2x64xf32> -> vector<2x64xf32>
    %158 = arith.addf %152, %157 : vector<2x64xf32>
    %c0_161 = arith.constant 0 : index
    %c25 = arith.constant 25 : index
    %c0_162 = arith.constant 0 : index
    %159 = vector.load %arg17[%c0_161, %c25, %c0_162] : memref<2x32x128xf32, #tpu.memory_space<vmem>>, vector<2x1x128xf32>
    %160 = vector.shape_cast %159 : vector<2x1x128xf32> to vector<2x128xf32>
    %c25_163 = arith.constant 25 : index
    %c0_164 = arith.constant 0 : index
    %c0_165 = arith.constant 0 : index
    %161 = vector.load %arg7[%c25_163, %c0_164, %c0_165] : memref<32x128x64xf32, #tpu.memory_space<vmem>>, vector<1x128x64xf32>
    %162 = vector.shape_cast %161 : vector<1x128x64xf32> to vector<128x64xf32>
    %cst_166 = arith.constant dense<0.000000e+00> : vector<2x64xf32>
    %163 = tpu.matmul %160, %162, %cst_166 {dimension_numbers = #tpu.dot_dimension_numbers<[1], [0], [0], [1], [0, 0, 1, 1], [], []>} : vector<2x128xf32>, vector<128x64xf32>, vector<2x64xf32> -> vector<2x64xf32>
    %164 = arith.addf %158, %163 : vector<2x64xf32>
    %c0_167 = arith.constant 0 : index
    %c26 = arith.constant 26 : index
    %c0_168 = arith.constant 0 : index
    %165 = vector.load %arg17[%c0_167, %c26, %c0_168] : memref<2x32x128xf32, #tpu.memory_space<vmem>>, vector<2x1x128xf32>
    %166 = vector.shape_cast %165 : vector<2x1x128xf32> to vector<2x128xf32>
    %c26_169 = arith.constant 26 : index
    %c0_170 = arith.constant 0 : index
    %c0_171 = arith.constant 0 : index
    %167 = vector.load %arg7[%c26_169, %c0_170, %c0_171] : memref<32x128x64xf32, #tpu.memory_space<vmem>>, vector<1x128x64xf32>
    %168 = vector.shape_cast %167 : vector<1x128x64xf32> to vector<128x64xf32>
    %cst_172 = arith.constant dense<0.000000e+00> : vector<2x64xf32>
    %169 = tpu.matmul %166, %168, %cst_172 {dimension_numbers = #tpu.dot_dimension_numbers<[1], [0], [0], [1], [0, 0, 1, 1], [], []>} : vector<2x128xf32>, vector<128x64xf32>, vector<2x64xf32> -> vector<2x64xf32>
    %170 = arith.addf %164, %169 : vector<2x64xf32>
    %c0_173 = arith.constant 0 : index
    %c27 = arith.constant 27 : index
    %c0_174 = arith.constant 0 : index
    %171 = vector.load %arg17[%c0_173, %c27, %c0_174] : memref<2x32x128xf32, #tpu.memory_space<vmem>>, vector<2x1x128xf32>
    %172 = vector.shape_cast %171 : vector<2x1x128xf32> to vector<2x128xf32>
    %c27_175 = arith.constant 27 : index
    %c0_176 = arith.constant 0 : index
    %c0_177 = arith.constant 0 : index
    %173 = vector.load %arg7[%c27_175, %c0_176, %c0_177] : memref<32x128x64xf32, #tpu.memory_space<vmem>>, vector<1x128x64xf32>
    %174 = vector.shape_cast %173 : vector<1x128x64xf32> to vector<128x64xf32>
    %cst_178 = arith.constant dense<0.000000e+00> : vector<2x64xf32>
    %175 = tpu.matmul %172, %174, %cst_178 {dimension_numbers = #tpu.dot_dimension_numbers<[1], [0], [0], [1], [0, 0, 1, 1], [], []>} : vector<2x128xf32>, vector<128x64xf32>, vector<2x64xf32> -> vector<2x64xf32>
    %176 = arith.addf %170, %175 : vector<2x64xf32>
    %c0_179 = arith.constant 0 : index
    %c28 = arith.constant 28 : index
    %c0_180 = arith.constant 0 : index
    %177 = vector.load %arg17[%c0_179, %c28, %c0_180] : memref<2x32x128xf32, #tpu.memory_space<vmem>>, vector<2x1x128xf32>
    %178 = vector.shape_cast %177 : vector<2x1x128xf32> to vector<2x128xf32>
    %c28_181 = arith.constant 28 : index
    %c0_182 = arith.constant 0 : index
    %c0_183 = arith.constant 0 : index
    %179 = vector.load %arg7[%c28_181, %c0_182, %c0_183] : memref<32x128x64xf32, #tpu.memory_space<vmem>>, vector<1x128x64xf32>
    %180 = vector.shape_cast %179 : vector<1x128x64xf32> to vector<128x64xf32>
    %cst_184 = arith.constant dense<0.000000e+00> : vector<2x64xf32>
    %181 = tpu.matmul %178, %180, %cst_184 {dimension_numbers = #tpu.dot_dimension_numbers<[1], [0], [0], [1], [0, 0, 1, 1], [], []>} : vector<2x128xf32>, vector<128x64xf32>, vector<2x64xf32> -> vector<2x64xf32>
    %182 = arith.addf %176, %181 : vector<2x64xf32>
    %c0_185 = arith.constant 0 : index
    %c29 = arith.constant 29 : index
    %c0_186 = arith.constant 0 : index
    %183 = vector.load %arg17[%c0_185, %c29, %c0_186] : memref<2x32x128xf32, #tpu.memory_space<vmem>>, vector<2x1x128xf32>
    %184 = vector.shape_cast %183 : vector<2x1x128xf32> to vector<2x128xf32>
    %c29_187 = arith.constant 29 : index
    %c0_188 = arith.constant 0 : index
    %c0_189 = arith.constant 0 : index
    %185 = vector.load %arg7[%c29_187, %c0_188, %c0_189] : memref<32x128x64xf32, #tpu.memory_space<vmem>>, vector<1x128x64xf32>
    %186 = vector.shape_cast %185 : vector<1x128x64xf32> to vector<128x64xf32>
    %cst_190 = arith.constant dense<0.000000e+00> : vector<2x64xf32>
    %187 = tpu.matmul %184, %186, %cst_190 {dimension_numbers = #tpu.dot_dimension_numbers<[1], [0], [0], [1], [0, 0, 1, 1], [], []>} : vector<2x128xf32>, vector<128x64xf32>, vector<2x64xf32> -> vector<2x64xf32>
    %188 = arith.addf %182, %187 : vector<2x64xf32>
    %c0_191 = arith.constant 0 : index
    %c30 = arith.constant 30 : index
    %c0_192 = arith.constant 0 : index
    %189 = vector.load %arg17[%c0_191, %c30, %c0_192] : memref<2x32x128xf32, #tpu.memory_space<vmem>>, vector<2x1x128xf32>
    %190 = vector.shape_cast %189 : vector<2x1x128xf32> to vector<2x128xf32>
    %c30_193 = arith.constant 30 : index
    %c0_194 = arith.constant 0 : index
    %c0_195 = arith.constant 0 : index
    %191 = vector.load %arg7[%c30_193, %c0_194, %c0_195] : memref<32x128x64xf32, #tpu.memory_space<vmem>>, vector<1x128x64xf32>
    %192 = vector.shape_cast %191 : vector<1x128x64xf32> to vector<128x64xf32>
    %cst_196 = arith.constant dense<0.000000e+00> : vector<2x64xf32>
    %193 = tpu.matmul %190, %192, %cst_196 {dimension_numbers = #tpu.dot_dimension_numbers<[1], [0], [0], [1], [0, 0, 1, 1], [], []>} : vector<2x128xf32>, vector<128x64xf32>, vector<2x64xf32> -> vector<2x64xf32>
    %194 = arith.addf %188, %193 : vector<2x64xf32>
    %c0_197 = arith.constant 0 : index
    %c31 = arith.constant 31 : index
    %c0_198 = arith.constant 0 : index
    %195 = vector.load %arg17[%c0_197, %c31, %c0_198] : memref<2x32x128xf32, #tpu.memory_space<vmem>>, vector<2x1x128xf32>
    %196 = vector.shape_cast %195 : vector<2x1x128xf32> to vector<2x128xf32>
    %c31_199 = arith.constant 31 : index
    %c0_200 = arith.constant 0 : index
    %c0_201 = arith.constant 0 : index
    %197 = vector.load %arg7[%c31_199, %c0_200, %c0_201] : memref<32x128x64xf32, #tpu.memory_space<vmem>>, vector<1x128x64xf32>
    %198 = vector.shape_cast %197 : vector<1x128x64xf32> to vector<128x64xf32>
    %cst_202 = arith.constant dense<0.000000e+00> : vector<2x64xf32>
    %199 = tpu.matmul %196, %198, %cst_202 {dimension_numbers = #tpu.dot_dimension_numbers<[1], [0], [0], [1], [0, 0, 1, 1], [], []>} : vector<2x128xf32>, vector<128x64xf32>, vector<2x64xf32> -> vector<2x64xf32>
    %200 = arith.addf %194, %199 : vector<2x64xf32>
    %c0_203 = arith.constant 0 : index
    %c0_204 = arith.constant 0 : index
    %201 = vector.load %arg16[%c0_203, %c0_204] : memref<2x64xf32, #tpu.memory_space<vmem>>, vector<2x64xf32>
    %202 = arith.addf %201, %200 : vector<2x64xf32>
    %c0_205 = arith.constant 0 : index
    %c0_206 = arith.constant 0 : index
    %203 = vector.load %arg16[%c0_205, %c0_206] : memref<2x64xf32, #tpu.memory_space<vmem>>, vector<2x64xf32>
    tpu.vector_store %arg16[%c0_205, %c0_206], %202 {strides = array<i32>} : memref<2x64xf32, #tpu.memory_space<vmem>>, vector<2x64xf32>,
    %c0_i32_207 = arith.constant 0 : i32
    %204 = arith.cmpi eq, %arg1, %c0_i32_207 : i32
    %205 = arith.extui %204 : i1 to i32
    %c0_i32_208 = arith.constant 0 : i32
    %206 = arith.cmpi ne, %205, %c0_i32_208 : i32
    scf.if %206 {
      %c0_209 = arith.constant 0 : index
      %c0_210 = arith.constant 0 : index
      %207 = vector.load %arg16[%c0_209, %c0_210] : memref<2x64xf32, #tpu.memory_space<vmem>>, vector<2x64xf32>
      %c0_211 = arith.constant 0 : index
      %c0_212 = arith.constant 0 : index
      %208 = vector.load %arg8[%c0_211, %c0_212] : memref<1x64xf32, #tpu.memory_space<vmem>>, vector<1x64xf32>
      %209 = vector.broadcast %208 : vector<1x64xf32> to vector<2x64xf32>
      %210 = arith.addf %207, %209 : vector<2x64xf32>
      %cst_213 = arith.constant 0.000000e+00 : f32
      %211 = vector.broadcast %cst_213 : f32 to vector<2x64xf32>
      %212 = arith.maximumf %210, %211 : vector<2x64xf32>
      %c0_214 = arith.constant 0 : index
      %c0_215 = arith.constant 0 : index
      %213 = vector.load %arg9[%c0_214, %c0_215] : memref<64x10xf32, #tpu.memory_space<vmem>>, vector<64x10xf32>
      %cst_216 = arith.constant dense<0.000000e+00> : vector<2x10xf32>
      %214 = tpu.matmul %212, %213, %cst_216 {dimension_numbers = #tpu.dot_dimension_numbers<[1], [0], [0], [1], [0, 0, 1, 1], [], []>} : vector<2x64xf32>, vector<64x10xf32>, vector<2x10xf32> -> vector<2x10xf32>
      %c0_217 = arith.constant 0 : index
      %c0_218 = arith.constant 0 : index
      %215 = vector.load %arg10[%c0_217, %c0_218] : memref<1x10xf32, #tpu.memory_space<vmem>>, vector<1x10xf32>
      %216 = vector.broadcast %215 : vector<1x10xf32> to vector<2x10xf32>
      %217 = arith.addf %214, %216 : vector<2x10xf32>
      %cst_219 = arith.constant 0.000000e+00 : f32
      %218 = vector.broadcast %cst_219 : f32 to vector<2x10xf32>
      %219 = arith.maximumf %217, %218 : vector<2x10xf32>
      %c0_220 = arith.constant 0 : index
      %c0_221 = arith.constant 0 : index
      %220 = vector.load %arg11[%c0_220, %c0_221] : memref<10x8xf32, #tpu.memory_space<vmem>>, vector<10x8xf32>
      %cst_222 = arith.constant dense<0.000000e+00> : vector<2x8xf32>
      %221 = tpu.matmul %219, %220, %cst_222 {dimension_numbers = #tpu.dot_dimension_numbers<[1], [0], [0], [1], [0, 0, 1, 1], [], []>} : vector<2x10xf32>, vector<10x8xf32>, vector<2x8xf32> -> vector<2x8xf32>
      %c0_223 = arith.constant 0 : index
      %c0_224 = arith.constant 0 : index
      %222 = vector.load %arg12[%c0_223, %c0_224] : memref<1x8xf32, #tpu.memory_space<vmem>>, vector<1x8xf32>
      %223 = vector.broadcast %222 : vector<1x8xf32> to vector<2x8xf32>
      %224 = arith.addf %221, %223 : vector<2x8xf32>
      %cst_225 = arith.constant 0.000000e+00 : f32
      %225 = vector.broadcast %cst_225 : f32 to vector<2x8xf32>
      %226 = arith.maximumf %224, %225 : vector<2x8xf32>
      %c0_226 = arith.constant 0 : index
      %c0_227 = arith.constant 0 : index
      %227 = vector.load %arg13[%c0_226, %c0_227] : memref<8x1xf32, #tpu.memory_space<vmem>>, vector<8x1xf32>
      %cst_228 = arith.constant dense<0.000000e+00> : vector<2x1xf32>
      %228 = tpu.matmul %226, %227, %cst_228 {dimension_numbers = #tpu.dot_dimension_numbers<[1], [0], [0], [1], [0, 0, 1, 1], [], []>} : vector<2x8xf32>, vector<8x1xf32>, vector<2x1xf32> -> vector<2x1xf32>
      %c0_229 = arith.constant 0 : index
      %c0_230 = arith.constant 0 : index
      %229 = vector.load %arg14[%c0_229, %c0_230] : memref<1x1xf32, #tpu.memory_space<vmem>>, vector<1x1xf32>
      %230 = vector.broadcast %229 : vector<1x1xf32> to vector<2x1xf32>
      %231 = arith.addf %228, %230 : vector<2x1xf32>
      %232 = arith.negf %231 : vector<2x1xf32>
      %233 = math.exp %232 : vector<2x1xf32>
      %cst_231 = arith.constant 1.000000e+00 : f32
      %234 = vector.broadcast %cst_231 : f32 to vector<2x1xf32>
      %235 = arith.addf %234, %233 : vector<2x1xf32>
      %236 = arith.divf %234, %235 : vector<2x1xf32>
      %c0_232 = arith.constant 0 : index
      %c0_233 = arith.constant 0 : index
      %237 = vector.load %arg15[%c0_232, %c0_233] : memref<2x1xf32, #tpu.memory_space<vmem>>, vector<2x1xf32>
      tpu.vector_store %arg15[%c0_232, %c0_233], %236 {strides = array<i32>} : memref<2x1xf32, #tpu.memory_space<vmem>>, vector<2x1xf32>,
    } else {
    }
    return
  }
  func.func @transform_0(%arg0: i32, %arg1: i32) -> (i32, i32, i32, i32) {
    %c0_i32 = arith.constant 0 : i32
    %c0_i32_0 = arith.constant 0 : i32
    %c0_i32_1 = arith.constant 0 : i32
    return %arg0, %arg1, %c0_i32, %c0_i32_0 : i32, i32, i32, i32
  }
  func.func @transform_1(%arg0: i32, %arg1: i32) -> (i32, i32) {
    %c0_i32 = arith.constant 0 : i32
    %c0_i32_0 = arith.constant 0 : i32
    %c0_i32_1 = arith.constant 0 : i32
    return %c0_i32, %c0_i32_0 : i32, i32
  }
  func.func @transform_2(%arg0: i32, %arg1: i32) -> (i32, i32) {
    %c0_i32 = arith.constant 0 : i32
    %c0_i32_0 = arith.constant 0 : i32
    %c0_i32_1 = arith.constant 0 : i32
    return %c0_i32, %c0_i32_0 : i32, i32
  }
  func.func @transform_3(%arg0: i32, %arg1: i32) -> (i32, i32) {
    %c0_i32 = arith.constant 0 : i32
    %c0_i32_0 = arith.constant 0 : i32
    %c0_i32_1 = arith.constant 0 : i32
    return %c0_i32, %c0_i32_0 : i32, i32
  }
  func.func @transform_4(%arg0: i32, %arg1: i32) -> (i32, i32) {
    %c0_i32 = arith.constant 0 : i32
    %c0_i32_0 = arith.constant 0 : i32
    %c0_i32_1 = arith.constant 0 : i32
    return %c0_i32, %c0_i32_0 : i32, i32
  }
  func.func @transform_5(%arg0: i32, %arg1: i32) -> (i32, i32, i32) {
    %c0_i32 = arith.constant 0 : i32
    %c0_i32_0 = arith.constant 0 : i32
    %c0_i32_1 = arith.constant 0 : i32
    return %c0_i32, %arg1, %c0_i32_0 : i32, i32, i32
  }
  func.func @transform_6(%arg0: i32, %arg1: i32) -> (i32, i32) {
    %c0_i32 = arith.constant 0 : i32
    %c0_i32_0 = arith.constant 0 : i32
    %c0_i32_1 = arith.constant 0 : i32
    return %c0_i32, %c0_i32_0 : i32, i32
  }
  func.func @transform_7(%arg0: i32, %arg1: i32) -> (i32, i32) {
    %c0_i32 = arith.constant 0 : i32
    %c0_i32_0 = arith.constant 0 : i32
    %c0_i32_1 = arith.constant 0 : i32
    return %c0_i32, %c0_i32_0 : i32, i32
  }
  func.func @transform_8(%arg0: i32, %arg1: i32) -> (i32, i32) {
    %c0_i32 = arith.constant 0 : i32
    %c0_i32_0 = arith.constant 0 : i32
    %c0_i32_1 = arith.constant 0 : i32
    return %c0_i32, %c0_i32_0 : i32, i32
  }
  func.func @transform_9(%arg0: i32, %arg1: i32) -> (i32, i32) {
    %c0_i32 = arith.constant 0 : i32
    %c0_i32_0 = arith.constant 0 : i32
    %c0_i32_1 = arith.constant 0 : i32
    return %c0_i32, %c0_i32_0 : i32, i32
  }
  func.func @transform_10(%arg0: i32, %arg1: i32) -> (i32, i32) {
    %c0_i32 = arith.constant 0 : i32
    %c0_i32_0 = arith.constant 0 : i32
    %c0_i32_1 = arith.constant 0 : i32
    return %c0_i32, %c0_i32_0 : i32, i32
  }
  func.func @transform_11(%arg0: i32, %arg1: i32) -> (i32, i32) {
    %c0_i32 = arith.constant 0 : i32
    %c0_i32_0 = arith.constant 0 : i32
    %c0_i32_1 = arith.constant 0 : i32
    return %c0_i32, %c0_i32_0 : i32, i32
  }
  func.func @transform_12(%arg0: i32, %arg1: i32) -> (i32, i32) {
    %c0_i32 = arith.constant 0 : i32
    %c0_i32_0 = arith.constant 0 : i32
    %c0_i32_1 = arith.constant 0 : i32
    return %c0_i32, %c0_i32_0 : i32, i32
  }
  func.func @transform_13(%arg0: i32, %arg1: i32) -> (i32, i32) {
    %c0_i32 = arith.constant 0 : i32
    %c0_i32_0 = arith.constant 0 : i32
    return %arg0, %c0_i32 : i32, i32
  }
}

</mosaic_0001>

<llo_original>
// kernel: tpu_custom_call.1
$region0: #{tpu_custom_call.1}
  #allocation0 [shape = 'u32[]', space=smem, size = 0x4, offset = 0x4, fixed_abs, tag = 'smem constant byte address 0x4 - core index']
  #allocation1 [shape = 'u32[144,128]{1,0:T(1,128)}', space=vmem, size = 0x12000, scoped, tag = 'internal scratch']
  #allocation2 [shape = 'f32[2,64]{1,0:T(2,128)}', space=vmem, size = 0x400, scoped, tag = 'scratch operand']
  #allocation3 [shape = 'f32[2,32,128]{2,1,0:T(8,128)}', space=vmem, size = 0x8000, scoped, tag = 'scratch operand']
  #allocation4 [shape = 'f32[1,1]{1,0:T(1,128)S(1)}', space=vmem, size = 0x200, scoped, tag = 'scoped memory for tpu_custom_call.1']
  %s0 = inlined_call_operand.vmem [shape: f32[2,1,4,146], index: 0, kind: input, shape index: {}]
  %s1 = inlined_call_operand.vmem [shape: f32[64,40], index: 1, kind: input, shape index: {}]
  %s2 = inlined_call_operand.vmem [shape: f32[64,1], index: 2, kind: input, shape index: {}]
  %s3 = inlined_call_operand.vmem [shape: f32[32,640], index: 3, kind: input, shape index: {}]
  %s4 = inlined_call_operand.vmem [shape: f32[32,1], index: 4, kind: input, shape index: {}]
  %s5 = inlined_call_operand.vmem [shape: f32[32,128,64], index: 5, kind: input, shape index: {}]
  %s6 = inlined_call_operand.vmem [shape: f32[1,64], index: 6, kind: input, shape index: {}]
  %s7 = inlined_call_operand.vmem [shape: f32[64,10], index: 7, kind: input, shape index: {}]
  %s8 = inlined_call_operand.vmem [shape: f32[1,10], index: 8, kind: input, shape index: {}]
  %s9 = inlined_call_operand.vmem [shape: f32[10,8], index: 9, kind: input, shape index: {}]
  %s10 = inlined_call_operand.vmem [shape: f32[1,8], index: 10, kind: input, shape index: {}]
  %s11 = inlined_call_operand.vmem [shape: f32[8,1], index: 11, kind: input, shape index: {}]
  %s12 = inlined_call_operand.<no memory space> [shape: f32[1,1], index: 12, kind: input, shape index: {}]
  %s13 = inlined_call_operand.vmem [shape: f32[2,1], index: 13, kind: output, shape index: {}]
  %s14 = sld [smem:[#allocation0]]
  $region77: #{tpu_custom_call.1} parent=0
    _
  %s16 = ssub.s32 1, %s14
  %s17 = scalar_select 0, %s16, %s14
  %v18 = vstv %s12
  %19 = vst [vmem:[#allocation4] sm:$0x1] %v18
  // Predicated region
  $region2: #{tpu_custom_call.1} parent=0 // pred_check
    _
  $region3: #{tpu_custom_call.1} parent=0 // pred_check_branch
    %21 = sbr.rel (0) target = $region5
  $region4: #{tpu_custom_call.1} parent=0 // pred_region
    _
  $region5: #{tpu_custom_call.1} parent=0 // pred_fallthru
    _
  // Predicated region
  $region6: #{tpu_custom_call.1} parent=0 // pred_check
    _
  $region7: #{tpu_custom_call.1} parent=0 // pred_check_branch
    %23 = sbr.rel (0) target = $region9
  $region8: #{tpu_custom_call.1} parent=0 // pred_region
    _
  $region9: #{tpu_custom_call.1} parent=0 // pred_fallthru
    _
  // Predicated region
  $region10: #{tpu_custom_call.1} parent=0 // pred_check
    _
  $region11: #{tpu_custom_call.1} parent=0 // pred_check_branch
    %25 = sbr.rel (0) target = $region13
  $region12: #{tpu_custom_call.1} parent=0 // pred_region
    _
  $region13: #{tpu_custom_call.1} parent=0 // pred_fallthru
    _
  // Predicated region
  $region14: #{tpu_custom_call.1} parent=0 // pred_check
    _
  $region15: #{tpu_custom_call.1} parent=0 // pred_check_branch
    %27 = sbr.rel (0) target = $region17
  $region16: #{tpu_custom_call.1} parent=0 // pred_region
    _
  $region17: #{tpu_custom_call.1} parent=0 // pred_fallthru
    _
  // Predicated region
  $region18: #{tpu_custom_call.1} parent=0 // pred_check
    _
  $region19: #{tpu_custom_call.1} parent=0 // pred_check_branch
    %29 = sbr.rel (0) target = $region21
  $region20: #{tpu_custom_call.1} parent=0 // pred_region
    _
  $region21: #{tpu_custom_call.1} parent=0 // pred_fallthru
    _
  // Predicated region
  $region22: #{tpu_custom_call.1} parent=0 // pred_check
    _
  $region23: #{tpu_custom_call.1} parent=0 // pred_check_branch
    %31 = sbr.rel (0) target = $region25
  $region24: #{tpu_custom_call.1} parent=0 // pred_region
    _
  $region25: #{tpu_custom_call.1} parent=0 // pred_fallthru
    _
  // Predicated region
  $region26: #{tpu_custom_call.1} parent=0 // pred_check
    _
  $region27: #{tpu_custom_call.1} parent=0 // pred_check_branch
    %33 = sbr.rel (0) target = $region29
  $region28: #{tpu_custom_call.1} parent=0 // pred_region
    _
  $region29: #{tpu_custom_call.1} parent=0 // pred_fallthru
    _
  // Predicated region
  $region30: #{tpu_custom_call.1} parent=0 // pred_check
    _
  $region31: #{tpu_custom_call.1} parent=0 // pred_check_branch
    %35 = sbr.rel (0) target = $region33
  $region32: #{tpu_custom_call.1} parent=0 // pred_region
    _
  $region33: #{tpu_custom_call.1} parent=0 // pred_fallthru
    _
  // Predicated region
  $region34: #{tpu_custom_call.1} parent=0 // pred_check
    _
  $region35: #{tpu_custom_call.1} parent=0 // pred_check_branch
    %37 = sbr.rel (0) target = $region37
  $region36: #{tpu_custom_call.1} parent=0 // pred_region
    _
  $region37: #{tpu_custom_call.1} parent=0 // pred_fallthru
    _
  // Predicated region
  $region38: #{tpu_custom_call.1} parent=0 // pred_check
    _
  $region39: #{tpu_custom_call.1} parent=0 // pred_check_branch
    %39 = sbr.rel (0) target = $region41
  $region40: #{tpu_custom_call.1} parent=0 // pred_region
    _
  $region41: #{tpu_custom_call.1} parent=0 // pred_fallthru
    _
  // Predicated region
  $region42: #{tpu_custom_call.1} parent=0 // pred_check
    _
  $region43: #{tpu_custom_call.1} parent=0 // pred_check_branch
    %41 = sbr.rel (0) target = $region45
  $region44: #{tpu_custom_call.1} parent=0 // pred_region
    _
  $region45: #{tpu_custom_call.1} parent=0 // pred_fallthru
    _
  // Predicated region
  $region46: #{tpu_custom_call.1} parent=0 // pred_check
    _
  $region47: #{tpu_custom_call.1} parent=0 // pred_check_branch
    %43 = sbr.rel (0) target = $region49
  $region48: #{tpu_custom_call.1} parent=0 // pred_region
    _
  $region49: #{tpu_custom_call.1} parent=0 // pred_fallthru
    _
  // Predicated region
  $region50: #{tpu_custom_call.1} parent=0 // pred_check
    _
  $region51: #{tpu_custom_call.1} parent=0 // pred_check_branch
    %45 = sbr.rel (0) target = $region53
  $region52: #{tpu_custom_call.1} parent=0 // pred_region
    _
  $region53: #{tpu_custom_call.1} parent=0 // pred_fallthru
    _
  %p46 = scmp.eq.s32.totalorder 0, 0
  // Predicated region
  $region54: #{tpu_custom_call.1} parent=0 // pred_check
    %p47 = pneg %p46
  $region55: #{tpu_custom_call.1} parent=0 // pred_check_branch
    %49 = sbr.rel (%p47) target = $region57
  $region56: #{tpu_custom_call.1} parent=0 // pred_region
    %vm50 = vcmask 517120
    %51 = vst.msk [vmem:[#allocation2] sm:$0x3] %vm50, 0.0
  $region57: #{tpu_custom_call.1} parent=0 // pred_fallthru
    _
  %v52 = vld [vmem:[%s1] sm:$0xff]
  %v53 = vld [vmem:[%s1 + $0x8] sm:$0xff]
  %v54 = vld [vmem:[%s1 + $0x10] sm:$0xff]
  %v55 = vld [vmem:[%s1 + $0x18] sm:$0xff]
  %v56 = vld [vmem:[%s1 + $0x20] sm:$0xff]
  %v57 = vld [vmem:[%s1 + $0x28] sm:$0xff]
  %v58 = vld [vmem:[%s1 + $0x30] sm:$0xff]
  %v59 = vld [vmem:[%s1 + $0x38] sm:$0xff]
  %v60 = vld [vmem:[%s2] sm:$0xff]
  %v61 = vld [vmem:[%s2 + $0x8] sm:$0xff]
  %v62 = vld [vmem:[%s2 + $0x10] sm:$0xff]
  %v63 = vld [vmem:[%s2 + $0x18] sm:$0xff]
  %v64 = vld [vmem:[%s2 + $0x20] sm:$0xff]
  %v65 = vld [vmem:[%s2 + $0x28] sm:$0xff]
  %v66 = vld [vmem:[%s2 + $0x30] sm:$0xff]
  %v67 = vld [vmem:[%s2 + $0x38] sm:$0xff]
  %v68 = vld [vmem:[%s3] sm:$0xff]
  %v69 = vld [vmem:[%s3 + $0x8] sm:$0xff]
  %v70 = vld [vmem:[%s3 + $0x10] sm:$0xff]
  %v71 = vld [vmem:[%s3 + $0x18] sm:$0xff]
  %v72 = vld [vmem:[%s3 + $0x20] sm:$0xff]
  %v73 = vld [vmem:[%s3 + $0x28] sm:$0xff]
  %v74 = vld [vmem:[%s3 + $0x30] sm:$0xff]
  %v75 = vld [vmem:[%s3 + $0x38] sm:$0xff]
  %v76 = vld [vmem:[%s3 + $0x40] sm:$0xff]
  %v77 = vld [vmem:[%s3 + $0x48] sm:$0xff]
  %v78 = vld [vmem:[%s3 + $0x50] sm:$0xff]
  %v79 = vld [vmem:[%s3 + $0x58] sm:$0xff]
  %v80 = vld [vmem:[%s3 + $0x60] sm:$0xff]
  %v81 = vld [vmem:[%s3 + $0x68] sm:$0xff]
  %v82 = vld [vmem:[%s3 + $0x70] sm:$0xff]
  %v83 = vld [vmem:[%s3 + $0x78] sm:$0xff]
  %v84 = vld [vmem:[%s3 + $0x80] sm:$0xff]
  %v85 = vld [vmem:[%s3 + $0x88] sm:$0xff]
  %v86 = vld [vmem:[%s3 + $0x90] sm:$0xff]
  %v87 = vld [vmem:[%s3 + $0x98] sm:$0xff]
  %v88 = vld [vmem:[%s4] sm:$0xff]
  %v89 = vld [vmem:[%s4 + $0x8] sm:$0xff]
  %v90 = vld [vmem:[%s4 + $0x10] sm:$0xff]
  %v91 = vld [vmem:[%s4 + $0x18] sm:$0xff]
  loop: start=0, step=1, limit=2
  $region58: #{tpu_custom_call.1} parent=0 // loop_pre_header
    _
  $region59: #{tpu_custom_call.1} parent=0 // loop_header
    %s93 = sphi 0, %s97
    %p94 = scmp.ge.s32.totalorder %s93, 2
  $region60: #{tpu_custom_call.1} parent=0 // loop_header_branch
    %96 = sbr.rel (%p94) target = $region64
  $region61: #{tpu_custom_call.1} parent=0 // loop_body
    %s98 = smul.u32 %s93, 2
    %s99 = smul.addr %s98, 4
    %s100 = scalar_lea.vmem %s0, %s99
    %v101 = vld [vmem:[%s100] sm:$0xff]
    %v103 = vcombine.high %v101, %v101
    %v105 = vcombine.low %v101, %v101
    %106 = vrot.lane.b32.xlu0 %v105, 127
    %v107 = vpop.permute.xlu0 %106
    %108 = vrot.lane.b32.xlu0 %v101, 127
    %v109 = vpop.permute.xlu0 %108
    %vm110 = vcmask 1039360
    %v111 = vsel %vm110, %v107, %v109
    %114 = vrot.lane.b32.xlu0 %v101, 126
    %v115 = vpop.permute.xlu0 %114
    %116 = vrot.lane.b32.xlu0 %v103, 126
    %v117 = vpop.permute.xlu0 %116
    %vm118 = vcmask 1031168
    %v119 = vsel %vm118, %v115, %v117
    %122 = vrot.lane.b32.xlu0 %v105, 125
    %v123 = vpop.permute.xlu0 %122
    %124 = vrot.lane.b32.xlu0 %v101, 125
    %v125 = vpop.permute.xlu0 %124
    %vm126 = vcmask 1022976
    %v127 = vsel %vm126, %v123, %v125
    %130 = vrot.lane.b32.xlu0 %v101, 124
    %v131 = vpop.permute.xlu0 %130
    %132 = vrot.lane.b32.xlu0 %v103, 124
    %v133 = vpop.permute.xlu0 %132
    %vm134 = vcmask 1014784
    %v135 = vsel %vm134, %v131, %v133
    %138 = vrot.lane.b32.xlu0 %v105, 123
    %v139 = vpop.permute.xlu0 %138
    %140 = vrot.lane.b32.xlu0 %v101, 123
    %v141 = vpop.permute.xlu0 %140
    %vm142 = vcmask 1006592
    %v143 = vsel %vm142, %v139, %v141
    %146 = vrot.lane.b32.xlu0 %v101, 122
    %v147 = vpop.permute.xlu0 %146
    %148 = vrot.lane.b32.xlu0 %v103, 122
    %v149 = vpop.permute.xlu0 %148
    %vm150 = vcmask 998400
    %v151 = vsel %vm150, %v147, %v149
    %154 = vrot.lane.b32.xlu0 %v105, 121
    %v155 = vpop.permute.xlu0 %154
    %156 = vrot.lane.b32.xlu0 %v101, 121
    %v157 = vpop.permute.xlu0 %156
    %vm158 = vcmask 990208
    %v159 = vsel %vm158, %v155, %v157
    %162 = vrot.lane.b32.xlu0 %v101, 120
    %v163 = vpop.permute.xlu0 %162
    %164 = vrot.lane.b32.xlu0 %v103, 120
    %v165 = vpop.permute.xlu0 %164
    %vm166 = vcmask 982016
    %v167 = vsel %vm166, %v163, %v165
    %170 = vrot.lane.b32.xlu0 %v105, 119
    %v171 = vpop.permute.xlu0 %170
    %172 = vrot.lane.b32.xlu0 %v101, 119
    %v173 = vpop.permute.xlu0 %172
    %vm174 = vcmask 973824
    %v175 = vsel %vm174, %v171, %v173
    %vm178 = vcmask 1043456
    %v179 = vsel %vm178, %v101, %v111
    %v180 = vsel %vm178, %v103, %v109
    %v181 = vsel %vm178, %v119, %v127
    %v182 = vsel %vm178, %v117, %v125
    %v183 = vsel %vm178, %v135, %v143
    %v184 = vsel %vm178, %v133, %v141
    %v185 = vsel %vm178, %v151, %v159
    %v186 = vsel %vm178, %v149, %v157
    %v187 = vsel %vm178, %v167, %v175
    %v188 = vsel %vm178, %v165, %v173
    %190 = vset.pattern.permute.xlu0 0
    %191 = vperm.xlu0 %190, %v60
    %v192 = vpop.permute.xlu0 %191
    %195 = vset.pattern.permute.xlu0 0
    %196 = vperm.xlu0 %195, %v61
    %v197 = vpop.permute.xlu0 %196
    %200 = vset.pattern.permute.xlu0 0
    %201 = vperm.xlu0 %200, %v62
    %v202 = vpop.permute.xlu0 %201
    %205 = vset.pattern.permute.xlu0 0
    %206 = vperm.xlu0 %205, %v63
    %v207 = vpop.permute.xlu0 %206
    %210 = vset.pattern.permute.xlu0 0
    %211 = vperm.xlu0 %210, %v64
    %v212 = vpop.permute.xlu0 %211
    %215 = vset.pattern.permute.xlu0 0
    %216 = vperm.xlu0 %215, %v65
    %v217 = vpop.permute.xlu0 %216
    %220 = vset.pattern.permute.xlu0 0
    %221 = vperm.xlu0 %220, %v66
    %v222 = vpop.permute.xlu0 %221
    %225 = vset.pattern.permute.xlu0 0
    %226 = vperm.xlu0 %225, %v67
    %v227 = vpop.permute.xlu0 %226
    %vm229 = vcmask 326656
    %v231 = vsel %vm229, %v52, 0
    %v234 = vsel %vm229, %v53, 0
    %v237 = vsel %vm229, %v54, 0
    %v240 = vsel %vm229, %v55, 0
    %v243 = vsel %vm229, %v56, 0
    %v246 = vsel %vm229, %v57, 0
    %v249 = vsel %vm229, %v58, 0
    %v252 = vsel %vm229, %v59, 0
    %254 = vmatprep.subr.mxu0 %v180
    %255 = vmatpush1.msra.mxu0 %v179
    %256 = vmatprep.subr.mxu0 %v182
    %257 = vmatpush1.msra.mxu0 %v181
    %258 = vmatprep.subr.mxu0 %v184
    %259 = vmatpush1.msra.mxu0 %v183
    %260 = vmatprep.subr.mxu0 %v186
    %261 = vmatpush1.msra.mxu0 %v185
    %262 = vmatprep.subr.mxu0 %v188
    %263 = vmatpush1.msra.mxu0 %v187
    %264 = vmatprep.subr.mxu0 0.0
    %265 = vmatpush1.msra.mxu0 0.0
    %266 = vmatprep.subr.mxu0 0.0
    %267 = vmatpush1.msra.mxu0 0.0
    %268 = vmatprep.subr.mxu0 0.0
    %269 = vmatpush1.msra.mxu0 0.0
    %270 = vmatprep.subr.mxu0 0.0
    %271 = vmatpush1.msra.mxu0 0.0
    %272 = vmatprep.subr.mxu0 0.0
    %273 = vmatpush1.msra.mxu0 0.0
    %274 = vmatprep.subr.mxu0 0.0
    %275 = vmatpush1.msra.mxu0 0.0
    %276 = vmatprep.subr.mxu0 0.0
    %277 = vmatpush1.msra.mxu0 0.0
    %278 = vmatprep.subr.mxu0 0.0
    %279 = vmatpush1.msra.mxu0 0.0
    %280 = vmatprep.subr.mxu0 0.0
    %281 = vmatpush1.msra.mxu0 0.0
    %282 = vmatprep.subr.mxu0 0.0
    %283 = vmatpush1.msra.mxu0 0.0
    %284 = vmatprep.subr.mxu0 0.0
    %285 = vmatpush1.msra.mxu0 0.0
    %286 = vmatprep.subr.mxu0 0.0
    %287 = vmatpush1.msra.mxu0 0.0
    %288 = vmatprep.subr.mxu0 0.0
    %289 = vmatpush1.msra.mxu0 0.0
    %290 = vmatprep.subr.mxu0 0.0
    %291 = vmatpush1.msra.mxu0 0.0
    %292 = vmatprep.subr.mxu0 0.0
    %293 = vmatpush1.msra.mxu0 0.0
    %294 = vmatprep.subr.mxu0 0.0
    %295 = vmatpush1.msra.mxu0 0.0
    %296 = vmatprep.subr.mxu0 0.0
    %297 = vmatpush1.msra.mxu0 0.0
    %298 = vmatprep.subr.mxu0 0.0
    %299 = vmatpush1.msra.mxu0 0.0
    %300 = vmatprep.subr.mxu0 0.0
    %301 = vmatpush1.msra.mxu0 0.0
    %302 = vmatprep.subr.mxu0 0.0
    %303 = vmatpush1.msra.mxu0 0.0
    %304 = vmatprep.subr.mxu0 0.0
    %305 = vmatpush1.msra.mxu0 0.0
    %306 = vmatprep.subr.mxu0 0.0
    %307 = vmatpush1.msra.mxu0 0.0
    %308 = vmatprep.subr.mxu0 0.0
    %309 = vmatpush1.msra.mxu0 0.0
    %310 = vmatprep.subr.mxu0 0.0
    %311 = vmatpush1.msra.mxu0 0.0
    %312 = vmatprep.subr.mxu0 0.0
    %313 = vmatpush1.msra.mxu0 0.0
    %314 = vmatprep.subr.mxu0 0.0
    %315 = vmatpush1.msra.mxu0 0.0
    %316 = vmatprep.subr.mxu0 0.0
    %317 = vmatpush1.msra.mxu0 0.0
    %318 = vmatprep.mubr.f32.mxu0 0.0
    %319 = vmatmul.mubr.f32.gmra.mrb[0].mxu0 %v231
    %v320 = vpop.f32.mrb[0].mxu0
    %v321 = vadd.f32 %v192, %v320
    %v322 = vpop.f32.mrb[0].mxu0
    %v323 = vadd.f32 %v192, %v322
    %324 = vmatprep.mubr.f32.mxu0 0.0
    %325 = vmatmul.mubr.f32.gmra.mrb[0].mxu0 %v234
    %v326 = vpop.f32.mrb[0].mxu0
    %v327 = vadd.f32 %v197, %v326
    %v328 = vpop.f32.mrb[0].mxu0
    %v329 = vadd.f32 %v197, %v328
    %330 = vmatprep.mubr.f32.mxu0 0.0
    %331 = vmatmul.mubr.f32.gmra.mrb[0].mxu0 %v237
    %v332 = vpop.f32.mrb[0].mxu0
    %v333 = vadd.f32 %v202, %v332
    %v334 = vpop.f32.mrb[0].mxu0
    %v335 = vadd.f32 %v202, %v334
    %336 = vmatprep.mubr.f32.mxu0 0.0
    %337 = vmatmul.mubr.f32.gmra.mrb[0].mxu0 %v240
    %v338 = vpop.f32.mrb[0].mxu0
    %v339 = vadd.f32 %v207, %v338
    %v340 = vpop.f32.mrb[0].mxu0
    %v341 = vadd.f32 %v207, %v340
    %342 = vmatprep.mubr.f32.mxu0 0.0
    %343 = vmatmul.mubr.f32.gmra.mrb[0].mxu0 %v243
    %v344 = vpop.f32.mrb[0].mxu0
    %v345 = vadd.f32 %v212, %v344
    %v346 = vpop.f32.mrb[0].mxu0
    %v347 = vadd.f32 %v212, %v346
    %348 = vmatprep.mubr.f32.mxu0 0.0
    %349 = vmatmul.mubr.f32.gmra.mrb[0].mxu0 %v246
    %v350 = vpop.f32.mrb[0].mxu0
    %v351 = vadd.f32 %v217, %v350
    %v352 = vpop.f32.mrb[0].mxu0
    %v353 = vadd.f32 %v217, %v352
    %354 = vmatprep.mubr.f32.mxu0 0.0
    %355 = vmatmul.mubr.f32.gmra.mrb[0].mxu0 %v249
    %v356 = vpop.f32.mrb[0].mxu0
    %v357 = vadd.f32 %v222, %v356
    %v358 = vpop.f32.mrb[0].mxu0
    %v359 = vadd.f32 %v222, %v358
    %360 = vmatprep.mubr.f32.mxu0 0.0
    %361 = vmatmul.mubr.f32.gmra.mrb[0].mxu0 %v252
    %v362 = vpop.f32.mrb[0].mxu0
    %v363 = vadd.f32 %v227, %v362
    %v364 = vpop.f32.mrb[0].mxu0
    %v365 = vadd.f32 %v227, %v364
    %366 = vdwg.mxu0
    %v367 = vmax.f32 %v321, 0.0
    %v368 = vmax.f32 %v323, 0.0
    %v369 = vmax.f32 %v327, 0.0
    %v370 = vmax.f32 %v329, 0.0
    %v371 = vmax.f32 %v333, 0.0
    %v372 = vmax.f32 %v335, 0.0
    %v373 = vmax.f32 %v339, 0.0
    %v374 = vmax.f32 %v341, 0.0
    %v375 = vmax.f32 %v345, 0.0
    %v376 = vmax.f32 %v347, 0.0
    %v377 = vmax.f32 %v351, 0.0
    %v378 = vmax.f32 %v353, 0.0
    %v379 = vmax.f32 %v357, 0.0
    %v380 = vmax.f32 %v359, 0.0
    %v381 = vmax.f32 %v363, 0.0
    %v382 = vmax.f32 %v365, 0.0
    %399 = vrot.lane.b32.xlu0 %v367, 127
    %v400 = vpop.permute.xlu0 %399
    %401 = vrot.lane.b32.xlu0 %v368, 127
    %v402 = vpop.permute.xlu0 %401
    %403 = vrot.lane.b32.xlu0 %v369, 127
    %v404 = vpop.permute.xlu0 %403
    %405 = vrot.lane.b32.xlu0 %v370, 127
    %v406 = vpop.permute.xlu0 %405
    %407 = vrot.lane.b32.xlu0 %v371, 127
    %v408 = vpop.permute.xlu0 %407
    %409 = vrot.lane.b32.xlu0 %v372, 127
    %v410 = vpop.permute.xlu0 %409
    %411 = vrot.lane.b32.xlu0 %v373, 127
    %v412 = vpop.permute.xlu0 %411
    %413 = vrot.lane.b32.xlu0 %v374, 127
    %v414 = vpop.permute.xlu0 %413
    %415 = vrot.lane.b32.xlu0 %v375, 127
    %v416 = vpop.permute.xlu0 %415
    %417 = vrot.lane.b32.xlu0 %v376, 127
    %v418 = vpop.permute.xlu0 %417
    %419 = vrot.lane.b32.xlu0 %v377, 127
    %v420 = vpop.permute.xlu0 %419
    %421 = vrot.lane.b32.xlu0 %v378, 127
    %v422 = vpop.permute.xlu0 %421
    %423 = vrot.lane.b32.xlu0 %v379, 127
    %v424 = vpop.permute.xlu0 %423
    %425 = vrot.lane.b32.xlu0 %v380, 127
    %v426 = vpop.permute.xlu0 %425
    %427 = vrot.lane.b32.xlu0 %v381, 127
    %v428 = vpop.permute.xlu0 %427
    %429 = vrot.lane.b32.xlu0 %v382, 127
    %v430 = vpop.permute.xlu0 %429
    %v431 = vsel %vm110, %v400, %v402
    %v432 = vsel %vm110, %v404, %v406
    %v433 = vsel %vm110, %v408, %v410
    %v434 = vsel %vm110, %v412, %v414
    %v435 = vsel %vm110, %v416, %v418
    %v436 = vsel %vm110, %v420, %v422
    %v437 = vsel %vm110, %v424, %v426
    %v438 = vsel %vm110, %v428, %v430
    %447 = vrot.lane.b32.xlu0 %v367, 126
    %v448 = vpop.permute.xlu0 %447
    %449 = vrot.lane.b32.xlu0 %v368, 126
    %v450 = vpop.permute.xlu0 %449
    %451 = vrot.lane.b32.xlu0 %v369, 126
    %v452 = vpop.permute.xlu0 %451
    %453 = vrot.lane.b32.xlu0 %v370, 126
    %v454 = vpop.permute.xlu0 %453
    %455 = vrot.lane.b32.xlu0 %v371, 126
    %v456 = vpop.permute.xlu0 %455
    %457 = vrot.lane.b32.xlu0 %v372, 126
    %v458 = vpop.permute.xlu0 %457
    %459 = vrot.lane.b32.xlu0 %v373, 126
    %v460 = vpop.permute.xlu0 %459
    %461 = vrot.lane.b32.xlu0 %v374, 126
    %v462 = vpop.permute.xlu0 %461
    %463 = vrot.lane.b32.xlu0 %v375, 126
    %v464 = vpop.permute.xlu0 %463
    %465 = vrot.lane.b32.xlu0 %v376, 126
    %v466 = vpop.permute.xlu0 %465
    %467 = vrot.lane.b32.xlu0 %v377, 126
    %v468 = vpop.permute.xlu0 %467
    %469 = vrot.lane.b32.xlu0 %v378, 126
    %v470 = vpop.permute.xlu0 %469
    %471 = vrot.lane.b32.xlu0 %v379, 126
    %v472 = vpop.permute.xlu0 %471
    %473 = vrot.lane.b32.xlu0 %v380, 126
    %v474 = vpop.permute.xlu0 %473
    %475 = vrot.lane.b32.xlu0 %v381, 126
    %v476 = vpop.permute.xlu0 %475
    %477 = vrot.lane.b32.xlu0 %v382, 126
    %v478 = vpop.permute.xlu0 %477
    %v479 = vsel %vm118, %v448, %v450
    %v480 = vsel %vm118, %v452, %v454
    %v481 = vsel %vm118, %v456, %v458
    %v482 = vsel %vm118, %v460, %v462
    %v483 = vsel %vm118, %v464, %v466
    %v484 = vsel %vm118, %v468, %v470
    %v485 = vsel %vm118, %v472, %v474
    %v486 = vsel %vm118, %v476, %v478
    %495 = vrot.lane.b32.xlu0 %v367, 125
    %v496 = vpop.permute.xlu0 %495
    %497 = vrot.lane.b32.xlu0 %v368, 125
    %v498 = vpop.permute.xlu0 %497
    %499 = vrot.lane.b32.xlu0 %v369, 125
    %v500 = vpop.permute.xlu0 %499
    %501 = vrot.lane.b32.xlu0 %v370, 125
    %v502 = vpop.permute.xlu0 %501
    %503 = vrot.lane.b32.xlu0 %v371, 125
    %v504 = vpop.permute.xlu0 %503
    %505 = vrot.lane.b32.xlu0 %v372, 125
    %v506 = vpop.permute.xlu0 %505
    %507 = vrot.lane.b32.xlu0 %v373, 125
    %v508 = vpop.permute.xlu0 %507
    %509 = vrot.lane.b32.xlu0 %v374, 125
    %v510 = vpop.permute.xlu0 %509
    %511 = vrot.lane.b32.xlu0 %v375, 125
    %v512 = vpop.permute.xlu0 %511
    %513 = vrot.lane.b32.xlu0 %v376, 125
    %v514 = vpop.permute.xlu0 %513
    %515 = vrot.lane.b32.xlu0 %v377, 125
    %v516 = vpop.permute.xlu0 %515
    %517 = vrot.lane.b32.xlu0 %v378, 125
    %v518 = vpop.permute.xlu0 %517
    %519 = vrot.lane.b32.xlu0 %v379, 125
    %v520 = vpop.permute.xlu0 %519
    %521 = vrot.lane.b32.xlu0 %v380, 125
    %v522 = vpop.permute.xlu0 %521
    %523 = vrot.lane.b32.xlu0 %v381, 125
    %v524 = vpop.permute.xlu0 %523
    %525 = vrot.lane.b32.xlu0 %v382, 125
    %v526 = vpop.permute.xlu0 %525
    %v527 = vsel %vm126, %v496, %v498
    %v528 = vsel %vm126, %v500, %v502
    %v529 = vsel %vm126, %v504, %v506
    %v530 = vsel %vm126, %v508, %v510
    %v531 = vsel %vm126, %v512, %v514
    %v532 = vsel %vm126, %v516, %v518
    %v533 = vsel %vm126, %v520, %v522
    %v534 = vsel %vm126, %v524, %v526
    %543 = vrot.lane.b32.xlu0 %v367, 124
    %v544 = vpop.permute.xlu0 %543
    %545 = vrot.lane.b32.xlu0 %v368, 124
    %v546 = vpop.permute.xlu0 %545
    %547 = vrot.lane.b32.xlu0 %v369, 124
    %v548 = vpop.permute.xlu0 %547
    %549 = vrot.lane.b32.xlu0 %v370, 124
    %v550 = vpop.permute.xlu0 %549
    %551 = vrot.lane.b32.xlu0 %v371, 124
    %v552 = vpop.permute.xlu0 %551
    %553 = vrot.lane.b32.xlu0 %v372, 124
    %v554 = vpop.permute.xlu0 %553
    %555 = vrot.lane.b32.xlu0 %v373, 124
    %v556 = vpop.permute.xlu0 %555
    %557 = vrot.lane.b32.xlu0 %v374, 124
    %v558 = vpop.permute.xlu0 %557
    %559 = vrot.lane.b32.xlu0 %v375, 124
    %v560 = vpop.permute.xlu0 %559
    %561 = vrot.lane.b32.xlu0 %v376, 124
    %v562 = vpop.permute.xlu0 %561
    %563 = vrot.lane.b32.xlu0 %v377, 124
    %v564 = vpop.permute.xlu0 %563
    %565 = vrot.lane.b32.xlu0 %v378, 124
    %v566 = vpop.permute.xlu0 %565
    %567 = vrot.lane.b32.xlu0 %v379, 124
    %v568 = vpop.permute.xlu0 %567
    %569 = vrot.lane.b32.xlu0 %v380, 124
    %v570 = vpop.permute.xlu0 %569
    %571 = vrot.lane.b32.xlu0 %v381, 124
    %v572 = vpop.permute.xlu0 %571
    %573 = vrot.lane.b32.xlu0 %v382, 124
    %v574 = vpop.permute.xlu0 %573
    %v575 = vsel %vm134, %v544, %v546
    %v576 = vsel %vm134, %v548, %v550
    %v577 = vsel %vm134, %v552, %v554
    %v578 = vsel %vm134, %v556, %v558
    %v579 = vsel %vm134, %v560, %v562
    %v580 = vsel %vm134, %v564, %v566
    %v581 = vsel %vm134, %v568, %v570
    %v582 = vsel %vm134, %v572, %v574
    %591 = vrot.lane.b32.xlu0 %v367, 123
    %v592 = vpop.permute.xlu0 %591
    %593 = vrot.lane.b32.xlu0 %v368, 123
    %v594 = vpop.permute.xlu0 %593
    %595 = vrot.lane.b32.xlu0 %v369, 123
    %v596 = vpop.permute.xlu0 %595
    %597 = vrot.lane.b32.xlu0 %v370, 123
    %v598 = vpop.permute.xlu0 %597
    %599 = vrot.lane.b32.xlu0 %v371, 123
    %v600 = vpop.permute.xlu0 %599
    %601 = vrot.lane.b32.xlu0 %v372, 123
    %v602 = vpop.permute.xlu0 %601
    %603 = vrot.lane.b32.xlu0 %v373, 123
    %v604 = vpop.permute.xlu0 %603
    %605 = vrot.lane.b32.xlu0 %v374, 123
    %v606 = vpop.permute.xlu0 %605
    %607 = vrot.lane.b32.xlu0 %v375, 123
    %v608 = vpop.permute.xlu0 %607
    %609 = vrot.lane.b32.xlu0 %v376, 123
    %v610 = vpop.permute.xlu0 %609
    %611 = vrot.lane.b32.xlu0 %v377, 123
    %v612 = vpop.permute.xlu0 %611
    %613 = vrot.lane.b32.xlu0 %v378, 123
    %v614 = vpop.permute.xlu0 %613
    %615 = vrot.lane.b32.xlu0 %v379, 123
    %v616 = vpop.permute.xlu0 %615
    %617 = vrot.lane.b32.xlu0 %v380, 123
    %v618 = vpop.permute.xlu0 %617
    %619 = vrot.lane.b32.xlu0 %v381, 123
    %v620 = vpop.permute.xlu0 %619
    %621 = vrot.lane.b32.xlu0 %v382, 123
    %v622 = vpop.permute.xlu0 %621
    %v623 = vsel %vm142, %v592, %v594
    %v624 = vsel %vm142, %v596, %v598
    %v625 = vsel %vm142, %v600, %v602
    %v626 = vsel %vm142, %v604, %v606
    %v627 = vsel %vm142, %v608, %v610
    %v628 = vsel %vm142, %v612, %v614
    %v629 = vsel %vm142, %v616, %v618
    %v630 = vsel %vm142, %v620, %v622
    %639 = vrot.lane.b32.xlu0 %v367, 122
    %v640 = vpop.permute.xlu0 %639
    %641 = vrot.lane.b32.xlu0 %v368, 122
    %v642 = vpop.permute.xlu0 %641
    %643 = vrot.lane.b32.xlu0 %v369, 122
    %v644 = vpop.permute.xlu0 %643
    %645 = vrot.lane.b32.xlu0 %v370, 122
    %v646 = vpop.permute.xlu0 %645
    %647 = vrot.lane.b32.xlu0 %v371, 122
    %v648 = vpop.permute.xlu0 %647
    %649 = vrot.lane.b32.xlu0 %v372, 122
    %v650 = vpop.permute.xlu0 %649
    %651 = vrot.lane.b32.xlu0 %v373, 122
    %v652 = vpop.permute.xlu0 %651
    %653 = vrot.lane.b32.xlu0 %v374, 122
    %v654 = vpop.permute.xlu0 %653
    %655 = vrot.lane.b32.xlu0 %v375, 122
    %v656 = vpop.permute.xlu0 %655
    %657 = vrot.lane.b32.xlu0 %v376, 122
    %v658 = vpop.permute.xlu0 %657
    %659 = vrot.lane.b32.xlu0 %v377, 122
    %v660 = vpop.permute.xlu0 %659
    %661 = vrot.lane.b32.xlu0 %v378, 122
    %v662 = vpop.permute.xlu0 %661
    %663 = vrot.lane.b32.xlu0 %v379, 122
    %v664 = vpop.permute.xlu0 %663
    %665 = vrot.lane.b32.xlu0 %v380, 122
    %v666 = vpop.permute.xlu0 %665
    %667 = vrot.lane.b32.xlu0 %v381, 122
    %v668 = vpop.permute.xlu0 %667
    %669 = vrot.lane.b32.xlu0 %v382, 122
    %v670 = vpop.permute.xlu0 %669
    %v671 = vsel %vm150, %v640, %v642
    %v672 = vsel %vm150, %v644, %v646
    %v673 = vsel %vm150, %v648, %v650
    %v674 = vsel %vm150, %v652, %v654
    %v675 = vsel %vm150, %v656, %v658
    %v676 = vsel %vm150, %v660, %v662
    %v677 = vsel %vm150, %v664, %v666
    %v678 = vsel %vm150, %v668, %v670
    %687 = vrot.lane.b32.xlu0 %v367, 121
    %v688 = vpop.permute.xlu0 %687
    %689 = vrot.lane.b32.xlu0 %v368, 121
    %v690 = vpop.permute.xlu0 %689
    %691 = vrot.lane.b32.xlu0 %v369, 121
    %v692 = vpop.permute.xlu0 %691
    %693 = vrot.lane.b32.xlu0 %v370, 121
    %v694 = vpop.permute.xlu0 %693
    %695 = vrot.lane.b32.xlu0 %v371, 121
    %v696 = vpop.permute.xlu0 %695
    %697 = vrot.lane.b32.xlu0 %v372, 121
    %v698 = vpop.permute.xlu0 %697
    %699 = vrot.lane.b32.xlu0 %v373, 121
    %v700 = vpop.permute.xlu0 %699
    %701 = vrot.lane.b32.xlu0 %v374, 121
    %v702 = vpop.permute.xlu0 %701
    %703 = vrot.lane.b32.xlu0 %v375, 121
    %v704 = vpop.permute.xlu0 %703
    %705 = vrot.lane.b32.xlu0 %v376, 121
    %v706 = vpop.permute.xlu0 %705
    %707 = vrot.lane.b32.xlu0 %v377, 121
    %v708 = vpop.permute.xlu0 %707
    %709 = vrot.lane.b32.xlu0 %v378, 121
    %v710 = vpop.permute.xlu0 %709
    %711 = vrot.lane.b32.xlu0 %v379, 121
    %v712 = vpop.permute.xlu0 %711
    %713 = vrot.lane.b32.xlu0 %v380, 121
    %v714 = vpop.permute.xlu0 %713
    %715 = vrot.lane.b32.xlu0 %v381, 121
    %v716 = vpop.permute.xlu0 %715
    %717 = vrot.lane.b32.xlu0 %v382, 121
    %v718 = vpop.permute.xlu0 %717
    %v719 = vsel %vm158, %v688, %v690
    %v720 = vsel %vm158, %v692, %v694
    %v721 = vsel %vm158, %v696, %v698
    %v722 = vsel %vm158, %v700, %v702
    %v723 = vsel %vm158, %v704, %v706
    %v724 = vsel %vm158, %v708, %v710
    %v725 = vsel %vm158, %v712, %v714
    %v726 = vsel %vm158, %v716, %v718
    %735 = vrot.lane.b32.xlu0 %v367, 120
    %v736 = vpop.permute.xlu0 %735
    %737 = vrot.lane.b32.xlu0 %v368, 120
    %v738 = vpop.permute.xlu0 %737
    %739 = vrot.lane.b32.xlu0 %v369, 120
    %v740 = vpop.permute.xlu0 %739
    %741 = vrot.lane.b32.xlu0 %v370, 120
    %v742 = vpop.permute.xlu0 %741
    %743 = vrot.lane.b32.xlu0 %v371, 120
    %v744 = vpop.permute.xlu0 %743
    %745 = vrot.lane.b32.xlu0 %v372, 120
    %v746 = vpop.permute.xlu0 %745
    %747 = vrot.lane.b32.xlu0 %v373, 120
    %v748 = vpop.permute.xlu0 %747
    %749 = vrot.lane.b32.xlu0 %v374, 120
    %v750 = vpop.permute.xlu0 %749
    %751 = vrot.lane.b32.xlu0 %v375, 120
    %v752 = vpop.permute.xlu0 %751
    %753 = vrot.lane.b32.xlu0 %v376, 120
    %v754 = vpop.permute.xlu0 %753
    %755 = vrot.lane.b32.xlu0 %v377, 120
    %v756 = vpop.permute.xlu0 %755
    %757 = vrot.lane.b32.xlu0 %v378, 120
    %v758 = vpop.permute.xlu0 %757
    %759 = vrot.lane.b32.xlu0 %v379, 120
    %v760 = vpop.permute.xlu0 %759
    %761 = vrot.lane.b32.xlu0 %v380, 120
    %v762 = vpop.permute.xlu0 %761
    %763 = vrot.lane.b32.xlu0 %v381, 120
    %v764 = vpop.permute.xlu0 %763
    %765 = vrot.lane.b32.xlu0 %v382, 120
    %v766 = vpop.permute.xlu0 %765
    %v767 = vsel %vm166, %v736, %v738
    %v768 = vsel %vm166, %v740, %v742
    %v769 = vsel %vm166, %v744, %v746
    %v770 = vsel %vm166, %v748, %v750
    %v771 = vsel %vm166, %v752, %v754
    %v772 = vsel %vm166, %v756, %v758
    %v773 = vsel %vm166, %v760, %v762
    %v774 = vsel %vm166, %v764, %v766
    %783 = vrot.lane.b32.xlu0 %v367, 119
    %v784 = vpop.permute.xlu0 %783
    %785 = vrot.lane.b32.xlu0 %v368, 119
    %v786 = vpop.permute.xlu0 %785
    %787 = vrot.lane.b32.xlu0 %v369, 119
    %v788 = vpop.permute.xlu0 %787
    %789 = vrot.lane.b32.xlu0 %v370, 119
    %v790 = vpop.permute.xlu0 %789
    %791 = vrot.lane.b32.xlu0 %v371, 119
    %v792 = vpop.permute.xlu0 %791
    %793 = vrot.lane.b32.xlu0 %v372, 119
    %v794 = vpop.permute.xlu0 %793
    %795 = vrot.lane.b32.xlu0 %v373, 119
    %v796 = vpop.permute.xlu0 %795
    %797 = vrot.lane.b32.xlu0 %v374, 119
    %v798 = vpop.permute.xlu0 %797
    %799 = vrot.lane.b32.xlu0 %v375, 119
    %v800 = vpop.permute.xlu0 %799
    %801 = vrot.lane.b32.xlu0 %v376, 119
    %v802 = vpop.permute.xlu0 %801
    %803 = vrot.lane.b32.xlu0 %v377, 119
    %v804 = vpop.permute.xlu0 %803
    %805 = vrot.lane.b32.xlu0 %v378, 119
    %v806 = vpop.permute.xlu0 %805
    %807 = vrot.lane.b32.xlu0 %v379, 119
    %v808 = vpop.permute.xlu0 %807
    %809 = vrot.lane.b32.xlu0 %v380, 119
    %v810 = vpop.permute.xlu0 %809
    %811 = vrot.lane.b32.xlu0 %v381, 119
    %v812 = vpop.permute.xlu0 %811
    %813 = vrot.lane.b32.xlu0 %v382, 119
    %v814 = vpop.permute.xlu0 %813
    %v815 = vsel %vm174, %v784, %v786
    %v816 = vsel %vm174, %v788, %v790
    %v817 = vsel %vm174, %v792, %v794
    %v818 = vsel %vm174, %v796, %v798
    %v819 = vsel %vm174, %v800, %v802
    %v820 = vsel %vm174, %v804, %v806
    %v821 = vsel %vm174, %v808, %v810
    %v822 = vsel %vm174, %v812, %v814
    %832 = vset.pattern.permute.xlu0 0
    %833 = vperm.xlu0 %832, %v88
    %v834 = vpop.permute.xlu0 %833
    %837 = vset.pattern.permute.xlu0 0
    %838 = vperm.xlu0 %837, %v89
    %v839 = vpop.permute.xlu0 %838
    %842 = vset.pattern.permute.xlu0 0
    %843 = vperm.xlu0 %842, %v90
    %v844 = vpop.permute.xlu0 %843
    %847 = vset.pattern.permute.xlu0 0
    %848 = vperm.xlu0 %847, %v91
    %v849 = vpop.permute.xlu0 %848
    %851 = vmatprep.subr.mxu0 0.0
    %852 = vmatpush1.msra.mxu0 %v367
    %853 = vmatprep.subr.mxu0 0.0
    %854 = vmatpush1.msra.mxu0 %v369
    %855 = vmatprep.subr.mxu0 0.0
    %856 = vmatpush1.msra.mxu0 %v371
    %857 = vmatprep.subr.mxu0 0.0
    %858 = vmatpush1.msra.mxu0 %v373
    %859 = vmatprep.subr.mxu0 0.0
    %860 = vmatpush1.msra.mxu0 %v375
    %861 = vmatprep.subr.mxu0 0.0
    %862 = vmatpush1.msra.mxu0 %v377
    %863 = vmatprep.subr.mxu0 0.0
    %864 = vmatpush1.msra.mxu0 %v379
    %865 = vmatprep.subr.mxu0 0.0
    %866 = vmatpush1.msra.mxu0 %v381
    %867 = vmatprep.subr.mxu0 0.0
    %868 = vmatpush1.msra.mxu0 %v431
    %869 = vmatprep.subr.mxu0 0.0
    %870 = vmatpush1.msra.mxu0 %v432
    %871 = vmatprep.subr.mxu0 0.0
    %872 = vmatpush1.msra.mxu0 %v433
    %873 = vmatprep.subr.mxu0 0.0
    %874 = vmatpush1.msra.mxu0 %v434
    %875 = vmatprep.subr.mxu0 0.0
    %876 = vmatpush1.msra.mxu0 %v435
    %877 = vmatprep.subr.mxu0 0.0
    %878 = vmatpush1.msra.mxu0 %v436
    %879 = vmatprep.subr.mxu0 0.0
    %880 = vmatpush1.msra.mxu0 %v437
    %881 = vmatprep.subr.mxu0 0.0
    %882 = vmatpush1.msra.mxu0 %v438
    %883 = vmatprep.subr.mxu0 0.0
    %884 = vmatpush1.msra.mxu0 %v479
    %885 = vmatprep.subr.mxu0 0.0
    %886 = vmatpush1.msra.mxu0 %v480
    %887 = vmatprep.subr.mxu0 0.0
    %888 = vmatpush1.msra.mxu0 %v481
    %889 = vmatprep.subr.mxu0 0.0
    %890 = vmatpush1.msra.mxu0 %v482
    %891 = vmatprep.subr.mxu0 0.0
    %892 = vmatpush1.msra.mxu0 %v483
    %893 = vmatprep.subr.mxu0 0.0
    %894 = vmatpush1.msra.mxu0 %v484
    %895 = vmatprep.subr.mxu0 0.0
    %896 = vmatpush1.msra.mxu0 %v485
    %897 = vmatprep.subr.mxu0 0.0
    %898 = vmatpush1.msra.mxu0 %v486
    %899 = vmatprep.subr.mxu0 0.0
    %900 = vmatpush1.msra.mxu0 %v527
    %901 = vmatprep.subr.mxu0 0.0
    %902 = vmatpush1.msra.mxu0 %v528
    %903 = vmatprep.subr.mxu0 0.0
    %904 = vmatpush1.msra.mxu0 %v529
    %905 = vmatprep.subr.mxu0 0.0
    %906 = vmatpush1.msra.mxu0 %v530
    %907 = vmatprep.subr.mxu0 0.0
    %908 = vmatpush1.msra.mxu0 %v531
    %909 = vmatprep.subr.mxu0 0.0
    %910 = vmatpush1.msra.mxu0 %v532
    %911 = vmatprep.subr.mxu0 0.0
    %912 = vmatpush1.msra.mxu0 %v533
    %913 = vmatprep.subr.mxu0 0.0
    %914 = vmatpush1.msra.mxu0 %v534
    %915 = vmatprep.mubr.f32.mxu0 %v69
    %916 = vmatmul.mubr.f32.gmra.mrb[0].mxu0 %v68
    %v917 = vpop.f32.mrb[0].mxu0
    %v918 = vadd.f32 %v834, %v917
    %v919 = vpop.f32.mrb[0].mxu0
    %920 = vmatprep.mubr.f32.mxu0 %v74
    %921 = vmatmul.mubr.f32.gmra.mrb[0].mxu0 %v73
    %v922 = vpop.f32.mrb[0].mxu0
    %v923 = vadd.f32 %v839, %v922
    %v924 = vpop.f32.mrb[0].mxu0
    %925 = vmatprep.mubr.f32.mxu0 %v79
    %926 = vmatmul.mubr.f32.gmra.mrb[0].mxu0 %v78
    %v927 = vpop.f32.mrb[0].mxu0
    %v928 = vadd.f32 %v844, %v927
    %v929 = vpop.f32.mrb[0].mxu0
    %930 = vmatprep.mubr.f32.mxu0 %v84
    %931 = vmatmul.mubr.f32.gmra.mrb[0].mxu0 %v83
    %v932 = vpop.f32.mrb[0].mxu0
    %v933 = vadd.f32 %v849, %v932
    %v934 = vpop.f32.mrb[0].mxu0
    %935 = vdwg.mxu0
    %936 = vmatprep.subr.mxu0 0.0
    %937 = vmatpush1.msra.mxu0 %v575
    %938 = vmatprep.subr.mxu0 0.0
    %939 = vmatpush1.msra.mxu0 %v576
    %940 = vmatprep.subr.mxu0 0.0
    %941 = vmatpush1.msra.mxu0 %v577
    %942 = vmatprep.subr.mxu0 0.0
    %943 = vmatpush1.msra.mxu0 %v578
    %944 = vmatprep.subr.mxu0 0.0
    %945 = vmatpush1.msra.mxu0 %v579
    %946 = vmatprep.subr.mxu0 0.0
    %947 = vmatpush1.msra.mxu0 %v580
    %948 = vmatprep.subr.mxu0 0.0
    %949 = vmatpush1.msra.mxu0 %v581
    %950 = vmatprep.subr.mxu0 0.0
    %951 = vmatpush1.msra.mxu0 %v582
    %952 = vmatprep.subr.mxu0 0.0
    %953 = vmatpush1.msra.mxu0 %v623
    %954 = vmatprep.subr.mxu0 0.0
    %955 = vmatpush1.msra.mxu0 %v624
    %956 = vmatprep.subr.mxu0 0.0
    %957 = vmatpush1.msra.mxu0 %v625
    %958 = vmatprep.subr.mxu0 0.0
    %959 = vmatpush1.msra.mxu0 %v626
    %960 = vmatprep.subr.mxu0 0.0
    %961 = vmatpush1.msra.mxu0 %v627
    %962 = vmatprep.subr.mxu0 0.0
    %963 = vmatpush1.msra.mxu0 %v628
    %964 = vmatprep.subr.mxu0 0.0
    %965 = vmatpush1.msra.mxu0 %v629
    %966 = vmatprep.subr.mxu0 0.0
    %967 = vmatpush1.msra.mxu0 %v630
    %968 = vmatprep.subr.mxu0 0.0
    %969 = vmatpush1.msra.mxu0 %v671
    %970 = vmatprep.subr.mxu0 0.0
    %971 = vmatpush1.msra.mxu0 %v672
    %972 = vmatprep.subr.mxu0 0.0
    %973 = vmatpush1.msra.mxu0 %v673
    %974 = vmatprep.subr.mxu0 0.0
    %975 = vmatpush1.msra.mxu0 %v674
    %976 = vmatprep.subr.mxu0 0.0
    %977 = vmatpush1.msra.mxu0 %v675
    %978 = vmatprep.subr.mxu0 0.0
    %979 = vmatpush1.msra.mxu0 %v676
    %980 = vmatprep.subr.mxu0 0.0
    %981 = vmatpush1.msra.mxu0 %v677
    %982 = vmatprep.subr.mxu0 0.0
    %983 = vmatpush1.msra.mxu0 %v678
    %984 = vmatprep.subr.mxu0 0.0
    %985 = vmatpush1.msra.mxu0 %v719
    %986 = vmatprep.subr.mxu0 0.0
    %987 = vmatpush1.msra.mxu0 %v720
    %988 = vmatprep.subr.mxu0 0.0
    %989 = vmatpush1.msra.mxu0 %v721
    %990 = vmatprep.subr.mxu0 0.0
    %991 = vmatpush1.msra.mxu0 %v722
    %992 = vmatprep.subr.mxu0 0.0
    %993 = vmatpush1.msra.mxu0 %v723
    %994 = vmatprep.subr.mxu0 0.0
    %995 = vmatpush1.msra.mxu0 %v724
    %996 = vmatprep.subr.mxu0 0.0
    %997 = vmatpush1.msra.mxu0 %v725
    %998 = vmatprep.subr.mxu0 0.0
    %999 = vmatpush1.msra.mxu0 %v726
    %1000 = vmatprep.mubr.f32.mxu0 %v71
    %1001 = vmatmul.mubr.f32.gmra.mrb[0].mxu0 %v70
    %v1002 = vpop.f32.mrb[0].mxu0
    %v1003 = vadd.f32 %v918, %v1002
    %v1004 = vpop.f32.mrb[0].mxu0
    %1005 = vmatprep.mubr.f32.mxu0 %v76
    %1006 = vmatmul.mubr.f32.gmra.mrb[0].mxu0 %v75
    %v1007 = vpop.f32.mrb[0].mxu0
    %v1008 = vadd.f32 %v923, %v1007
    %v1009 = vpop.f32.mrb[0].mxu0
    %1010 = vmatprep.mubr.f32.mxu0 %v81
    %1011 = vmatmul.mubr.f32.gmra.mrb[0].mxu0 %v80
    %v1012 = vpop.f32.mrb[0].mxu0
    %v1013 = vadd.f32 %v928, %v1012
    %v1014 = vpop.f32.mrb[0].mxu0
    %1015 = vmatprep.mubr.f32.mxu0 %v86
    %1016 = vmatmul.mubr.f32.gmra.mrb[0].mxu0 %v85
    %v1017 = vpop.f32.mrb[0].mxu0
    %v1018 = vadd.f32 %v933, %v1017
    %v1019 = vpop.f32.mrb[0].mxu0
    %1020 = vdwg.mxu0
    %1021 = vmatprep.subr.mxu0 0.0
    %1022 = vmatpush1.msra.mxu0 %v767
    %1023 = vmatprep.subr.mxu0 0.0
    %1024 = vmatpush1.msra.mxu0 %v768
    %1025 = vmatprep.subr.mxu0 0.0
    %1026 = vmatpush1.msra.mxu0 %v769
    %1027 = vmatprep.subr.mxu0 0.0
    %1028 = vmatpush1.msra.mxu0 %v770
    %1029 = vmatprep.subr.mxu0 0.0
    %1030 = vmatpush1.msra.mxu0 %v771
    %1031 = vmatprep.subr.mxu0 0.0
    %1032 = vmatpush1.msra.mxu0 %v772
    %1033 = vmatprep.subr.mxu0 0.0
    %1034 = vmatpush1.msra.mxu0 %v773
    %1035 = vmatprep.subr.mxu0 0.0
    %1036 = vmatpush1.msra.mxu0 %v774
    %1037 = vmatprep.subr.mxu0 0.0
    %1038 = vmatpush1.msra.mxu0 %v815
    %1039 = vmatprep.subr.mxu0 0.0
    %1040 = vmatpush1.msra.mxu0 %v816
    %1041 = vmatprep.subr.mxu0 0.0
    %1042 = vmatpush1.msra.mxu0 %v817
    %1043 = vmatprep.subr.mxu0 0.0
    %1044 = vmatpush1.msra.mxu0 %v818
    %1045 = vmatprep.subr.mxu0 0.0
    %1046 = vmatpush1.msra.mxu0 %v819
    %1047 = vmatprep.subr.mxu0 0.0
    %1048 = vmatpush1.msra.mxu0 %v820
    %1049 = vmatprep.subr.mxu0 0.0
    %1050 = vmatpush1.msra.mxu0 %v821
    %1051 = vmatprep.subr.mxu0 0.0
    %1052 = vmatpush1.msra.mxu0 %v822
    %1053 = vmatprep.subr.mxu0 0.0
    %1054 = vmatpush1.msra.mxu0 0.0
    %1055 = vmatprep.subr.mxu0 0.0
    %1056 = vmatpush1.msra.mxu0 0.0
    %1057 = vmatprep.subr.mxu0 0.0
    %1058 = vmatpush1.msra.mxu0 0.0
    %1059 = vmatprep.subr.mxu0 0.0
    %1060 = vmatpush1.msra.mxu0 0.0
    %1061 = vmatprep.subr.mxu0 0.0
    %1062 = vmatpush1.msra.mxu0 0.0
    %1063 = vmatprep.subr.mxu0 0.0
    %1064 = vmatpush1.msra.mxu0 0.0
    %1065 = vmatprep.subr.mxu0 0.0
    %1066 = vmatpush1.msra.mxu0 0.0
    %1067 = vmatprep.subr.mxu0 0.0
    %1068 = vmatpush1.msra.mxu0 0.0
    %1069 = vmatprep.subr.mxu0 0.0
    %1070 = vmatpush1.msra.mxu0 0.0
    %1071 = vmatprep.subr.mxu0 0.0
    %1072 = vmatpush1.msra.mxu0 0.0
    %1073 = vmatprep.subr.mxu0 0.0
    %1074 = vmatpush1.msra.mxu0 0.0
    %1075 = vmatprep.subr.mxu0 0.0
    %1076 = vmatpush1.msra.mxu0 0.0
    %1077 = vmatprep.subr.mxu0 0.0
    %1078 = vmatpush1.msra.mxu0 0.0
    %1079 = vmatprep.subr.mxu0 0.0
    %1080 = vmatpush1.msra.mxu0 0.0
    %1081 = vmatprep.subr.mxu0 0.0
    %1082 = vmatpush1.msra.mxu0 0.0
    %1083 = vmatprep.subr.mxu0 0.0
    %1084 = vmatpush1.msra.mxu0 0.0
    %1085 = vmatprep.mubr.f32.mxu0 0.0
    %1086 = vmatmul.mubr.f32.gmra.mrb[0].mxu0 %v72
    %v1087 = vpop.f32.mrb[0].mxu0
    %v1088 = vadd.f32 %v1003, %v1087
    %v1089 = vpop.f32.mrb[0].mxu0
    %1090 = vmatprep.mubr.f32.mxu0 0.0
    %1091 = vmatmul.mubr.f32.gmra.mrb[0].mxu0 %v77
    %v1092 = vpop.f32.mrb[0].mxu0
    %v1093 = vadd.f32 %v1008, %v1092
    %v1094 = vpop.f32.mrb[0].mxu0
    %1095 = vmatprep.mubr.f32.mxu0 0.0
    %1096 = vmatmul.mubr.f32.gmra.mrb[0].mxu0 %v82
    %v1097 = vpop.f32.mrb[0].mxu0
    %v1098 = vadd.f32 %v1013, %v1097
    %v1099 = vpop.f32.mrb[0].mxu0
    %1100 = vmatprep.mubr.f32.mxu0 0.0
    %1101 = vmatmul.mubr.f32.gmra.mrb[0].mxu0 %v87
    %v1102 = vpop.f32.mrb[0].mxu0
    %v1103 = vadd.f32 %v1018, %v1102
    %v1104 = vpop.f32.mrb[0].mxu0
    %1105 = vdwg.mxu0
    %v1106 = vmax.f32 %v1088, 0.0
    %v1107 = vmax.f32 %v1093, 0.0
    %v1108 = vmax.f32 %v1098, 0.0
    %v1109 = vmax.f32 %v1103, 0.0
    %s1110 = smul.u32 %s93, 32
    %s1111 = scalar_lea.vmem [#allocation3], %s1110
    %1112 = vst [vmem:[%s1111] sm:$0xff] %v1106
    %1113 = vst [vmem:[%s1111 + $0x8] sm:$0xff] %v1107
    %1114 = vst [vmem:[%s1111 + $0x10] sm:$0xff] %v1108
    %1115 = vst [vmem:[%s1111 + $0x18] sm:$0xff] %v1109
  $region62: #{tpu_custom_call.1} parent=0 // loop_footer
    %s97 = sadd.s32 1, %s93
  $region63: #{tpu_custom_call.1} parent=0 // loop_footer_branch
    %92 = sbr.rel target = $region59
  $region64: #{tpu_custom_call.1} parent=0 // loop_exit
    _
  %v1116 = vld [vmem:[#allocation3] sm:$0x1]
  %v1117 = vld [vmem:[#allocation3 + $0x20] sm:$0x1]
  %v1118 = vld [vmem:[%s5] sm:$0xff]
  %v1119 = vld [vmem:[%s5 + $0x8] sm:$0xff]
  %v1120 = vld [vmem:[%s5 + $0x10] sm:$0xff]
  %v1121 = vld [vmem:[%s5 + $0x18] sm:$0xff]
  %v1122 = vld [vmem:[%s5 + $0x20] sm:$0xff]
  %v1123 = vld [vmem:[%s5 + $0x28] sm:$0xff]
  %v1124 = vld [vmem:[%s5 + $0x30] sm:$0xff]
  %v1125 = vld [vmem:[%s5 + $0x38] sm:$0xff]
  %v1126 = vld [vmem:[%s5 + $0x40] sm:$0xff]
  %v1127 = vld [vmem:[%s5 + $0x48] sm:$0xff]
  %v1128 = vld [vmem:[%s5 + $0x50] sm:$0xff]
  %v1129 = vld [vmem:[%s5 + $0x58] sm:$0xff]
  %v1130 = vld [vmem:[%s5 + $0x60] sm:$0xff]
  %v1131 = vld [vmem:[%s5 + $0x68] sm:$0xff]
  %v1132 = vld [vmem:[%s5 + $0x70] sm:$0xff]
  %v1133 = vld [vmem:[%s5 + $0x78] sm:$0xff]
  %v1134 = vld [vmem:[#allocation3 + $0x1] sm:$0x1]
  %v1135 = vld [vmem:[#allocation3 + $0x21] sm:$0x1]
  %s1136 = scalar_lea.vmem %s5, 128
  %v1137 = vld [vmem:[%s1136] sm:$0xff]
  %v1138 = vld [vmem:[%s1136 + $0x8] sm:$0xff]
  %v1139 = vld [vmem:[%s1136 + $0x10] sm:$0xff]
  %v1140 = vld [vmem:[%s1136 + $0x18] sm:$0xff]
  %v1141 = vld [vmem:[%s1136 + $0x20] sm:$0xff]
  %v1142 = vld [vmem:[%s1136 + $0x28] sm:$0xff]
  %v1143 = vld [vmem:[%s1136 + $0x30] sm:$0xff]
  %v1144 = vld [vmem:[%s1136 + $0x38] sm:$0xff]
  %v1145 = vld [vmem:[%s1136 + $0x40] sm:$0xff]
  %v1146 = vld [vmem:[%s1136 + $0x48] sm:$0xff]
  %v1147 = vld [vmem:[%s1136 + $0x50] sm:$0xff]
  %v1148 = vld [vmem:[%s1136 + $0x58] sm:$0xff]
  %v1149 = vld [vmem:[%s1136 + $0x60] sm:$0xff]
  %v1150 = vld [vmem:[%s1136 + $0x68] sm:$0xff]
  %v1151 = vld [vmem:[%s1136 + $0x70] sm:$0xff]
  %v1152 = vld [vmem:[%s1136 + $0x78] sm:$0xff]
  %v1155 = vrot.slane %v1135, 7
  %vm1156 = vcmask 1041409
  %v1157 = vsel %vm1156, %v1155, %v1134
  %1159 = vmatprep.subr.mxu0 0.0
  %1160 = vmatpush1.msra.mxu0 %v1137
  %1161 = vmatprep.subr.mxu0 0.0
  %1162 = vmatpush1.msra.mxu0 %v1138
  %1163 = vmatprep.subr.mxu0 0.0
  %1164 = vmatpush1.msra.mxu0 %v1139
  %1165 = vmatprep.subr.mxu0 0.0
  %1166 = vmatpush1.msra.mxu0 %v1140
  %1167 = vmatprep.subr.mxu0 0.0
  %1168 = vmatpush1.msra.mxu0 %v1141
  %1169 = vmatprep.subr.mxu0 0.0
  %1170 = vmatpush1.msra.mxu0 %v1142
  %1171 = vmatprep.subr.mxu0 0.0
  %1172 = vmatpush1.msra.mxu0 %v1143
  %1173 = vmatprep.subr.mxu0 0.0
  %1174 = vmatpush1.msra.mxu0 %v1144
  %1175 = vmatprep.subr.mxu0 0.0
  %1176 = vmatpush1.msra.mxu0 %v1145
  %1177 = vmatprep.subr.mxu0 0.0
  %1178 = vmatpush1.msra.mxu0 %v1146
  %1179 = vmatprep.subr.mxu0 0.0
  %1180 = vmatpush1.msra.mxu0 %v1147
  %1181 = vmatprep.subr.mxu0 0.0
  %1182 = vmatpush1.msra.mxu0 %v1148
  %1183 = vmatprep.subr.mxu0 0.0
  %1184 = vmatpush1.msra.mxu0 %v1149
  %1185 = vmatprep.subr.mxu0 0.0
  %1186 = vmatpush1.msra.mxu0 %v1150
  %1187 = vmatprep.subr.mxu0 0.0
  %1188 = vmatpush1.msra.mxu0 %v1151
  %1189 = vmatprep.subr.mxu0 0.0
  %1190 = vmatpush1.msra.mxu0 %v1152
  %1191 = vmatprep.subr.mxu0 0.0
  %1192 = vmatpush1.msra.mxu0 0.0
  %1193 = vmatprep.subr.mxu0 0.0
  %1194 = vmatpush1.msra.mxu0 0.0
  %1195 = vmatprep.subr.mxu0 0.0
  %1196 = vmatpush1.msra.mxu0 0.0
  %1197 = vmatprep.subr.mxu0 0.0
  %1198 = vmatpush1.msra.mxu0 0.0
  %1199 = vmatprep.subr.mxu0 0.0
  %1200 = vmatpush1.msra.mxu0 0.0
  %1201 = vmatprep.subr.mxu0 0.0
  %1202 = vmatpush1.msra.mxu0 0.0
  %1203 = vmatprep.subr.mxu0 0.0
  %1204 = vmatpush1.msra.mxu0 0.0
  %1205 = vmatprep.subr.mxu0 0.0
  %1206 = vmatpush1.msra.mxu0 0.0
  %1207 = vmatprep.subr.mxu0 0.0
  %1208 = vmatpush1.msra.mxu0 0.0
  %1209 = vmatprep.subr.mxu0 0.0
  %1210 = vmatpush1.msra.mxu0 0.0
  %1211 = vmatprep.subr.mxu0 0.0
  %1212 = vmatpush1.msra.mxu0 0.0
  %1213 = vmatprep.subr.mxu0 0.0
  %1214 = vmatpush1.msra.mxu0 0.0
  %1215 = vmatprep.subr.mxu0 0.0
  %1216 = vmatpush1.msra.mxu0 0.0
  %1217 = vmatprep.subr.mxu0 0.0
  %1218 = vmatpush1.msra.mxu0 0.0
  %1219 = vmatprep.subr.mxu0 0.0
  %1220 = vmatpush1.msra.mxu0 0.0
  %1221 = vmatprep.subr.mxu0 0.0
  %1222 = vmatpush1.msra.mxu0 0.0
  %1223 = vmatprep.mubr.f32.mxu0 0.0
  %1224 = vmatmul.mubr.f32.gmra.mrb[0].mxu0 %v1157
  %v1225 = vpop.f32.mrb[0].mxu0
  %v1226 = vadd.f32 0.0, %v1225
  %v1227 = vpop.f32.mrb[0].mxu0
  %1228 = vdwg.mxu0
  %v1231 = vrot.slane %v1117, 7
  %v1232 = vsel %vm1156, %v1231, %v1116
  %1234 = vmatprep.subr.mxu0 0.0
  %1235 = vmatpush1.msra.mxu0 %v1118
  %1236 = vmatprep.subr.mxu0 0.0
  %1237 = vmatpush1.msra.mxu0 %v1119
  %1238 = vmatprep.subr.mxu0 0.0
  %1239 = vmatpush1.msra.mxu0 %v1120
  %1240 = vmatprep.subr.mxu0 0.0
  %1241 = vmatpush1.msra.mxu0 %v1121
  %1242 = vmatprep.subr.mxu0 0.0
  %1243 = vmatpush1.msra.mxu0 %v1122
  %1244 = vmatprep.subr.mxu0 0.0
  %1245 = vmatpush1.msra.mxu0 %v1123
  %1246 = vmatprep.subr.mxu0 0.0
  %1247 = vmatpush1.msra.mxu0 %v1124
  %1248 = vmatprep.subr.mxu0 0.0
  %1249 = vmatpush1.msra.mxu0 %v1125
  %1250 = vmatprep.subr.mxu0 0.0
  %1251 = vmatpush1.msra.mxu0 %v1126
  %1252 = vmatprep.subr.mxu0 0.0
  %1253 = vmatpush1.msra.mxu0 %v1127
  %1254 = vmatprep.subr.mxu0 0.0
  %1255 = vmatpush1.msra.mxu0 %v1128
  %1256 = vmatprep.subr.mxu0 0.0
  %1257 = vmatpush1.msra.mxu0 %v1129
  %1258 = vmatprep.subr.mxu0 0.0
  %1259 = vmatpush1.msra.mxu0 %v1130
  %1260 = vmatprep.subr.mxu0 0.0
  %1261 = vmatpush1.msra.mxu0 %v1131
  %1262 = vmatprep.subr.mxu0 0.0
  %1263 = vmatpush1.msra.mxu0 %v1132
  %1264 = vmatprep.subr.mxu0 0.0
  %1265 = vmatpush1.msra.mxu0 %v1133
  %1266 = vmatprep.subr.mxu0 0.0
  %1267 = vmatpush1.msra.mxu0 0.0
  %1268 = vmatprep.subr.mxu0 0.0
  %1269 = vmatpush1.msra.mxu0 0.0
  %1270 = vmatprep.subr.mxu0 0.0
  %1271 = vmatpush1.msra.mxu0 0.0
  %1272 = vmatprep.subr.mxu0 0.0
  %1273 = vmatpush1.msra.mxu0 0.0
  %1274 = vmatprep.subr.mxu0 0.0
  %1275 = vmatpush1.msra.mxu0 0.0
  %1276 = vmatprep.subr.mxu0 0.0
  %1277 = vmatpush1.msra.mxu0 0.0
  %1278 = vmatprep.subr.mxu0 0.0
  %1279 = vmatpush1.msra.mxu0 0.0
  %1280 = vmatprep.subr.mxu0 0.0
  %1281 = vmatpush1.msra.mxu0 0.0
  %1282 = vmatprep.subr.mxu0 0.0
  %1283 = vmatpush1.msra.mxu0 0.0
  %1284 = vmatprep.subr.mxu0 0.0
  %1285 = vmatpush1.msra.mxu0 0.0
  %1286 = vmatprep.subr.mxu0 0.0
  %1287 = vmatpush1.msra.mxu0 0.0
  %1288 = vmatprep.subr.mxu0 0.0
  %1289 = vmatpush1.msra.mxu0 0.0
  %1290 = vmatprep.subr.mxu0 0.0
  %1291 = vmatpush1.msra.mxu0 0.0
  %1292 = vmatprep.subr.mxu0 0.0
  %1293 = vmatpush1.msra.mxu0 0.0
  %1294 = vmatprep.subr.mxu0 0.0
  %1295 = vmatpush1.msra.mxu0 0.0
  %1296 = vmatprep.subr.mxu0 0.0
  %1297 = vmatpush1.msra.mxu0 0.0
  %1298 = vmatprep.mubr.f32.mxu0 0.0
  %1299 = vmatmul.mubr.f32.gmra.mrb[0].mxu0 %v1232
  %v1300 = vpop.f32.mrb[0].mxu0
  %v1301 = vadd.f32 %v1226, %v1300
  %v1302 = vpop.f32.mrb[0].mxu0
  %1303 = vdwg.mxu0
  %v1304 = vld [vmem:[#allocation3 + $0x2] sm:$0x1]
  %v1305 = vld [vmem:[#allocation3 + $0x22] sm:$0x1]
  %s1306 = scalar_lea.vmem %s5, 256
  %v1307 = vld [vmem:[%s1306] sm:$0xff]
  %v1308 = vld [vmem:[%s1306 + $0x8] sm:$0xff]
  %v1309 = vld [vmem:[%s1306 + $0x10] sm:$0xff]
  %v1310 = vld [vmem:[%s1306 + $0x18] sm:$0xff]
  %v1311 = vld [vmem:[%s1306 + $0x20] sm:$0xff]
  %v1312 = vld [vmem:[%s1306 + $0x28] sm:$0xff]
  %v1313 = vld [vmem:[%s1306 + $0x30] sm:$0xff]
  %v1314 = vld [vmem:[%s1306 + $0x38] sm:$0xff]
  %v1315 = vld [vmem:[%s1306 + $0x40] sm:$0xff]
  %v1316 = vld [vmem:[%s1306 + $0x48] sm:$0xff]
  %v1317 = vld [vmem:[%s1306 + $0x50] sm:$0xff]
  %v1318 = vld [vmem:[%s1306 + $0x58] sm:$0xff]
  %v1319 = vld [vmem:[%s1306 + $0x60] sm:$0xff]
  %v1320 = vld [vmem:[%s1306 + $0x68] sm:$0xff]
  %v1321 = vld [vmem:[%s1306 + $0x70] sm:$0xff]
  %v1322 = vld [vmem:[%s1306 + $0x78] sm:$0xff]
  %v1325 = vrot.slane %v1305, 7
  %v1326 = vsel %vm1156, %v1325, %v1304
  %1328 = vmatprep.subr.mxu0 0.0
  %1329 = vmatpush1.msra.mxu0 %v1307
  %1330 = vmatprep.subr.mxu0 0.0
  %1331 = vmatpush1.msra.mxu0 %v1308
  %1332 = vmatprep.subr.mxu0 0.0
  %1333 = vmatpush1.msra.mxu0 %v1309
  %1334 = vmatprep.subr.mxu0 0.0
  %1335 = vmatpush1.msra.mxu0 %v1310
  %1336 = vmatprep.subr.mxu0 0.0
  %1337 = vmatpush1.msra.mxu0 %v1311
  %1338 = vmatprep.subr.mxu0 0.0
  %1339 = vmatpush1.msra.mxu0 %v1312
  %1340 = vmatprep.subr.mxu0 0.0
  %1341 = vmatpush1.msra.mxu0 %v1313
  %1342 = vmatprep.subr.mxu0 0.0
  %1343 = vmatpush1.msra.mxu0 %v1314
  %1344 = vmatprep.subr.mxu0 0.0
  %1345 = vmatpush1.msra.mxu0 %v1315
  %1346 = vmatprep.subr.mxu0 0.0
  %1347 = vmatpush1.msra.mxu0 %v1316
  %1348 = vmatprep.subr.mxu0 0.0
  %1349 = vmatpush1.msra.mxu0 %v1317
  %1350 = vmatprep.subr.mxu0 0.0
  %1351 = vmatpush1.msra.mxu0 %v1318
  %1352 = vmatprep.subr.mxu0 0.0
  %1353 = vmatpush1.msra.mxu0 %v1319
  %1354 = vmatprep.subr.mxu0 0.0
  %1355 = vmatpush1.msra.mxu0 %v1320
  %1356 = vmatprep.subr.mxu0 0.0
  %1357 = vmatpush1.msra.mxu0 %v1321
  %1358 = vmatprep.subr.mxu0 0.0
  %1359 = vmatpush1.msra.mxu0 %v1322
  %1360 = vmatprep.subr.mxu0 0.0
  %1361 = vmatpush1.msra.mxu0 0.0
  %1362 = vmatprep.subr.mxu0 0.0
  %1363 = vmatpush1.msra.mxu0 0.0
  %1364 = vmatprep.subr.mxu0 0.0
  %1365 = vmatpush1.msra.mxu0 0.0
  %1366 = vmatprep.subr.mxu0 0.0
  %1367 = vmatpush1.msra.mxu0 0.0
  %1368 = vmatprep.subr.mxu0 0.0
  %1369 = vmatpush1.msra.mxu0 0.0
  %1370 = vmatprep.subr.mxu0 0.0
  %1371 = vmatpush1.msra.mxu0 0.0
  %1372 = vmatprep.subr.mxu0 0.0
  %1373 = vmatpush1.msra.mxu0 0.0
  %1374 = vmatprep.subr.mxu0 0.0
  %1375 = vmatpush1.msra.mxu0 0.0
  %1376 = vmatprep.subr.mxu0 0.0
  %1377 = vmatpush1.msra.mxu0 0.0
  %1378 = vmatprep.subr.mxu0 0.0
  %1379 = vmatpush1.msra.mxu0 0.0
  %1380 = vmatprep.subr.mxu0 0.0
  %1381 = vmatpush1.msra.mxu0 0.0
  %1382 = vmatprep.subr.mxu0 0.0
  %1383 = vmatpush1.msra.mxu0 0.0
  %1384 = vmatprep.subr.mxu0 0.0
  %1385 = vmatpush1.msra.mxu0 0.0
  %1386 = vmatprep.subr.mxu0 0.0
  %1387 = vmatpush1.msra.mxu0 0.0
  %1388 = vmatprep.subr.mxu0 0.0
  %1389 = vmatpush1.msra.mxu0 0.0
  %1390 = vmatprep.subr.mxu0 0.0
  %1391 = vmatpush1.msra.mxu0 0.0
  %1392 = vmatprep.mubr.f32.mxu0 0.0
  %1393 = vmatmul.mubr.f32.gmra.mrb[0].mxu0 %v1326
  %v1394 = vpop.f32.mrb[0].mxu0
  %v1395 = vadd.f32 0.0, %v1394
  %v1396 = vpop.f32.mrb[0].mxu0
  %1397 = vdwg.mxu0
  %v1398 = vadd.f32 %v1301, %v1395
  %v1399 = vld [vmem:[#allocation3 + $0x3] sm:$0x1]
  %v1400 = vld [vmem:[#allocation3 + $0x23] sm:$0x1]
  %s1401 = scalar_lea.vmem %s5, 384
  %v1402 = vld [vmem:[%s1401] sm:$0xff]
  %v1403 = vld [vmem:[%s1401 + $0x8] sm:$0xff]
  %v1404 = vld [vmem:[%s1401 + $0x10] sm:$0xff]
  %v1405 = vld [vmem:[%s1401 + $0x18] sm:$0xff]
  %v1406 = vld [vmem:[%s1401 + $0x20] sm:$0xff]
  %v1407 = vld [vmem:[%s1401 + $0x28] sm:$0xff]
  %v1408 = vld [vmem:[%s1401 + $0x30] sm:$0xff]
  %v1409 = vld [vmem:[%s1401 + $0x38] sm:$0xff]
  %v1410 = vld [vmem:[%s1401 + $0x40] sm:$0xff]
  %v1411 = vld [vmem:[%s1401 + $0x48] sm:$0xff]
  %v1412 = vld [vmem:[%s1401 + $0x50] sm:$0xff]
  %v1413 = vld [vmem:[%s1401 + $0x58] sm:$0xff]
  %v1414 = vld [vmem:[%s1401 + $0x60] sm:$0xff]
  %v1415 = vld [vmem:[%s1401 + $0x68] sm:$0xff]
  %v1416 = vld [vmem:[%s1401 + $0x70] sm:$0xff]
  %v1417 = vld [vmem:[%s1401 + $0x78] sm:$0xff]
  %v1420 = vrot.slane %v1400, 7
  %v1421 = vsel %vm1156, %v1420, %v1399
  %1423 = vmatprep.subr.mxu0 0.0
  %1424 = vmatpush1.msra.mxu0 %v1402
  %1425 = vmatprep.subr.mxu0 0.0
  %1426 = vmatpush1.msra.mxu0 %v1403
  %1427 = vmatprep.subr.mxu0 0.0
  %1428 = vmatpush1.msra.mxu0 %v1404
  %1429 = vmatprep.subr.mxu0 0.0
  %1430 = vmatpush1.msra.mxu0 %v1405
  %1431 = vmatprep.subr.mxu0 0.0
  %1432 = vmatpush1.msra.mxu0 %v1406
  %1433 = vmatprep.subr.mxu0 0.0
  %1434 = vmatpush1.msra.mxu0 %v1407
  %1435 = vmatprep.subr.mxu0 0.0
  %1436 = vmatpush1.msra.mxu0 %v1408
  %1437 = vmatprep.subr.mxu0 0.0
  %1438 = vmatpush1.msra.mxu0 %v1409
  %1439 = vmatprep.subr.mxu0 0.0
  %1440 = vmatpush1.msra.mxu0 %v1410
  %1441 = vmatprep.subr.mxu0 0.0
  %1442 = vmatpush1.msra.mxu0 %v1411
  %1443 = vmatprep.subr.mxu0 0.0
  %1444 = vmatpush1.msra.mxu0 %v1412
  %1445 = vmatprep.subr.mxu0 0.0
  %1446 = vmatpush1.msra.mxu0 %v1413
  %1447 = vmatprep.subr.mxu0 0.0
  %1448 = vmatpush1.msra.mxu0 %v1414
  %1449 = vmatprep.subr.mxu0 0.0
  %1450 = vmatpush1.msra.mxu0 %v1415
  %1451 = vmatprep.subr.mxu0 0.0
  %1452 = vmatpush1.msra.mxu0 %v1416
  %1453 = vmatprep.subr.mxu0 0.0
  %1454 = vmatpush1.msra.mxu0 %v1417
  %1455 = vmatprep.subr.mxu0 0.0
  %1456 = vmatpush1.msra.mxu0 0.0
  %1457 = vmatprep.subr.mxu0 0.0
  %1458 = vmatpush1.msra.mxu0 0.0
  %1459 = vmatprep.subr.mxu0 0.0
  %1460 = vmatpush1.msra.mxu0 0.0
  %1461 = vmatprep.subr.mxu0 0.0
  %1462 = vmatpush1.msra.mxu0 0.0
  %1463 = vmatprep.subr.mxu0 0.0
  %1464 = vmatpush1.msra.mxu0 0.0
  %1465 = vmatprep.subr.mxu0 0.0
  %1466 = vmatpush1.msra.mxu0 0.0
  %1467 = vmatprep.subr.mxu0 0.0
  %1468 = vmatpush1.msra.mxu0 0.0
  %1469 = vmatprep.subr.mxu0 0.0
  %1470 = vmatpush1.msra.mxu0 0.0
  %1471 = vmatprep.subr.mxu0 0.0
  %1472 = vmatpush1.msra.mxu0 0.0
  %1473 = vmatprep.subr.mxu0 0.0
  %1474 = vmatpush1.msra.mxu0 0.0
  %1475 = vmatprep.subr.mxu0 0.0
  %1476 = vmatpush1.msra.mxu0 0.0
  %1477 = vmatprep.subr.mxu0 0.0
  %1478 = vmatpush1.msra.mxu0 0.0
  %1479 = vmatprep.subr.mxu0 0.0
  %1480 = vmatpush1.msra.mxu0 0.0
  %1481 = vmatprep.subr.mxu0 0.0
  %1482 = vmatpush1.msra.mxu0 0.0
  %1483 = vmatprep.subr.mxu0 0.0
  %1484 = vmatpush1.msra.mxu0 0.0
  %1485 = vmatprep.subr.mxu0 0.0
  %1486 = vmatpush1.msra.mxu0 0.0
  %1487 = vmatprep.mubr.f32.mxu0 0.0
  %1488 = vmatmul.mubr.f32.gmra.mrb[0].mxu0 %v1421
  %v1489 = vpop.f32.mrb[0].mxu0
  %v1490 = vadd.f32 0.0, %v1489
  %v1491 = vpop.f32.mrb[0].mxu0
  %1492 = vdwg.mxu0
  %v1493 = vadd.f32 %v1398, %v1490
  %v1494 = vld [vmem:[#allocation3 + $0x4] sm:$0x1]
  %v1495 = vld [vmem:[#allocation3 + $0x24] sm:$0x1]
  %s1496 = scalar_lea.vmem %s5, 512
  %v1497 = vld [vmem:[%s1496] sm:$0xff]
  %v1498 = vld [vmem:[%s1496 + $0x8] sm:$0xff]
  %v1499 = vld [vmem:[%s1496 + $0x10] sm:$0xff]
  %v1500 = vld [vmem:[%s1496 + $0x18] sm:$0xff]
  %v1501 = vld [vmem:[%s1496 + $0x20] sm:$0xff]
  %v1502 = vld [vmem:[%s1496 + $0x28] sm:$0xff]
  %v1503 = vld [vmem:[%s1496 + $0x30] sm:$0xff]
  %v1504 = vld [vmem:[%s1496 + $0x38] sm:$0xff]
  %v1505 = vld [vmem:[%s1496 + $0x40] sm:$0xff]
  %v1506 = vld [vmem:[%s1496 + $0x48] sm:$0xff]
  %v1507 = vld [vmem:[%s1496 + $0x50] sm:$0xff]
  %v1508 = vld [vmem:[%s1496 + $0x58] sm:$0xff]
  %v1509 = vld [vmem:[%s1496 + $0x60] sm:$0xff]
  %v1510 = vld [vmem:[%s1496 + $0x68] sm:$0xff]
  %v1511 = vld [vmem:[%s1496 + $0x70] sm:$0xff]
  %v1512 = vld [vmem:[%s1496 + $0x78] sm:$0xff]
  %v1515 = vrot.slane %v1495, 7
  %v1516 = vsel %vm1156, %v1515, %v1494
  %1518 = vmatprep.subr.mxu0 0.0
  %1519 = vmatpush1.msra.mxu0 %v1497
  %1520 = vmatprep.subr.mxu0 0.0
  %1521 = vmatpush1.msra.mxu0 %v1498
  %1522 = vmatprep.subr.mxu0 0.0
  %1523 = vmatpush1.msra.mxu0 %v1499
  %1524 = vmatprep.subr.mxu0 0.0
  %1525 = vmatpush1.msra.mxu0 %v1500
  %1526 = vmatprep.subr.mxu0 0.0
  %1527 = vmatpush1.msra.mxu0 %v1501
  %1528 = vmatprep.subr.mxu0 0.0
  %1529 = vmatpush1.msra.mxu0 %v1502
  %1530 = vmatprep.subr.mxu0 0.0
  %1531 = vmatpush1.msra.mxu0 %v1503
  %1532 = vmatprep.subr.mxu0 0.0
  %1533 = vmatpush1.msra.mxu0 %v1504
  %1534 = vmatprep.subr.mxu0 0.0
  %1535 = vmatpush1.msra.mxu0 %v1505
  %1536 = vmatprep.subr.mxu0 0.0
  %1537 = vmatpush1.msra.mxu0 %v1506
  %1538 = vmatprep.subr.mxu0 0.0
  %1539 = vmatpush1.msra.mxu0 %v1507
  %1540 = vmatprep.subr.mxu0 0.0
  %1541 = vmatpush1.msra.mxu0 %v1508
  %1542 = vmatprep.subr.mxu0 0.0
  %1543 = vmatpush1.msra.mxu0 %v1509
  %1544 = vmatprep.subr.mxu0 0.0
  %1545 = vmatpush1.msra.mxu0 %v1510
  %1546 = vmatprep.subr.mxu0 0.0
  %1547 = vmatpush1.msra.mxu0 %v1511
  %1548 = vmatprep.subr.mxu0 0.0
  %1549 = vmatpush1.msra.mxu0 %v1512
  %1550 = vmatprep.subr.mxu0 0.0
  %1551 = vmatpush1.msra.mxu0 0.0
  %1552 = vmatprep.subr.mxu0 0.0
  %1553 = vmatpush1.msra.mxu0 0.0
  %1554 = vmatprep.subr.mxu0 0.0
  %1555 = vmatpush1.msra.mxu0 0.0
  %1556 = vmatprep.subr.mxu0 0.0
  %1557 = vmatpush1.msra.mxu0 0.0
  %1558 = vmatprep.subr.mxu0 0.0
  %1559 = vmatpush1.msra.mxu0 0.0
  %1560 = vmatprep.subr.mxu0 0.0
  %1561 = vmatpush1.msra.mxu0 0.0
  %1562 = vmatprep.subr.mxu0 0.0
  %1563 = vmatpush1.msra.mxu0 0.0
  %1564 = vmatprep.subr.mxu0 0.0
  %1565 = vmatpush1.msra.mxu0 0.0
  %1566 = vmatprep.subr.mxu0 0.0
  %1567 = vmatpush1.msra.mxu0 0.0
  %1568 = vmatprep.subr.mxu0 0.0
  %1569 = vmatpush1.msra.mxu0 0.0
  %1570 = vmatprep.subr.mxu0 0.0
  %1571 = vmatpush1.msra.mxu0 0.0
  %1572 = vmatprep.subr.mxu0 0.0
  %1573 = vmatpush1.msra.mxu0 0.0
  %1574 = vmatprep.subr.mxu0 0.0
  %1575 = vmatpush1.msra.mxu0 0.0
  %1576 = vmatprep.subr.mxu0 0.0
  %1577 = vmatpush1.msra.mxu0 0.0
  %1578 = vmatprep.subr.mxu0 0.0
  %1579 = vmatpush1.msra.mxu0 0.0
  %1580 = vmatprep.subr.mxu0 0.0
  %1581 = vmatpush1.msra.mxu0 0.0
  %1582 = vmatprep.mubr.f32.mxu0 0.0
  %1583 = vmatmul.mubr.f32.gmra.mrb[0].mxu0 %v1516
  %v1584 = vpop.f32.mrb[0].mxu0
  %v1585 = vadd.f32 0.0, %v1584
  %v1586 = vpop.f32.mrb[0].mxu0
  %1587 = vdwg.mxu0
  %v1588 = vadd.f32 %v1493, %v1585
  %v1589 = vld [vmem:[#allocation3 + $0x5] sm:$0x1]
  %v1590 = vld [vmem:[#allocation3 + $0x25] sm:$0x1]
  %s1591 = scalar_lea.vmem %s5, 640
  %v1592 = vld [vmem:[%s1591] sm:$0xff]
  %v1593 = vld [vmem:[%s1591 + $0x8] sm:$0xff]
  %v1594 = vld [vmem:[%s1591 + $0x10] sm:$0xff]
  %v1595 = vld [vmem:[%s1591 + $0x18] sm:$0xff]
  %v1596 = vld [vmem:[%s1591 + $0x20] sm:$0xff]
  %v1597 = vld [vmem:[%s1591 + $0x28] sm:$0xff]
  %v1598 = vld [vmem:[%s1591 + $0x30] sm:$0xff]
  %v1599 = vld [vmem:[%s1591 + $0x38] sm:$0xff]
  %v1600 = vld [vmem:[%s1591 + $0x40] sm:$0xff]
  %v1601 = vld [vmem:[%s1591 + $0x48] sm:$0xff]
  %v1602 = vld [vmem:[%s1591 + $0x50] sm:$0xff]
  %v1603 = vld [vmem:[%s1591 + $0x58] sm:$0xff]
  %v1604 = vld [vmem:[%s1591 + $0x60] sm:$0xff]
  %v1605 = vld [vmem:[%s1591 + $0x68] sm:$0xff]
  %v1606 = vld [vmem:[%s1591 + $0x70] sm:$0xff]
  %v1607 = vld [vmem:[%s1591 + $0x78] sm:$0xff]
  %v1610 = vrot.slane %v1590, 7
  %v1611 = vsel %vm1156, %v1610, %v1589
  %1613 = vmatprep.subr.mxu0 0.0
  %1614 = vmatpush1.msra.mxu0 %v1592
  %1615 = vmatprep.subr.mxu0 0.0
  %1616 = vmatpush1.msra.mxu0 %v1593
  %1617 = vmatprep.subr.mxu0 0.0
  %1618 = vmatpush1.msra.mxu0 %v1594
  %1619 = vmatprep.subr.mxu0 0.0
  %1620 = vmatpush1.msra.mxu0 %v1595
  %1621 = vmatprep.subr.mxu0 0.0
  %1622 = vmatpush1.msra.mxu0 %v1596
  %1623 = vmatprep.subr.mxu0 0.0
  %1624 = vmatpush1.msra.mxu0 %v1597
  %1625 = vmatprep.subr.mxu0 0.0
  %1626 = vmatpush1.msra.mxu0 %v1598
  %1627 = vmatprep.subr.mxu0 0.0
  %1628 = vmatpush1.msra.mxu0 %v1599
  %1629 = vmatprep.subr.mxu0 0.0
  %1630 = vmatpush1.msra.mxu0 %v1600
  %1631 = vmatprep.subr.mxu0 0.0
  %1632 = vmatpush1.msra.mxu0 %v1601
  %1633 = vmatprep.subr.mxu0 0.0
  %1634 = vmatpush1.msra.mxu0 %v1602
  %1635 = vmatprep.subr.mxu0 0.0
  %1636 = vmatpush1.msra.mxu0 %v1603
  %1637 = vmatprep.subr.mxu0 0.0
  %1638 = vmatpush1.msra.mxu0 %v1604
  %1639 = vmatprep.subr.mxu0 0.0
  %1640 = vmatpush1.msra.mxu0 %v1605
  %1641 = vmatprep.subr.mxu0 0.0
  %1642 = vmatpush1.msra.mxu0 %v1606
  %1643 = vmatprep.subr.mxu0 0.0
  %1644 = vmatpush1.msra.mxu0 %v1607
  %1645 = vmatprep.subr.mxu0 0.0
  %1646 = vmatpush1.msra.mxu0 0.0
  %1647 = vmatprep.subr.mxu0 0.0
  %1648 = vmatpush1.msra.mxu0 0.0
  %1649 = vmatprep.subr.mxu0 0.0
  %1650 = vmatpush1.msra.mxu0 0.0
  %1651 = vmatprep.subr.mxu0 0.0
  %1652 = vmatpush1.msra.mxu0 0.0
  %1653 = vmatprep.subr.mxu0 0.0
  %1654 = vmatpush1.msra.mxu0 0.0
  %1655 = vmatprep.subr.mxu0 0.0
  %1656 = vmatpush1.msra.mxu0 0.0
  %1657 = vmatprep.subr.mxu0 0.0
  %1658 = vmatpush1.msra.mxu0 0.0
  %1659 = vmatprep.subr.mxu0 0.0
  %1660 = vmatpush1.msra.mxu0 0.0
  %1661 = vmatprep.subr.mxu0 0.0
  %1662 = vmatpush1.msra.mxu0 0.0
  %1663 = vmatprep.subr.mxu0 0.0
  %1664 = vmatpush1.msra.mxu0 0.0
  %1665 = vmatprep.subr.mxu0 0.0
  %1666 = vmatpush1.msra.mxu0 0.0
  %1667 = vmatprep.subr.mxu0 0.0
  %1668 = vmatpush1.msra.mxu0 0.0
  %1669 = vmatprep.subr.mxu0 0.0
  %1670 = vmatpush1.msra.mxu0 0.0
  %1671 = vmatprep.subr.mxu0 0.0
  %1672 = vmatpush1.msra.mxu0 0.0
  %1673 = vmatprep.subr.mxu0 0.0
  %1674 = vmatpush1.msra.mxu0 0.0
  %1675 = vmatprep.subr.mxu0 0.0
  %1676 = vmatpush1.msra.mxu0 0.0
  %1677 = vmatprep.mubr.f32.mxu0 0.0
  %1678 = vmatmul.mubr.f32.gmra.mrb[0].mxu0 %v1611
  %v1679 = vpop.f32.mrb[0].mxu0
  %v1680 = vadd.f32 0.0, %v1679
  %v1681 = vpop.f32.mrb[0].mxu0
  %1682 = vdwg.mxu0
  %v1683 = vadd.f32 %v1588, %v1680
  %v1684 = vld [vmem:[#allocation3 + $0x6] sm:$0x1]
  %v1685 = vld [vmem:[#allocation3 + $0x26] sm:$0x1]
  %s1686 = scalar_lea.vmem %s5, 768
  %v1687 = vld [vmem:[%s1686] sm:$0xff]
  %v1688 = vld [vmem:[%s1686 + $0x8] sm:$0xff]
  %v1689 = vld [vmem:[%s1686 + $0x10] sm:$0xff]
  %v1690 = vld [vmem:[%s1686 + $0x18] sm:$0xff]
  %v1691 = vld [vmem:[%s1686 + $0x20] sm:$0xff]
  %v1692 = vld [vmem:[%s1686 + $0x28] sm:$0xff]
  %v1693 = vld [vmem:[%s1686 + $0x30] sm:$0xff]
  %v1694 = vld [vmem:[%s1686 + $0x38] sm:$0xff]
  %v1695 = vld [vmem:[%s1686 + $0x40] sm:$0xff]
  %v1696 = vld [vmem:[%s1686 + $0x48] sm:$0xff]
  %v1697 = vld [vmem:[%s1686 + $0x50] sm:$0xff]
  %v1698 = vld [vmem:[%s1686 + $0x58] sm:$0xff]
  %v1699 = vld [vmem:[%s1686 + $0x60] sm:$0xff]
  %v1700 = vld [vmem:[%s1686 + $0x68] sm:$0xff]
  %v1701 = vld [vmem:[%s1686 + $0x70] sm:$0xff]
  %v1702 = vld [vmem:[%s1686 + $0x78] sm:$0xff]
  %v1705 = vrot.slane %v1685, 7
  %v1706 = vsel %vm1156, %v1705, %v1684
  %1708 = vmatprep.subr.mxu0 0.0
  %1709 = vmatpush1.msra.mxu0 %v1687
  %1710 = vmatprep.subr.mxu0 0.0
  %1711 = vmatpush1.msra.mxu0 %v1688
  %1712 = vmatprep.subr.mxu0 0.0
  %1713 = vmatpush1.msra.mxu0 %v1689
  %1714 = vmatprep.subr.mxu0 0.0
  %1715 = vmatpush1.msra.mxu0 %v1690
  %1716 = vmatprep.subr.mxu0 0.0
  %1717 = vmatpush1.msra.mxu0 %v1691
  %1718 = vmatprep.subr.mxu0 0.0
  %1719 = vmatpush1.msra.mxu0 %v1692
  %1720 = vmatprep.subr.mxu0 0.0
  %1721 = vmatpush1.msra.mxu0 %v1693
  %1722 = vmatprep.subr.mxu0 0.0
  %1723 = vmatpush1.msra.mxu0 %v1694
  %1724 = vmatprep.subr.mxu0 0.0
  %1725 = vmatpush1.msra.mxu0 %v1695
  %1726 = vmatprep.subr.mxu0 0.0
  %1727 = vmatpush1.msra.mxu0 %v1696
  %1728 = vmatprep.subr.mxu0 0.0
  %1729 = vmatpush1.msra.mxu0 %v1697
  %1730 = vmatprep.subr.mxu0 0.0
  %1731 = vmatpush1.msra.mxu0 %v1698
  %1732 = vmatprep.subr.mxu0 0.0
  %1733 = vmatpush1.msra.mxu0 %v1699
  %1734 = vmatprep.subr.mxu0 0.0
  %1735 = vmatpush1.msra.mxu0 %v1700
  %1736 = vmatprep.subr.mxu0 0.0
  %1737 = vmatpush1.msra.mxu0 %v1701
  %1738 = vmatprep.subr.mxu0 0.0
  %1739 = vmatpush1.msra.mxu0 %v1702
  %1740 = vmatprep.subr.mxu0 0.0
  %1741 = vmatpush1.msra.mxu0 0.0
  %1742 = vmatprep.subr.mxu0 0.0
  %1743 = vmatpush1.msra.mxu0 0.0
  %1744 = vmatprep.subr.mxu0 0.0
  %1745 = vmatpush1.msra.mxu0 0.0
  %1746 = vmatprep.subr.mxu0 0.0
  %1747 = vmatpush1.msra.mxu0 0.0
  %1748 = vmatprep.subr.mxu0 0.0
  %1749 = vmatpush1.msra.mxu0 0.0
  %1750 = vmatprep.subr.mxu0 0.0
  %1751 = vmatpush1.msra.mxu0 0.0
  %1752 = vmatprep.subr.mxu0 0.0
  %1753 = vmatpush1.msra.mxu0 0.0
  %1754 = vmatprep.subr.mxu0 0.0
  %1755 = vmatpush1.msra.mxu0 0.0
  %1756 = vmatprep.subr.mxu0 0.0
  %1757 = vmatpush1.msra.mxu0 0.0
  %1758 = vmatprep.subr.mxu0 0.0
  %1759 = vmatpush1.msra.mxu0 0.0
  %1760 = vmatprep.subr.mxu0 0.0
  %1761 = vmatpush1.msra.mxu0 0.0
  %1762 = vmatprep.subr.mxu0 0.0
  %1763 = vmatpush1.msra.mxu0 0.0
  %1764 = vmatprep.subr.mxu0 0.0
  %1765 = vmatpush1.msra.mxu0 0.0
  %1766 = vmatprep.subr.mxu0 0.0
  %1767 = vmatpush1.msra.mxu0 0.0
  %1768 = vmatprep.subr.mxu0 0.0
  %1769 = vmatpush1.msra.mxu0 0.0
  %1770 = vmatprep.subr.mxu0 0.0
  %1771 = vmatpush1.msra.mxu0 0.0
  %1772 = vmatprep.mubr.f32.mxu0 0.0
  %1773 = vmatmul.mubr.f32.gmra.mrb[0].mxu0 %v1706
  %v1774 = vpop.f32.mrb[0].mxu0
  %v1775 = vadd.f32 0.0, %v1774
  %v1776 = vpop.f32.mrb[0].mxu0
  %1777 = vdwg.mxu0
  %v1778 = vadd.f32 %v1683, %v1775
  %v1779 = vld [vmem:[#allocation3 + $0x7] sm:$0x1]
  %v1780 = vld [vmem:[#allocation3 + $0x27] sm:$0x1]
  %s1781 = scalar_lea.vmem %s5, 896
  %v1782 = vld [vmem:[%s1781] sm:$0xff]
  %v1783 = vld [vmem:[%s1781 + $0x8] sm:$0xff]
  %v1784 = vld [vmem:[%s1781 + $0x10] sm:$0xff]
  %v1785 = vld [vmem:[%s1781 + $0x18] sm:$0xff]
  %v1786 = vld [vmem:[%s1781 + $0x20] sm:$0xff]
  %v1787 = vld [vmem:[%s1781 + $0x28] sm:$0xff]
  %v1788 = vld [vmem:[%s1781 + $0x30] sm:$0xff]
  %v1789 = vld [vmem:[%s1781 + $0x38] sm:$0xff]
  %v1790 = vld [vmem:[%s1781 + $0x40] sm:$0xff]
  %v1791 = vld [vmem:[%s1781 + $0x48] sm:$0xff]
  %v1792 = vld [vmem:[%s1781 + $0x50] sm:$0xff]
  %v1793 = vld [vmem:[%s1781 + $0x58] sm:$0xff]
  %v1794 = vld [vmem:[%s1781 + $0x60] sm:$0xff]
  %v1795 = vld [vmem:[%s1781 + $0x68] sm:$0xff]
  %v1796 = vld [vmem:[%s1781 + $0x70] sm:$0xff]
  %v1797 = vld [vmem:[%s1781 + $0x78] sm:$0xff]
  %v1800 = vrot.slane %v1780, 7
  %v1801 = vsel %vm1156, %v1800, %v1779
  %1803 = vmatprep.subr.mxu0 0.0
  %1804 = vmatpush1.msra.mxu0 %v1782
  %1805 = vmatprep.subr.mxu0 0.0
  %1806 = vmatpush1.msra.mxu0 %v1783
  %1807 = vmatprep.subr.mxu0 0.0
  %1808 = vmatpush1.msra.mxu0 %v1784
  %1809 = vmatprep.subr.mxu0 0.0
  %1810 = vmatpush1.msra.mxu0 %v1785
  %1811 = vmatprep.subr.mxu0 0.0
  %1812 = vmatpush1.msra.mxu0 %v1786
  %1813 = vmatprep.subr.mxu0 0.0
  %1814 = vmatpush1.msra.mxu0 %v1787
  %1815 = vmatprep.subr.mxu0 0.0
  %1816 = vmatpush1.msra.mxu0 %v1788
  %1817 = vmatprep.subr.mxu0 0.0
  %1818 = vmatpush1.msra.mxu0 %v1789
  %1819 = vmatprep.subr.mxu0 0.0
  %1820 = vmatpush1.msra.mxu0 %v1790
  %1821 = vmatprep.subr.mxu0 0.0
  %1822 = vmatpush1.msra.mxu0 %v1791
  %1823 = vmatprep.subr.mxu0 0.0
  %1824 = vmatpush1.msra.mxu0 %v1792
  %1825 = vmatprep.subr.mxu0 0.0
  %1826 = vmatpush1.msra.mxu0 %v1793
  %1827 = vmatprep.subr.mxu0 0.0
  %1828 = vmatpush1.msra.mxu0 %v1794
  %1829 = vmatprep.subr.mxu0 0.0
  %1830 = vmatpush1.msra.mxu0 %v1795
  %1831 = vmatprep.subr.mxu0 0.0
  %1832 = vmatpush1.msra.mxu0 %v1796
  %1833 = vmatprep.subr.mxu0 0.0
  %1834 = vmatpush1.msra.mxu0 %v1797
  %1835 = vmatprep.subr.mxu0 0.0
  %1836 = vmatpush1.msra.mxu0 0.0
  %1837 = vmatprep.subr.mxu0 0.0
  %1838 = vmatpush1.msra.mxu0 0.0
  %1839 = vmatprep.subr.mxu0 0.0
  %1840 = vmatpush1.msra.mxu0 0.0
  %1841 = vmatprep.subr.mxu0 0.0
  %1842 = vmatpush1.msra.mxu0 0.0
  %1843 = vmatprep.subr.mxu0 0.0
  %1844 = vmatpush1.msra.mxu0 0.0
  %1845 = vmatprep.subr.mxu0 0.0
  %1846 = vmatpush1.msra.mxu0 0.0
  %1847 = vmatprep.subr.mxu0 0.0
  %1848 = vmatpush1.msra.mxu0 0.0
  %1849 = vmatprep.subr.mxu0 0.0
  %1850 = vmatpush1.msra.mxu0 0.0
  %1851 = vmatprep.subr.mxu0 0.0
  %1852 = vmatpush1.msra.mxu0 0.0
  %1853 = vmatprep.subr.mxu0 0.0
  %1854 = vmatpush1.msra.mxu0 0.0
  %1855 = vmatprep.subr.mxu0 0.0
  %1856 = vmatpush1.msra.mxu0 0.0
  %1857 = vmatprep.subr.mxu0 0.0
  %1858 = vmatpush1.msra.mxu0 0.0
  %1859 = vmatprep.subr.mxu0 0.0
  %1860 = vmatpush1.msra.mxu0 0.0
  %1861 = vmatprep.subr.mxu0 0.0
  %1862 = vmatpush1.msra.mxu0 0.0
  %1863 = vmatprep.subr.mxu0 0.0
  %1864 = vmatpush1.msra.mxu0 0.0
  %1865 = vmatprep.subr.mxu0 0.0
  %1866 = vmatpush1.msra.mxu0 0.0
  %1867 = vmatprep.mubr.f32.mxu0 0.0
  %1868 = vmatmul.mubr.f32.gmra.mrb[0].mxu0 %v1801
  %v1869 = vpop.f32.mrb[0].mxu0
  %v1870 = vadd.f32 0.0, %v1869
  %v1871 = vpop.f32.mrb[0].mxu0
  %1872 = vdwg.mxu0
  %v1873 = vadd.f32 %v1778, %v1870
  %v1874 = vld [vmem:[#allocation3 + $0x8] sm:$0x1]
  %v1875 = vld [vmem:[#allocation3 + $0x28] sm:$0x1]
  %s1876 = scalar_lea.vmem %s5, 1024
  %v1877 = vld [vmem:[%s1876] sm:$0xff]
  %v1878 = vld [vmem:[%s1876 + $0x8] sm:$0xff]
  %v1879 = vld [vmem:[%s1876 + $0x10] sm:$0xff]
  %v1880 = vld [vmem:[%s1876 + $0x18] sm:$0xff]
  %v1881 = vld [vmem:[%s1876 + $0x20] sm:$0xff]
  %v1882 = vld [vmem:[%s1876 + $0x28] sm:$0xff]
  %v1883 = vld [vmem:[%s1876 + $0x30] sm:$0xff]
  %v1884 = vld [vmem:[%s1876 + $0x38] sm:$0xff]
  %v1885 = vld [vmem:[%s1876 + $0x40] sm:$0xff]
  %v1886 = vld [vmem:[%s1876 + $0x48] sm:$0xff]
  %v1887 = vld [vmem:[%s1876 + $0x50] sm:$0xff]
  %v1888 = vld [vmem:[%s1876 + $0x58] sm:$0xff]
  %v1889 = vld [vmem:[%s1876 + $0x60] sm:$0xff]
  %v1890 = vld [vmem:[%s1876 + $0x68] sm:$0xff]
  %v1891 = vld [vmem:[%s1876 + $0x70] sm:$0xff]
  %v1892 = vld [vmem:[%s1876 + $0x78] sm:$0xff]
  %v1895 = vrot.slane %v1875, 7
  %v1896 = vsel %vm1156, %v1895, %v1874
  %1898 = vmatprep.subr.mxu0 0.0
  %1899 = vmatpush1.msra.mxu0 %v1877
  %1900 = vmatprep.subr.mxu0 0.0
  %1901 = vmatpush1.msra.mxu0 %v1878
  %1902 = vmatprep.subr.mxu0 0.0
  %1903 = vmatpush1.msra.mxu0 %v1879
  %1904 = vmatprep.subr.mxu0 0.0
  %1905 = vmatpush1.msra.mxu0 %v1880
  %1906 = vmatprep.subr.mxu0 0.0
  %1907 = vmatpush1.msra.mxu0 %v1881
  %1908 = vmatprep.subr.mxu0 0.0
  %1909 = vmatpush1.msra.mxu0 %v1882
  %1910 = vmatprep.subr.mxu0 0.0
  %1911 = vmatpush1.msra.mxu0 %v1883
  %1912 = vmatprep.subr.mxu0 0.0
  %1913 = vmatpush1.msra.mxu0 %v1884
  %1914 = vmatprep.subr.mxu0 0.0
  %1915 = vmatpush1.msra.mxu0 %v1885
  %1916 = vmatprep.subr.mxu0 0.0
  %1917 = vmatpush1.msra.mxu0 %v1886
  %1918 = vmatprep.subr.mxu0 0.0
  %1919 = vmatpush1.msra.mxu0 %v1887
  %1920 = vmatprep.subr.mxu0 0.0
  %1921 = vmatpush1.msra.mxu0 %v1888
  %1922 = vmatprep.subr.mxu0 0.0
  %1923 = vmatpush1.msra.mxu0 %v1889
  %1924 = vmatprep.subr.mxu0 0.0
  %1925 = vmatpush1.msra.mxu0 %v1890
  %1926 = vmatprep.subr.mxu0 0.0
  %1927 = vmatpush1.msra.mxu0 %v1891
  %1928 = vmatprep.subr.mxu0 0.0
  %1929 = vmatpush1.msra.mxu0 %v1892
  %1930 = vmatprep.subr.mxu0 0.0
  %1931 = vmatpush1.msra.mxu0 0.0
  %1932 = vmatprep.subr.mxu0 0.0
  %1933 = vmatpush1.msra.mxu0 0.0
  %1934 = vmatprep.subr.mxu0 0.0
  %1935 = vmatpush1.msra.mxu0 0.0
  %1936 = vmatprep.subr.mxu0 0.0
  %1937 = vmatpush1.msra.mxu0 0.0
  %1938 = vmatprep.subr.mxu0 0.0
  %1939 = vmatpush1.msra.mxu0 0.0
  %1940 = vmatprep.subr.mxu0 0.0
  %1941 = vmatpush1.msra.mxu0 0.0
  %1942 = vmatprep.subr.mxu0 0.0
  %1943 = vmatpush1.msra.mxu0 0.0
  %1944 = vmatprep.subr.mxu0 0.0
  %1945 = vmatpush1.msra.mxu0 0.0
  %1946 = vmatprep.subr.mxu0 0.0
  %1947 = vmatpush1.msra.mxu0 0.0
  %1948 = vmatprep.subr.mxu0 0.0
  %1949 = vmatpush1.msra.mxu0 0.0
  %1950 = vmatprep.subr.mxu0 0.0
  %1951 = vmatpush1.msra.mxu0 0.0
  %1952 = vmatprep.subr.mxu0 0.0
  %1953 = vmatpush1.msra.mxu0 0.0
  %1954 = vmatprep.subr.mxu0 0.0
  %1955 = vmatpush1.msra.mxu0 0.0
  %1956 = vmatprep.subr.mxu0 0.0
  %1957 = vmatpush1.msra.mxu0 0.0
  %1958 = vmatprep.subr.mxu0 0.0
  %1959 = vmatpush1.msra.mxu0 0.0
  %1960 = vmatprep.subr.mxu0 0.0
  %1961 = vmatpush1.msra.mxu0 0.0
  %1962 = vmatprep.mubr.f32.mxu0 0.0
  %1963 = vmatmul.mubr.f32.gmra.mrb[0].mxu0 %v1896
  %v1964 = vpop.f32.mrb[0].mxu0
  %v1965 = vadd.f32 0.0, %v1964
  %v1966 = vpop.f32.mrb[0].mxu0
  %1967 = vdwg.mxu0
  %v1968 = vadd.f32 %v1873, %v1965
  %v1969 = vld [vmem:[#allocation3 + $0x9] sm:$0x1]
  %v1970 = vld [vmem:[#allocation3 + $0x29] sm:$0x1]
  %s1971 = scalar_lea.vmem %s5, 1152
  %v1972 = vld [vmem:[%s1971] sm:$0xff]
  %v1973 = vld [vmem:[%s1971 + $0x8] sm:$0xff]
  %v1974 = vld [vmem:[%s1971 + $0x10] sm:$0xff]
  %v1975 = vld [vmem:[%s1971 + $0x18] sm:$0xff]
  %v1976 = vld [vmem:[%s1971 + $0x20] sm:$0xff]
  %v1977 = vld [vmem:[%s1971 + $0x28] sm:$0xff]
  %v1978 = vld [vmem:[%s1971 + $0x30] sm:$0xff]
  %v1979 = vld [vmem:[%s1971 + $0x38] sm:$0xff]
  %v1980 = vld [vmem:[%s1971 + $0x40] sm:$0xff]
  %v1981 = vld [vmem:[%s1971 + $0x48] sm:$0xff]
  %v1982 = vld [vmem:[%s1971 + $0x50] sm:$0xff]
  %v1983 = vld [vmem:[%s1971 + $0x58] sm:$0xff]
  %v1984 = vld [vmem:[%s1971 + $0x60] sm:$0xff]
  %v1985 = vld [vmem:[%s1971 + $0x68] sm:$0xff]
  %v1986 = vld [vmem:[%s1971 + $0x70] sm:$0xff]
  %v1987 = vld [vmem:[%s1971 + $0x78] sm:$0xff]
  %v1990 = vrot.slane %v1970, 7
  %v1991 = vsel %vm1156, %v1990, %v1969
  %1993 = vmatprep.subr.mxu0 0.0
  %1994 = vmatpush1.msra.mxu0 %v1972
  %1995 = vmatprep.subr.mxu0 0.0
  %1996 = vmatpush1.msra.mxu0 %v1973
  %1997 = vmatprep.subr.mxu0 0.0
  %1998 = vmatpush1.msra.mxu0 %v1974
  %1999 = vmatprep.subr.mxu0 0.0
  %2000 = vmatpush1.msra.mxu0 %v1975
  %2001 = vmatprep.subr.mxu0 0.0
  %2002 = vmatpush1.msra.mxu0 %v1976
  %2003 = vmatprep.subr.mxu0 0.0
  %2004 = vmatpush1.msra.mxu0 %v1977
  %2005 = vmatprep.subr.mxu0 0.0
  %2006 = vmatpush1.msra.mxu0 %v1978
  %2007 = vmatprep.subr.mxu0 0.0
  %2008 = vmatpush1.msra.mxu0 %v1979
  %2009 = vmatprep.subr.mxu0 0.0
  %2010 = vmatpush1.msra.mxu0 %v1980
  %2011 = vmatprep.subr.mxu0 0.0
  %2012 = vmatpush1.msra.mxu0 %v1981
  %2013 = vmatprep.subr.mxu0 0.0
  %2014 = vmatpush1.msra.mxu0 %v1982
  %2015 = vmatprep.subr.mxu0 0.0
  %2016 = vmatpush1.msra.mxu0 %v1983
  %2017 = vmatprep.subr.mxu0 0.0
  %2018 = vmatpush1.msra.mxu0 %v1984
  %2019 = vmatprep.subr.mxu0 0.0
  %2020 = vmatpush1.msra.mxu0 %v1985
  %2021 = vmatprep.subr.mxu0 0.0
  %2022 = vmatpush1.msra.mxu0 %v1986
  %2023 = vmatprep.subr.mxu0 0.0
  %2024 = vmatpush1.msra.mxu0 %v1987
  %2025 = vmatprep.subr.mxu0 0.0
  %2026 = vmatpush1.msra.mxu0 0.0
  %2027 = vmatprep.subr.mxu0 0.0
  %2028 = vmatpush1.msra.mxu0 0.0
  %2029 = vmatprep.subr.mxu0 0.0
  %2030 = vmatpush1.msra.mxu0 0.0
  %2031 = vmatprep.subr.mxu0 0.0
  %2032 = vmatpush1.msra.mxu0 0.0
  %2033 = vmatprep.subr.mxu0 0.0
  %2034 = vmatpush1.msra.mxu0 0.0
  %2035 = vmatprep.subr.mxu0 0.0
  %2036 = vmatpush1.msra.mxu0 0.0
  %2037 = vmatprep.subr.mxu0 0.0
  %2038 = vmatpush1.msra.mxu0 0.0
  %2039 = vmatprep.subr.mxu0 0.0
  %2040 = vmatpush1.msra.mxu0 0.0
  %2041 = vmatprep.subr.mxu0 0.0
  %2042 = vmatpush1.msra.mxu0 0.0
  %2043 = vmatprep.subr.mxu0 0.0
  %2044 = vmatpush1.msra.mxu0 0.0
  %2045 = vmatprep.subr.mxu0 0.0
  %2046 = vmatpush1.msra.mxu0 0.0
  %2047 = vmatprep.subr.mxu0 0.0
  %2048 = vmatpush1.msra.mxu0 0.0
  %2049 = vmatprep.subr.mxu0 0.0
  %2050 = vmatpush1.msra.mxu0 0.0
  %2051 = vmatprep.subr.mxu0 0.0
  %2052 = vmatpush1.msra.mxu0 0.0
  %2053 = vmatprep.subr.mxu0 0.0
  %2054 = vmatpush1.msra.mxu0 0.0
  %2055 = vmatprep.subr.mxu0 0.0
  %2056 = vmatpush1.msra.mxu0 0.0
  %2057 = vmatprep.mubr.f32.mxu0 0.0
  %2058 = vmatmul.mubr.f32.gmra.mrb[0].mxu0 %v1991
  %v2059 = vpop.f32.mrb[0].mxu0
  %v2060 = vadd.f32 0.0, %v2059
  %v2061 = vpop.f32.mrb[0].mxu0
  %2062 = vdwg.mxu0
  %v2063 = vadd.f32 %v1968, %v2060
  %v2064 = vld [vmem:[#allocation3 + $0xa] sm:$0x1]
  %v2065 = vld [vmem:[#allocation3 + $0x2a] sm:$0x1]
  %s2066 = scalar_lea.vmem %s5, 1280
  %v2067 = vld [vmem:[%s2066] sm:$0xff]
  %v2068 = vld [vmem:[%s2066 + $0x8] sm:$0xff]
  %v2069 = vld [vmem:[%s2066 + $0x10] sm:$0xff]
  %v2070 = vld [vmem:[%s2066 + $0x18] sm:$0xff]
  %v2071 = vld [vmem:[%s2066 + $0x20] sm:$0xff]
  %v2072 = vld [vmem:[%s2066 + $0x28] sm:$0xff]
  %v2073 = vld [vmem:[%s2066 + $0x30] sm:$0xff]
  %v2074 = vld [vmem:[%s2066 + $0x38] sm:$0xff]
  %v2075 = vld [vmem:[%s2066 + $0x40] sm:$0xff]
  %v2076 = vld [vmem:[%s2066 + $0x48] sm:$0xff]
  %v2077 = vld [vmem:[%s2066 + $0x50] sm:$0xff]
  %v2078 = vld [vmem:[%s2066 + $0x58] sm:$0xff]
  %v2079 = vld [vmem:[%s2066 + $0x60] sm:$0xff]
  %v2080 = vld [vmem:[%s2066 + $0x68] sm:$0xff]
  %v2081 = vld [vmem:[%s2066 + $0x70] sm:$0xff]
  %v2082 = vld [vmem:[%s2066 + $0x78] sm:$0xff]
  %v2085 = vrot.slane %v2065, 7
  %v2086 = vsel %vm1156, %v2085, %v2064
  %2088 = vmatprep.subr.mxu0 0.0
  %2089 = vmatpush1.msra.mxu0 %v2067
  %2090 = vmatprep.subr.mxu0 0.0
  %2091 = vmatpush1.msra.mxu0 %v2068
  %2092 = vmatprep.subr.mxu0 0.0
  %2093 = vmatpush1.msra.mxu0 %v2069
  %2094 = vmatprep.subr.mxu0 0.0
  %2095 = vmatpush1.msra.mxu0 %v2070
  %2096 = vmatprep.subr.mxu0 0.0
  %2097 = vmatpush1.msra.mxu0 %v2071
  %2098 = vmatprep.subr.mxu0 0.0
  %2099 = vmatpush1.msra.mxu0 %v2072
  %2100 = vmatprep.subr.mxu0 0.0
  %2101 = vmatpush1.msra.mxu0 %v2073
  %2102 = vmatprep.subr.mxu0 0.0
  %2103 = vmatpush1.msra.mxu0 %v2074
  %2104 = vmatprep.subr.mxu0 0.0
  %2105 = vmatpush1.msra.mxu0 %v2075
  %2106 = vmatprep.subr.mxu0 0.0
  %2107 = vmatpush1.msra.mxu0 %v2076
  %2108 = vmatprep.subr.mxu0 0.0
  %2109 = vmatpush1.msra.mxu0 %v2077
  %2110 = vmatprep.subr.mxu0 0.0
  %2111 = vmatpush1.msra.mxu0 %v2078
  %2112 = vmatprep.subr.mxu0 0.0
  %2113 = vmatpush1.msra.mxu0 %v2079
  %2114 = vmatprep.subr.mxu0 0.0
  %2115 = vmatpush1.msra.mxu0 %v2080
  %2116 = vmatprep.subr.mxu0 0.0
  %2117 = vmatpush1.msra.mxu0 %v2081
  %2118 = vmatprep.subr.mxu0 0.0
  %2119 = vmatpush1.msra.mxu0 %v2082
  %2120 = vmatprep.subr.mxu0 0.0
  %2121 = vmatpush1.msra.mxu0 0.0
  %2122 = vmatprep.subr.mxu0 0.0
  %2123 = vmatpush1.msra.mxu0 0.0
  %2124 = vmatprep.subr.mxu0 0.0
  %2125 = vmatpush1.msra.mxu0 0.0
  %2126 = vmatprep.subr.mxu0 0.0
  %2127 = vmatpush1.msra.mxu0 0.0
  %2128 = vmatprep.subr.mxu0 0.0
  %2129 = vmatpush1.msra.mxu0 0.0
  %2130 = vmatprep.subr.mxu0 0.0
  %2131 = vmatpush1.msra.mxu0 0.0
  %2132 = vmatprep.subr.mxu0 0.0
  %2133 = vmatpush1.msra.mxu0 0.0
  %2134 = vmatprep.subr.mxu0 0.0
  %2135 = vmatpush1.msra.mxu0 0.0
  %2136 = vmatprep.subr.mxu0 0.0
  %2137 = vmatpush1.msra.mxu0 0.0
  %2138 = vmatprep.subr.mxu0 0.0
  %2139 = vmatpush1.msra.mxu0 0.0
  %2140 = vmatprep.subr.mxu0 0.0
  %2141 = vmatpush1.msra.mxu0 0.0
  %2142 = vmatprep.subr.mxu0 0.0
  %2143 = vmatpush1.msra.mxu0 0.0
  %2144 = vmatprep.subr.mxu0 0.0
  %2145 = vmatpush1.msra.mxu0 0.0
  %2146 = vmatprep.subr.mxu0 0.0
  %2147 = vmatpush1.msra.mxu0 0.0
  %2148 = vmatprep.subr.mxu0 0.0
  %2149 = vmatpush1.msra.mxu0 0.0
  %2150 = vmatprep.subr.mxu0 0.0
  %2151 = vmatpush1.msra.mxu0 0.0
  %2152 = vmatprep.mubr.f32.mxu0 0.0
  %2153 = vmatmul.mubr.f32.gmra.mrb[0].mxu0 %v2086
  %v2154 = vpop.f32.mrb[0].mxu0
  %v2155 = vadd.f32 0.0, %v2154
  %v2156 = vpop.f32.mrb[0].mxu0
  %2157 = vdwg.mxu0
  %v2158 = vadd.f32 %v2063, %v2155
  %v2159 = vld [vmem:[#allocation3 + $0xb] sm:$0x1]
  %v2160 = vld [vmem:[#allocation3 + $0x2b] sm:$0x1]
  %s2161 = scalar_lea.vmem %s5, 1408
  %v2162 = vld [vmem:[%s2161] sm:$0xff]
  %v2163 = vld [vmem:[%s2161 + $0x8] sm:$0xff]
  %v2164 = vld [vmem:[%s2161 + $0x10] sm:$0xff]
  %v2165 = vld [vmem:[%s2161 + $0x18] sm:$0xff]
  %v2166 = vld [vmem:[%s2161 + $0x20] sm:$0xff]
  %v2167 = vld [vmem:[%s2161 + $0x28] sm:$0xff]
  %v2168 = vld [vmem:[%s2161 + $0x30] sm:$0xff]
  %v2169 = vld [vmem:[%s2161 + $0x38] sm:$0xff]
  %v2170 = vld [vmem:[%s2161 + $0x40] sm:$0xff]
  %v2171 = vld [vmem:[%s2161 + $0x48] sm:$0xff]
  %v2172 = vld [vmem:[%s2161 + $0x50] sm:$0xff]
  %v2173 = vld [vmem:[%s2161 + $0x58] sm:$0xff]
  %v2174 = vld [vmem:[%s2161 + $0x60] sm:$0xff]
  %v2175 = vld [vmem:[%s2161 + $0x68] sm:$0xff]
  %v2176 = vld [vmem:[%s2161 + $0x70] sm:$0xff]
  %v2177 = vld [vmem:[%s2161 + $0x78] sm:$0xff]
  %v2180 = vrot.slane %v2160, 7
  %v2181 = vsel %vm1156, %v2180, %v2159
  %2183 = vmatprep.subr.mxu0 0.0
  %2184 = vmatpush1.msra.mxu0 %v2162
  %2185 = vmatprep.subr.mxu0 0.0
  %2186 = vmatpush1.msra.mxu0 %v2163
  %2187 = vmatprep.subr.mxu0 0.0
  %2188 = vmatpush1.msra.mxu0 %v2164
  %2189 = vmatprep.subr.mxu0 0.0
  %2190 = vmatpush1.msra.mxu0 %v2165
  %2191 = vmatprep.subr.mxu0 0.0
  %2192 = vmatpush1.msra.mxu0 %v2166
  %2193 = vmatprep.subr.mxu0 0.0
  %2194 = vmatpush1.msra.mxu0 %v2167
  %2195 = vmatprep.subr.mxu0 0.0
  %2196 = vmatpush1.msra.mxu0 %v2168
  %2197 = vmatprep.subr.mxu0 0.0
  %2198 = vmatpush1.msra.mxu0 %v2169
  %2199 = vmatprep.subr.mxu0 0.0
  %2200 = vmatpush1.msra.mxu0 %v2170
  %2201 = vmatprep.subr.mxu0 0.0
  %2202 = vmatpush1.msra.mxu0 %v2171
  %2203 = vmatprep.subr.mxu0 0.0
  %2204 = vmatpush1.msra.mxu0 %v2172
  %2205 = vmatprep.subr.mxu0 0.0
  %2206 = vmatpush1.msra.mxu0 %v2173
  %2207 = vmatprep.subr.mxu0 0.0
  %2208 = vmatpush1.msra.mxu0 %v2174
  %2209 = vmatprep.subr.mxu0 0.0
  %2210 = vmatpush1.msra.mxu0 %v2175
  %2211 = vmatprep.subr.mxu0 0.0
  %2212 = vmatpush1.msra.mxu0 %v2176
  %2213 = vmatprep.subr.mxu0 0.0
  %2214 = vmatpush1.msra.mxu0 %v2177
  %2215 = vmatprep.subr.mxu0 0.0
  %2216 = vmatpush1.msra.mxu0 0.0
  %2217 = vmatprep.subr.mxu0 0.0
  %2218 = vmatpush1.msra.mxu0 0.0
  %2219 = vmatprep.subr.mxu0 0.0
  %2220 = vmatpush1.msra.mxu0 0.0
  %2221 = vmatprep.subr.mxu0 0.0
  %2222 = vmatpush1.msra.mxu0 0.0
  %2223 = vmatprep.subr.mxu0 0.0
  %2224 = vmatpush1.msra.mxu0 0.0
  %2225 = vmatprep.subr.mxu0 0.0
  %2226 = vmatpush1.msra.mxu0 0.0
  %2227 = vmatprep.subr.mxu0 0.0
  %2228 = vmatpush1.msra.mxu0 0.0
  %2229 = vmatprep.subr.mxu0 0.0
  %2230 = vmatpush1.msra.mxu0 0.0
  %2231 = vmatprep.subr.mxu0 0.0
  %2232 = vmatpush1.msra.mxu0 0.0
  %2233 = vmatprep.subr.mxu0 0.0
  %2234 = vmatpush1.msra.mxu0 0.0
  %2235 = vmatprep.subr.mxu0 0.0
  %2236 = vmatpush1.msra.mxu0 0.0
  %2237 = vmatprep.subr.mxu0 0.0
  %2238 = vmatpush1.msra.mxu0 0.0
  %2239 = vmatprep.subr.mxu0 0.0
  %2240 = vmatpush1.msra.mxu0 0.0
  %2241 = vmatprep.subr.mxu0 0.0
  %2242 = vmatpush1.msra.mxu0 0.0
  %2243 = vmatprep.subr.mxu0 0.0
  %2244 = vmatpush1.msra.mxu0 0.0
  %2245 = vmatprep.subr.mxu0 0.0
  %2246 = vmatpush1.msra.mxu0 0.0
  %2247 = vmatprep.mubr.f32.mxu0 0.0
  %2248 = vmatmul.mubr.f32.gmra.mrb[0].mxu0 %v2181
  %v2249 = vpop.f32.mrb[0].mxu0
  %v2250 = vadd.f32 0.0, %v2249
  %v2251 = vpop.f32.mrb[0].mxu0
  %2252 = vdwg.mxu0
  %v2253 = vadd.f32 %v2158, %v2250
  %v2254 = vld [vmem:[#allocation3 + $0xc] sm:$0x1]
  %v2255 = vld [vmem:[#allocation3 + $0x2c] sm:$0x1]
  %s2256 = scalar_lea.vmem %s5, 1536
  %v2257 = vld [vmem:[%s2256] sm:$0xff]
  %v2258 = vld [vmem:[%s2256 + $0x8] sm:$0xff]
  %v2259 = vld [vmem:[%s2256 + $0x10] sm:$0xff]
  %v2260 = vld [vmem:[%s2256 + $0x18] sm:$0xff]
  %v2261 = vld [vmem:[%s2256 + $0x20] sm:$0xff]
  %v2262 = vld [vmem:[%s2256 + $0x28] sm:$0xff]
  %v2263 = vld [vmem:[%s2256 + $0x30] sm:$0xff]
  %v2264 = vld [vmem:[%s2256 + $0x38] sm:$0xff]
  %v2265 = vld [vmem:[%s2256 + $0x40] sm:$0xff]
  %v2266 = vld [vmem:[%s2256 + $0x48] sm:$0xff]
  %v2267 = vld [vmem:[%s2256 + $0x50] sm:$0xff]
  %v2268 = vld [vmem:[%s2256 + $0x58] sm:$0xff]
  %v2269 = vld [vmem:[%s2256 + $0x60] sm:$0xff]
  %v2270 = vld [vmem:[%s2256 + $0x68] sm:$0xff]
  %v2271 = vld [vmem:[%s2256 + $0x70] sm:$0xff]
  %v2272 = vld [vmem:[%s2256 + $0x78] sm:$0xff]
  %v2275 = vrot.slane %v2255, 7
  %v2276 = vsel %vm1156, %v2275, %v2254
  %2278 = vmatprep.subr.mxu0 0.0
  %2279 = vmatpush1.msra.mxu0 %v2257
  %2280 = vmatprep.subr.mxu0 0.0
  %2281 = vmatpush1.msra.mxu0 %v2258
  %2282 = vmatprep.subr.mxu0 0.0
  %2283 = vmatpush1.msra.mxu0 %v2259
  %2284 = vmatprep.subr.mxu0 0.0
  %2285 = vmatpush1.msra.mxu0 %v2260
  %2286 = vmatprep.subr.mxu0 0.0
  %2287 = vmatpush1.msra.mxu0 %v2261
  %2288 = vmatprep.subr.mxu0 0.0
  %2289 = vmatpush1.msra.mxu0 %v2262
  %2290 = vmatprep.subr.mxu0 0.0
  %2291 = vmatpush1.msra.mxu0 %v2263
  %2292 = vmatprep.subr.mxu0 0.0
  %2293 = vmatpush1.msra.mxu0 %v2264
  %2294 = vmatprep.subr.mxu0 0.0
  %2295 = vmatpush1.msra.mxu0 %v2265
  %2296 = vmatprep.subr.mxu0 0.0
  %2297 = vmatpush1.msra.mxu0 %v2266
  %2298 = vmatprep.subr.mxu0 0.0
  %2299 = vmatpush1.msra.mxu0 %v2267
  %2300 = vmatprep.subr.mxu0 0.0
  %2301 = vmatpush1.msra.mxu0 %v2268
  %2302 = vmatprep.subr.mxu0 0.0
  %2303 = vmatpush1.msra.mxu0 %v2269
  %2304 = vmatprep.subr.mxu0 0.0
  %2305 = vmatpush1.msra.mxu0 %v2270
  %2306 = vmatprep.subr.mxu0 0.0
  %2307 = vmatpush1.msra.mxu0 %v2271
  %2308 = vmatprep.subr.mxu0 0.0
  %2309 = vmatpush1.msra.mxu0 %v2272
  %2310 = vmatprep.subr.mxu0 0.0
  %2311 = vmatpush1.msra.mxu0 0.0
  %2312 = vmatprep.subr.mxu0 0.0
  %2313 = vmatpush1.msra.mxu0 0.0
  %2314 = vmatprep.subr.mxu0 0.0
  %2315 = vmatpush1.msra.mxu0 0.0
  %2316 = vmatprep.subr.mxu0 0.0
  %2317 = vmatpush1.msra.mxu0 0.0
  %2318 = vmatprep.subr.mxu0 0.0
  %2319 = vmatpush1.msra.mxu0 0.0
  %2320 = vmatprep.subr.mxu0 0.0
  %2321 = vmatpush1.msra.mxu0 0.0
  %2322 = vmatprep.subr.mxu0 0.0
  %2323 = vmatpush1.msra.mxu0 0.0
  %2324 = vmatprep.subr.mxu0 0.0
  %2325 = vmatpush1.msra.mxu0 0.0
  %2326 = vmatprep.subr.mxu0 0.0
  %2327 = vmatpush1.msra.mxu0 0.0
  %2328 = vmatprep.subr.mxu0 0.0
  %2329 = vmatpush1.msra.mxu0 0.0
  %2330 = vmatprep.subr.mxu0 0.0
  %2331 = vmatpush1.msra.mxu0 0.0
  %2332 = vmatprep.subr.mxu0 0.0
  %2333 = vmatpush1.msra.mxu0 0.0
  %2334 = vmatprep.subr.mxu0 0.0
  %2335 = vmatpush1.msra.mxu0 0.0
  %2336 = vmatprep.subr.mxu0 0.0
  %2337 = vmatpush1.msra.mxu0 0.0
  %2338 = vmatprep.subr.mxu0 0.0
  %2339 = vmatpush1.msra.mxu0 0.0
  %2340 = vmatprep.subr.mxu0 0.0
  %2341 = vmatpush1.msra.mxu0 0.0
  %2342 = vmatprep.mubr.f32.mxu0 0.0
  %2343 = vmatmul.mubr.f32.gmra.mrb[0].mxu0 %v2276
  %v2344 = vpop.f32.mrb[0].mxu0
  %v2345 = vadd.f32 0.0, %v2344
  %v2346 = vpop.f32.mrb[0].mxu0
  %2347 = vdwg.mxu0
  %v2348 = vadd.f32 %v2253, %v2345
  %v2349 = vld [vmem:[#allocation3 + $0xd] sm:$0x1]
  %v2350 = vld [vmem:[#allocation3 + $0x2d] sm:$0x1]
  %s2351 = scalar_lea.vmem %s5, 1664
  %v2352 = vld [vmem:[%s2351] sm:$0xff]
  %v2353 = vld [vmem:[%s2351 + $0x8] sm:$0xff]
  %v2354 = vld [vmem:[%s2351 + $0x10] sm:$0xff]
  %v2355 = vld [vmem:[%s2351 + $0x18] sm:$0xff]
  %v2356 = vld [vmem:[%s2351 + $0x20] sm:$0xff]
  %v2357 = vld [vmem:[%s2351 + $0x28] sm:$0xff]
  %v2358 = vld [vmem:[%s2351 + $0x30] sm:$0xff]
  %v2359 = vld [vmem:[%s2351 + $0x38] sm:$0xff]
  %v2360 = vld [vmem:[%s2351 + $0x40] sm:$0xff]
  %v2361 = vld [vmem:[%s2351 + $0x48] sm:$0xff]
  %v2362 = vld [vmem:[%s2351 + $0x50] sm:$0xff]
  %v2363 = vld [vmem:[%s2351 + $0x58] sm:$0xff]
  %v2364 = vld [vmem:[%s2351 + $0x60] sm:$0xff]
  %v2365 = vld [vmem:[%s2351 + $0x68] sm:$0xff]
  %v2366 = vld [vmem:[%s2351 + $0x70] sm:$0xff]
  %v2367 = vld [vmem:[%s2351 + $0x78] sm:$0xff]
  %v2370 = vrot.slane %v2350, 7
  %v2371 = vsel %vm1156, %v2370, %v2349
  %2373 = vmatprep.subr.mxu0 0.0
  %2374 = vmatpush1.msra.mxu0 %v2352
  %2375 = vmatprep.subr.mxu0 0.0
  %2376 = vmatpush1.msra.mxu0 %v2353
  %2377 = vmatprep.subr.mxu0 0.0
  %2378 = vmatpush1.msra.mxu0 %v2354
  %2379 = vmatprep.subr.mxu0 0.0
  %2380 = vmatpush1.msra.mxu0 %v2355
  %2381 = vmatprep.subr.mxu0 0.0
  %2382 = vmatpush1.msra.mxu0 %v2356
  %2383 = vmatprep.subr.mxu0 0.0
  %2384 = vmatpush1.msra.mxu0 %v2357
  %2385 = vmatprep.subr.mxu0 0.0
  %2386 = vmatpush1.msra.mxu0 %v2358
  %2387 = vmatprep.subr.mxu0 0.0
  %2388 = vmatpush1.msra.mxu0 %v2359
  %2389 = vmatprep.subr.mxu0 0.0
  %2390 = vmatpush1.msra.mxu0 %v2360
  %2391 = vmatprep.subr.mxu0 0.0
  %2392 = vmatpush1.msra.mxu0 %v2361
  %2393 = vmatprep.subr.mxu0 0.0
  %2394 = vmatpush1.msra.mxu0 %v2362
  %2395 = vmatprep.subr.mxu0 0.0
  %2396 = vmatpush1.msra.mxu0 %v2363
  %2397 = vmatprep.subr.mxu0 0.0
  %2398 = vmatpush1.msra.mxu0 %v2364
  %2399 = vmatprep.subr.mxu0 0.0
  %2400 = vmatpush1.msra.mxu0 %v2365
  %2401 = vmatprep.subr.mxu0 0.0
  %2402 = vmatpush1.msra.mxu0 %v2366
  %2403 = vmatprep.subr.mxu0 0.0
  %2404 = vmatpush1.msra.mxu0 %v2367
  %2405 = vmatprep.subr.mxu0 0.0
  %2406 = vmatpush1.msra.mxu0 0.0
  %2407 = vmatprep.subr.mxu0 0.0
  %2408 = vmatpush1.msra.mxu0 0.0
  %2409 = vmatprep.subr.mxu0 0.0
  %2410 = vmatpush1.msra.mxu0 0.0
  %2411 = vmatprep.subr.mxu0 0.0
  %2412 = vmatpush1.msra.mxu0 0.0
  %2413 = vmatprep.subr.mxu0 0.0
  %2414 = vmatpush1.msra.mxu0 0.0
  %2415 = vmatprep.subr.mxu0 0.0
  %2416 = vmatpush1.msra.mxu0 0.0
  %2417 = vmatprep.subr.mxu0 0.0
  %2418 = vmatpush1.msra.mxu0 0.0
  %2419 = vmatprep.subr.mxu0 0.0
  %2420 = vmatpush1.msra.mxu0 0.0
  %2421 = vmatprep.subr.mxu0 0.0
  %2422 = vmatpush1.msra.mxu0 0.0
  %2423 = vmatprep.subr.mxu0 0.0
  %2424 = vmatpush1.msra.mxu0 0.0
  %2425 = vmatprep.subr.mxu0 0.0
  %2426 = vmatpush1.msra.mxu0 0.0
  %2427 = vmatprep.subr.mxu0 0.0
  %2428 = vmatpush1.msra.mxu0 0.0
  %2429 = vmatprep.subr.mxu0 0.0
  %2430 = vmatpush1.msra.mxu0 0.0
  %2431 = vmatprep.subr.mxu0 0.0
  %2432 = vmatpush1.msra.mxu0 0.0
  %2433 = vmatprep.subr.mxu0 0.0
  %2434 = vmatpush1.msra.mxu0 0.0
  %2435 = vmatprep.subr.mxu0 0.0
  %2436 = vmatpush1.msra.mxu0 0.0
  %2437 = vmatprep.mubr.f32.mxu0 0.0
  %2438 = vmatmul.mubr.f32.gmra.mrb[0].mxu0 %v2371
  %v2439 = vpop.f32.mrb[0].mxu0
  %v2440 = vadd.f32 0.0, %v2439
  %v2441 = vpop.f32.mrb[0].mxu0
  %2442 = vdwg.mxu0
  %v2443 = vadd.f32 %v2348, %v2440
  %v2444 = vld [vmem:[#allocation3 + $0xe] sm:$0x1]
  %v2445 = vld [vmem:[#allocation3 + $0x2e] sm:$0x1]
  %s2446 = scalar_lea.vmem %s5, 1792
  %v2447 = vld [vmem:[%s2446] sm:$0xff]
  %v2448 = vld [vmem:[%s2446 + $0x8] sm:$0xff]
  %v2449 = vld [vmem:[%s2446 + $0x10] sm:$0xff]
  %v2450 = vld [vmem:[%s2446 + $0x18] sm:$0xff]
  %v2451 = vld [vmem:[%s2446 + $0x20] sm:$0xff]
  %v2452 = vld [vmem:[%s2446 + $0x28] sm:$0xff]
  %v2453 = vld [vmem:[%s2446 + $0x30] sm:$0xff]
  %v2454 = vld [vmem:[%s2446 + $0x38] sm:$0xff]
  %v2455 = vld [vmem:[%s2446 + $0x40] sm:$0xff]
  %v2456 = vld [vmem:[%s2446 + $0x48] sm:$0xff]
  %v2457 = vld [vmem:[%s2446 + $0x50] sm:$0xff]
  %v2458 = vld [vmem:[%s2446 + $0x58] sm:$0xff]
  %v2459 = vld [vmem:[%s2446 + $0x60] sm:$0xff]
  %v2460 = vld [vmem:[%s2446 + $0x68] sm:$0xff]
  %v2461 = vld [vmem:[%s2446 + $0x70] sm:$0xff]
  %v2462 = vld [vmem:[%s2446 + $0x78] sm:$0xff]
  %v2465 = vrot.slane %v2445, 7
  %v2466 = vsel %vm1156, %v2465, %v2444
  %2468 = vmatprep.subr.mxu0 0.0
  %2469 = vmatpush1.msra.mxu0 %v2447
  %2470 = vmatprep.subr.mxu0 0.0
  %2471 = vmatpush1.msra.mxu0 %v2448
  %2472 = vmatprep.subr.mxu0 0.0
  %2473 = vmatpush1.msra.mxu0 %v2449
  %2474 = vmatprep.subr.mxu0 0.0
  %2475 = vmatpush1.msra.mxu0 %v2450
  %2476 = vmatprep.subr.mxu0 0.0
  %2477 = vmatpush1.msra.mxu0 %v2451
  %2478 = vmatprep.subr.mxu0 0.0
  %2479 = vmatpush1.msra.mxu0 %v2452
  %2480 = vmatprep.subr.mxu0 0.0
  %2481 = vmatpush1.msra.mxu0 %v2453
  %2482 = vmatprep.subr.mxu0 0.0
  %2483 = vmatpush1.msra.mxu0 %v2454
  %2484 = vmatprep.subr.mxu0 0.0
  %2485 = vmatpush1.msra.mxu0 %v2455
  %2486 = vmatprep.subr.mxu0 0.0
  %2487 = vmatpush1.msra.mxu0 %v2456
  %2488 = vmatprep.subr.mxu0 0.0
  %2489 = vmatpush1.msra.mxu0 %v2457
  %2490 = vmatprep.subr.mxu0 0.0
  %2491 = vmatpush1.msra.mxu0 %v2458
  %2492 = vmatprep.subr.mxu0 0.0
  %2493 = vmatpush1.msra.mxu0 %v2459
  %2494 = vmatprep.subr.mxu0 0.0
  %2495 = vmatpush1.msra.mxu0 %v2460
  %2496 = vmatprep.subr.mxu0 0.0
  %2497 = vmatpush1.msra.mxu0 %v2461
  %2498 = vmatprep.subr.mxu0 0.0
  %2499 = vmatpush1.msra.mxu0 %v2462
  %2500 = vmatprep.subr.mxu0 0.0
  %2501 = vmatpush1.msra.mxu0 0.0
  %2502 = vmatprep.subr.mxu0 0.0
  %2503 = vmatpush1.msra.mxu0 0.0
  %2504 = vmatprep.subr.mxu0 0.0
  %2505 = vmatpush1.msra.mxu0 0.0
  %2506 = vmatprep.subr.mxu0 0.0
  %2507 = vmatpush1.msra.mxu0 0.0
  %2508 = vmatprep.subr.mxu0 0.0
  %2509 = vmatpush1.msra.mxu0 0.0
  %2510 = vmatprep.subr.mxu0 0.0
  %2511 = vmatpush1.msra.mxu0 0.0
  %2512 = vmatprep.subr.mxu0 0.0
  %2513 = vmatpush1.msra.mxu0 0.0
  %2514 = vmatprep.subr.mxu0 0.0
  %2515 = vmatpush1.msra.mxu0 0.0
  %2516 = vmatprep.subr.mxu0 0.0
  %2517 = vmatpush1.msra.mxu0 0.0
  %2518 = vmatprep.subr.mxu0 0.0
  %2519 = vmatpush1.msra.mxu0 0.0
  %2520 = vmatprep.subr.mxu0 0.0
  %2521 = vmatpush1.msra.mxu0 0.0
  %2522 = vmatprep.subr.mxu0 0.0
  %2523 = vmatpush1.msra.mxu0 0.0
  %2524 = vmatprep.subr.mxu0 0.0
  %2525 = vmatpush1.msra.mxu0 0.0
  %2526 = vmatprep.subr.mxu0 0.0
  %2527 = vmatpush1.msra.mxu0 0.0
  %2528 = vmatprep.subr.mxu0 0.0
  %2529 = vmatpush1.msra.mxu0 0.0
  %2530 = vmatprep.subr.mxu0 0.0
  %2531 = vmatpush1.msra.mxu0 0.0
  %2532 = vmatprep.mubr.f32.mxu0 0.0
  %2533 = vmatmul.mubr.f32.gmra.mrb[0].mxu0 %v2466
  %v2534 = vpop.f32.mrb[0].mxu0
  %v2535 = vadd.f32 0.0, %v2534
  %v2536 = vpop.f32.mrb[0].mxu0
  %2537 = vdwg.mxu0
  %v2538 = vadd.f32 %v2443, %v2535
  %v2539 = vld [vmem:[#allocation3 + $0xf] sm:$0x1]
  %v2540 = vld [vmem:[#allocation3 + $0x2f] sm:$0x1]
  %s2541 = scalar_lea.vmem %s5, 1920
  %v2542 = vld [vmem:[%s2541] sm:$0xff]
  %v2543 = vld [vmem:[%s2541 + $0x8] sm:$0xff]
  %v2544 = vld [vmem:[%s2541 + $0x10] sm:$0xff]
  %v2545 = vld [vmem:[%s2541 + $0x18] sm:$0xff]
  %v2546 = vld [vmem:[%s2541 + $0x20] sm:$0xff]
  %v2547 = vld [vmem:[%s2541 + $0x28] sm:$0xff]
  %v2548 = vld [vmem:[%s2541 + $0x30] sm:$0xff]
  %v2549 = vld [vmem:[%s2541 + $0x38] sm:$0xff]
  %v2550 = vld [vmem:[%s2541 + $0x40] sm:$0xff]
  %v2551 = vld [vmem:[%s2541 + $0x48] sm:$0xff]
  %v2552 = vld [vmem:[%s2541 + $0x50] sm:$0xff]
  %v2553 = vld [vmem:[%s2541 + $0x58] sm:$0xff]
  %v2554 = vld [vmem:[%s2541 + $0x60] sm:$0xff]
  %v2555 = vld [vmem:[%s2541 + $0x68] sm:$0xff]
  %v2556 = vld [vmem:[%s2541 + $0x70] sm:$0xff]
  %v2557 = vld [vmem:[%s2541 + $0x78] sm:$0xff]
  %v2560 = vrot.slane %v2540, 7
  %v2561 = vsel %vm1156, %v2560, %v2539
  %2563 = vmatprep.subr.mxu0 0.0
  %2564 = vmatpush1.msra.mxu0 %v2542
  %2565 = vmatprep.subr.mxu0 0.0
  %2566 = vmatpush1.msra.mxu0 %v2543
  %2567 = vmatprep.subr.mxu0 0.0
  %2568 = vmatpush1.msra.mxu0 %v2544
  %2569 = vmatprep.subr.mxu0 0.0
  %2570 = vmatpush1.msra.mxu0 %v2545
  %2571 = vmatprep.subr.mxu0 0.0
  %2572 = vmatpush1.msra.mxu0 %v2546
  %2573 = vmatprep.subr.mxu0 0.0
  %2574 = vmatpush1.msra.mxu0 %v2547
  %2575 = vmatprep.subr.mxu0 0.0
  %2576 = vmatpush1.msra.mxu0 %v2548
  %2577 = vmatprep.subr.mxu0 0.0
  %2578 = vmatpush1.msra.mxu0 %v2549
  %2579 = vmatprep.subr.mxu0 0.0
  %2580 = vmatpush1.msra.mxu0 %v2550
  %2581 = vmatprep.subr.mxu0 0.0
  %2582 = vmatpush1.msra.mxu0 %v2551
  %2583 = vmatprep.subr.mxu0 0.0
  %2584 = vmatpush1.msra.mxu0 %v2552
  %2585 = vmatprep.subr.mxu0 0.0
  %2586 = vmatpush1.msra.mxu0 %v2553
  %2587 = vmatprep.subr.mxu0 0.0
  %2588 = vmatpush1.msra.mxu0 %v2554
  %2589 = vmatprep.subr.mxu0 0.0
  %2590 = vmatpush1.msra.mxu0 %v2555
  %2591 = vmatprep.subr.mxu0 0.0
  %2592 = vmatpush1.msra.mxu0 %v2556
  %2593 = vmatprep.subr.mxu0 0.0
  %2594 = vmatpush1.msra.mxu0 %v2557
  %2595 = vmatprep.subr.mxu0 0.0
  %2596 = vmatpush1.msra.mxu0 0.0
  %2597 = vmatprep.subr.mxu0 0.0
  %2598 = vmatpush1.msra.mxu0 0.0
  %2599 = vmatprep.subr.mxu0 0.0
  %2600 = vmatpush1.msra.mxu0 0.0
  %2601 = vmatprep.subr.mxu0 0.0
  %2602 = vmatpush1.msra.mxu0 0.0
  %2603 = vmatprep.subr.mxu0 0.0
  %2604 = vmatpush1.msra.mxu0 0.0
  %2605 = vmatprep.subr.mxu0 0.0
  %2606 = vmatpush1.msra.mxu0 0.0
  %2607 = vmatprep.subr.mxu0 0.0
  %2608 = vmatpush1.msra.mxu0 0.0
  %2609 = vmatprep.subr.mxu0 0.0
  %2610 = vmatpush1.msra.mxu0 0.0
  %2611 = vmatprep.subr.mxu0 0.0
  %2612 = vmatpush1.msra.mxu0 0.0
  %2613 = vmatprep.subr.mxu0 0.0
  %2614 = vmatpush1.msra.mxu0 0.0
  %2615 = vmatprep.subr.mxu0 0.0
  %2616 = vmatpush1.msra.mxu0 0.0
  %2617 = vmatprep.subr.mxu0 0.0
  %2618 = vmatpush1.msra.mxu0 0.0
  %2619 = vmatprep.subr.mxu0 0.0
  %2620 = vmatpush1.msra.mxu0 0.0
  %2621 = vmatprep.subr.mxu0 0.0
  %2622 = vmatpush1.msra.mxu0 0.0
  %2623 = vmatprep.subr.mxu0 0.0
  %2624 = vmatpush1.msra.mxu0 0.0
  %2625 = vmatprep.subr.mxu0 0.0
  %2626 = vmatpush1.msra.mxu0 0.0
  %2627 = vmatprep.mubr.f32.mxu0 0.0
  %2628 = vmatmul.mubr.f32.gmra.mrb[0].mxu0 %v2561
  %v2629 = vpop.f32.mrb[0].mxu0
  %v2630 = vadd.f32 0.0, %v2629
  %v2631 = vpop.f32.mrb[0].mxu0
  %2632 = vdwg.mxu0
  %v2633 = vadd.f32 %v2538, %v2630
  %v2634 = vld [vmem:[#allocation3 + $0x10] sm:$0x1]
  %v2635 = vld [vmem:[#allocation3 + $0x30] sm:$0x1]
  %s2636 = scalar_lea.vmem %s5, 2048
  %v2637 = vld [vmem:[%s2636] sm:$0xff]
  %v2638 = vld [vmem:[%s2636 + $0x8] sm:$0xff]
  %v2639 = vld [vmem:[%s2636 + $0x10] sm:$0xff]
  %v2640 = vld [vmem:[%s2636 + $0x18] sm:$0xff]
  %v2641 = vld [vmem:[%s2636 + $0x20] sm:$0xff]
  %v2642 = vld [vmem:[%s2636 + $0x28] sm:$0xff]
  %v2643 = vld [vmem:[%s2636 + $0x30] sm:$0xff]
  %v2644 = vld [vmem:[%s2636 + $0x38] sm:$0xff]
  %v2645 = vld [vmem:[%s2636 + $0x40] sm:$0xff]
  %v2646 = vld [vmem:[%s2636 + $0x48] sm:$0xff]
  %v2647 = vld [vmem:[%s2636 + $0x50] sm:$0xff]
  %v2648 = vld [vmem:[%s2636 + $0x58] sm:$0xff]
  %v2649 = vld [vmem:[%s2636 + $0x60] sm:$0xff]
  %v2650 = vld [vmem:[%s2636 + $0x68] sm:$0xff]
  %v2651 = vld [vmem:[%s2636 + $0x70] sm:$0xff]
  %v2652 = vld [vmem:[%s2636 + $0x78] sm:$0xff]
  %v2655 = vrot.slane %v2635, 7
  %v2656 = vsel %vm1156, %v2655, %v2634
  %2658 = vmatprep.subr.mxu0 0.0
  %2659 = vmatpush1.msra.mxu0 %v2637
  %2660 = vmatprep.subr.mxu0 0.0
  %2661 = vmatpush1.msra.mxu0 %v2638
  %2662 = vmatprep.subr.mxu0 0.0
  %2663 = vmatpush1.msra.mxu0 %v2639
  %2664 = vmatprep.subr.mxu0 0.0
  %2665 = vmatpush1.msra.mxu0 %v2640
  %2666 = vmatprep.subr.mxu0 0.0
  %2667 = vmatpush1.msra.mxu0 %v2641
  %2668 = vmatprep.subr.mxu0 0.0
  %2669 = vmatpush1.msra.mxu0 %v2642
  %2670 = vmatprep.subr.mxu0 0.0
  %2671 = vmatpush1.msra.mxu0 %v2643
  %2672 = vmatprep.subr.mxu0 0.0
  %2673 = vmatpush1.msra.mxu0 %v2644
  %2674 = vmatprep.subr.mxu0 0.0
  %2675 = vmatpush1.msra.mxu0 %v2645
  %2676 = vmatprep.subr.mxu0 0.0
  %2677 = vmatpush1.msra.mxu0 %v2646
  %2678 = vmatprep.subr.mxu0 0.0
  %2679 = vmatpush1.msra.mxu0 %v2647
  %2680 = vmatprep.subr.mxu0 0.0
  %2681 = vmatpush1.msra.mxu0 %v2648
  %2682 = vmatprep.subr.mxu0 0.0
  %2683 = vmatpush1.msra.mxu0 %v2649
  %2684 = vmatprep.subr.mxu0 0.0
  %2685 = vmatpush1.msra.mxu0 %v2650
  %2686 = vmatprep.subr.mxu0 0.0
  %2687 = vmatpush1.msra.mxu0 %v2651
  %2688 = vmatprep.subr.mxu0 0.0
  %2689 = vmatpush1.msra.mxu0 %v2652
  %2690 = vmatprep.subr.mxu0 0.0
  %2691 = vmatpush1.msra.mxu0 0.0
  %2692 = vmatprep.subr.mxu0 0.0
  %2693 = vmatpush1.msra.mxu0 0.0
  %2694 = vmatprep.subr.mxu0 0.0
  %2695 = vmatpush1.msra.mxu0 0.0
  %2696 = vmatprep.subr.mxu0 0.0
  %2697 = vmatpush1.msra.mxu0 0.0
  %2698 = vmatprep.subr.mxu0 0.0
  %2699 = vmatpush1.msra.mxu0 0.0
  %2700 = vmatprep.subr.mxu0 0.0
  %2701 = vmatpush1.msra.mxu0 0.0
  %2702 = vmatprep.subr.mxu0 0.0
  %2703 = vmatpush1.msra.mxu0 0.0
  %2704 = vmatprep.subr.mxu0 0.0
  %2705 = vmatpush1.msra.mxu0 0.0
  %2706 = vmatprep.subr.mxu0 0.0
  %2707 = vmatpush1.msra.mxu0 0.0
  %2708 = vmatprep.subr.mxu0 0.0
  %2709 = vmatpush1.msra.mxu0 0.0
  %2710 = vmatprep.subr.mxu0 0.0
  %2711 = vmatpush1.msra.mxu0 0.0
  %2712 = vmatprep.subr.mxu0 0.0
  %2713 = vmatpush1.msra.mxu0 0.0
  %2714 = vmatprep.subr.mxu0 0.0
  %2715 = vmatpush1.msra.mxu0 0.0
  %2716 = vmatprep.subr.mxu0 0.0
  %2717 = vmatpush1.msra.mxu0 0.0
  %2718 = vmatprep.subr.mxu0 0.0
  %2719 = vmatpush1.msra.mxu0 0.0
  %2720 = vmatprep.subr.mxu0 0.0
  %2721 = vmatpush1.msra.mxu0 0.0
  %2722 = vmatprep.mubr.f32.mxu0 0.0
  %2723 = vmatmul.mubr.f32.gmra.mrb[0].mxu0 %v2656
  %v2724 = vpop.f32.mrb[0].mxu0
  %v2725 = vadd.f32 0.0, %v2724
  %v2726 = vpop.f32.mrb[0].mxu0
  %2727 = vdwg.mxu0
  %v2728 = vadd.f32 %v2633, %v2725
  %v2729 = vld [vmem:[#allocation3 + $0x11] sm:$0x1]
  %v2730 = vld [vmem:[#allocation3 + $0x31] sm:$0x1]
  %s2731 = scalar_lea.vmem %s5, 2176
  %v2732 = vld [vmem:[%s2731] sm:$0xff]
  %v2733 = vld [vmem:[%s2731 + $0x8] sm:$0xff]
  %v2734 = vld [vmem:[%s2731 + $0x10] sm:$0xff]
  %v2735 = vld [vmem:[%s2731 + $0x18] sm:$0xff]
  %v2736 = vld [vmem:[%s2731 + $0x20] sm:$0xff]
  %v2737 = vld [vmem:[%s2731 + $0x28] sm:$0xff]
  %v2738 = vld [vmem:[%s2731 + $0x30] sm:$0xff]
  %v2739 = vld [vmem:[%s2731 + $0x38] sm:$0xff]
  %v2740 = vld [vmem:[%s2731 + $0x40] sm:$0xff]
  %v2741 = vld [vmem:[%s2731 + $0x48] sm:$0xff]
  %v2742 = vld [vmem:[%s2731 + $0x50] sm:$0xff]
  %v2743 = vld [vmem:[%s2731 + $0x58] sm:$0xff]
  %v2744 = vld [vmem:[%s2731 + $0x60] sm:$0xff]
  %v2745 = vld [vmem:[%s2731 + $0x68] sm:$0xff]
  %v2746 = vld [vmem:[%s2731 + $0x70] sm:$0xff]
  %v2747 = vld [vmem:[%s2731 + $0x78] sm:$0xff]
  %v2750 = vrot.slane %v2730, 7
  %v2751 = vsel %vm1156, %v2750, %v2729
  %2753 = vmatprep.subr.mxu0 0.0
  %2754 = vmatpush1.msra.mxu0 %v2732
  %2755 = vmatprep.subr.mxu0 0.0
  %2756 = vmatpush1.msra.mxu0 %v2733
  %2757 = vmatprep.subr.mxu0 0.0
  %2758 = vmatpush1.msra.mxu0 %v2734
  %2759 = vmatprep.subr.mxu0 0.0
  %2760 = vmatpush1.msra.mxu0 %v2735
  %2761 = vmatprep.subr.mxu0 0.0
  %2762 = vmatpush1.msra.mxu0 %v2736
  %2763 = vmatprep.subr.mxu0 0.0
  %2764 = vmatpush1.msra.mxu0 %v2737
  %2765 = vmatprep.subr.mxu0 0.0
  %2766 = vmatpush1.msra.mxu0 %v2738
  %2767 = vmatprep.subr.mxu0 0.0
  %2768 = vmatpush1.msra.mxu0 %v2739
  %2769 = vmatprep.subr.mxu0 0.0
  %2770 = vmatpush1.msra.mxu0 %v2740
  %2771 = vmatprep.subr.mxu0 0.0
  %2772 = vmatpush1.msra.mxu0 %v2741
  %2773 = vmatprep.subr.mxu0 0.0
  %2774 = vmatpush1.msra.mxu0 %v2742
  %2775 = vmatprep.subr.mxu0 0.0
  %2776 = vmatpush1.msra.mxu0 %v2743
  %2777 = vmatprep.subr.mxu0 0.0
  %2778 = vmatpush1.msra.mxu0 %v2744
  %2779 = vmatprep.subr.mxu0 0.0
  %2780 = vmatpush1.msra.mxu0 %v2745
  %2781 = vmatprep.subr.mxu0 0.0
  %2782 = vmatpush1.msra.mxu0 %v2746
  %2783 = vmatprep.subr.mxu0 0.0
  %2784 = vmatpush1.msra.mxu0 %v2747
  %2785 = vmatprep.subr.mxu0 0.0
  %2786 = vmatpush1.msra.mxu0 0.0
  %2787 = vmatprep.subr.mxu0 0.0
  %2788 = vmatpush1.msra.mxu0 0.0
  %2789 = vmatprep.subr.mxu0 0.0
  %2790 = vmatpush1.msra.mxu0 0.0
  %2791 = vmatprep.subr.mxu0 0.0
  %2792 = vmatpush1.msra.mxu0 0.0
  %2793 = vmatprep.subr.mxu0 0.0
  %2794 = vmatpush1.msra.mxu0 0.0
  %2795 = vmatprep.subr.mxu0 0.0
  %2796 = vmatpush1.msra.mxu0 0.0
  %2797 = vmatprep.subr.mxu0 0.0
  %2798 = vmatpush1.msra.mxu0 0.0
  %2799 = vmatprep.subr.mxu0 0.0
  %2800 = vmatpush1.msra.mxu0 0.0
  %2801 = vmatprep.subr.mxu0 0.0
  %2802 = vmatpush1.msra.mxu0 0.0
  %2803 = vmatprep.subr.mxu0 0.0
  %2804 = vmatpush1.msra.mxu0 0.0
  %2805 = vmatprep.subr.mxu0 0.0
  %2806 = vmatpush1.msra.mxu0 0.0
  %2807 = vmatprep.subr.mxu0 0.0
  %2808 = vmatpush1.msra.mxu0 0.0
  %2809 = vmatprep.subr.mxu0 0.0
  %2810 = vmatpush1.msra.mxu0 0.0
  %2811 = vmatprep.subr.mxu0 0.0
  %2812 = vmatpush1.msra.mxu0 0.0
  %2813 = vmatprep.subr.mxu0 0.0
  %2814 = vmatpush1.msra.mxu0 0.0
  %2815 = vmatprep.subr.mxu0 0.0
  %2816 = vmatpush1.msra.mxu0 0.0
  %2817 = vmatprep.mubr.f32.mxu0 0.0
  %2818 = vmatmul.mubr.f32.gmra.mrb[0].mxu0 %v2751
  %v2819 = vpop.f32.mrb[0].mxu0
  %v2820 = vadd.f32 0.0, %v2819
  %v2821 = vpop.f32.mrb[0].mxu0
  %2822 = vdwg.mxu0
  %v2823 = vadd.f32 %v2728, %v2820
  %v2824 = vld [vmem:[#allocation3 + $0x12] sm:$0x1]
  %v2825 = vld [vmem:[#allocation3 + $0x32] sm:$0x1]
  %s2826 = scalar_lea.vmem %s5, 2304
  %v2827 = vld [vmem:[%s2826] sm:$0xff]
  %v2828 = vld [vmem:[%s2826 + $0x8] sm:$0xff]
  %v2829 = vld [vmem:[%s2826 + $0x10] sm:$0xff]
  %v2830 = vld [vmem:[%s2826 + $0x18] sm:$0xff]
  %v2831 = vld [vmem:[%s2826 + $0x20] sm:$0xff]
  %v2832 = vld [vmem:[%s2826 + $0x28] sm:$0xff]
  %v2833 = vld [vmem:[%s2826 + $0x30] sm:$0xff]
  %v2834 = vld [vmem:[%s2826 + $0x38] sm:$0xff]
  %v2835 = vld [vmem:[%s2826 + $0x40] sm:$0xff]
  %v2836 = vld [vmem:[%s2826 + $0x48] sm:$0xff]
  %v2837 = vld [vmem:[%s2826 + $0x50] sm:$0xff]
  %v2838 = vld [vmem:[%s2826 + $0x58] sm:$0xff]
  %v2839 = vld [vmem:[%s2826 + $0x60] sm:$0xff]
  %v2840 = vld [vmem:[%s2826 + $0x68] sm:$0xff]
  %v2841 = vld [vmem:[%s2826 + $0x70] sm:$0xff]
  %v2842 = vld [vmem:[%s2826 + $0x78] sm:$0xff]
  %v2845 = vrot.slane %v2825, 7
  %v2846 = vsel %vm1156, %v2845, %v2824
  %2848 = vmatprep.subr.mxu0 0.0
  %2849 = vmatpush1.msra.mxu0 %v2827
  %2850 = vmatprep.subr.mxu0 0.0
  %2851 = vmatpush1.msra.mxu0 %v2828
  %2852 = vmatprep.subr.mxu0 0.0
  %2853 = vmatpush1.msra.mxu0 %v2829
  %2854 = vmatprep.subr.mxu0 0.0
  %2855 = vmatpush1.msra.mxu0 %v2830
  %2856 = vmatprep.subr.mxu0 0.0
  %2857 = vmatpush1.msra.mxu0 %v2831
  %2858 = vmatprep.subr.mxu0 0.0
  %2859 = vmatpush1.msra.mxu0 %v2832
  %2860 = vmatprep.subr.mxu0 0.0
  %2861 = vmatpush1.msra.mxu0 %v2833
  %2862 = vmatprep.subr.mxu0 0.0
  %2863 = vmatpush1.msra.mxu0 %v2834
  %2864 = vmatprep.subr.mxu0 0.0
  %2865 = vmatpush1.msra.mxu0 %v2835
  %2866 = vmatprep.subr.mxu0 0.0
  %2867 = vmatpush1.msra.mxu0 %v2836
  %2868 = vmatprep.subr.mxu0 0.0
  %2869 = vmatpush1.msra.mxu0 %v2837
  %2870 = vmatprep.subr.mxu0 0.0
  %2871 = vmatpush1.msra.mxu0 %v2838
  %2872 = vmatprep.subr.mxu0 0.0
  %2873 = vmatpush1.msra.mxu0 %v2839
  %2874 = vmatprep.subr.mxu0 0.0
  %2875 = vmatpush1.msra.mxu0 %v2840
  %2876 = vmatprep.subr.mxu0 0.0
  %2877 = vmatpush1.msra.mxu0 %v2841
  %2878 = vmatprep.subr.mxu0 0.0
  %2879 = vmatpush1.msra.mxu0 %v2842
  %2880 = vmatprep.subr.mxu0 0.0
  %2881 = vmatpush1.msra.mxu0 0.0
  %2882 = vmatprep.subr.mxu0 0.0
  %2883 = vmatpush1.msra.mxu0 0.0
  %2884 = vmatprep.subr.mxu0 0.0
  %2885 = vmatpush1.msra.mxu0 0.0
  %2886 = vmatprep.subr.mxu0 0.0
  %2887 = vmatpush1.msra.mxu0 0.0
  %2888 = vmatprep.subr.mxu0 0.0
  %2889 = vmatpush1.msra.mxu0 0.0
  %2890 = vmatprep.subr.mxu0 0.0
  %2891 = vmatpush1.msra.mxu0 0.0
  %2892 = vmatprep.subr.mxu0 0.0
  %2893 = vmatpush1.msra.mxu0 0.0
  %2894 = vmatprep.subr.mxu0 0.0
  %2895 = vmatpush1.msra.mxu0 0.0
  %2896 = vmatprep.subr.mxu0 0.0
  %2897 = vmatpush1.msra.mxu0 0.0
  %2898 = vmatprep.subr.mxu0 0.0
  %2899 = vmatpush1.msra.mxu0 0.0
  %2900 = vmatprep.subr.mxu0 0.0
  %2901 = vmatpush1.msra.mxu0 0.0
  %2902 = vmatprep.subr.mxu0 0.0
  %2903 = vmatpush1.msra.mxu0 0.0
  %2904 = vmatprep.subr.mxu0 0.0
  %2905 = vmatpush1.msra.mxu0 0.0
  %2906 = vmatprep.subr.mxu0 0.0
  %2907 = vmatpush1.msra.mxu0 0.0
  %2908 = vmatprep.subr.mxu0 0.0
  %2909 = vmatpush1.msra.mxu0 0.0
  %2910 = vmatprep.subr.mxu0 0.0
  %2911 = vmatpush1.msra.mxu0 0.0
  %2912 = vmatprep.mubr.f32.mxu0 0.0
  %2913 = vmatmul.mubr.f32.gmra.mrb[0].mxu0 %v2846
  %v2914 = vpop.f32.mrb[0].mxu0
  %v2915 = vadd.f32 0.0, %v2914
  %v2916 = vpop.f32.mrb[0].mxu0
  %2917 = vdwg.mxu0
  %v2918 = vadd.f32 %v2823, %v2915
  %v2919 = vld [vmem:[#allocation3 + $0x13] sm:$0x1]
  %v2920 = vld [vmem:[#allocation3 + $0x33] sm:$0x1]
  %s2921 = scalar_lea.vmem %s5, 2432
  %v2922 = vld [vmem:[%s2921] sm:$0xff]
  %v2923 = vld [vmem:[%s2921 + $0x8] sm:$0xff]
  %v2924 = vld [vmem:[%s2921 + $0x10] sm:$0xff]
  %v2925 = vld [vmem:[%s2921 + $0x18] sm:$0xff]
  %v2926 = vld [vmem:[%s2921 + $0x20] sm:$0xff]
  %v2927 = vld [vmem:[%s2921 + $0x28] sm:$0xff]
  %v2928 = vld [vmem:[%s2921 + $0x30] sm:$0xff]
  %v2929 = vld [vmem:[%s2921 + $0x38] sm:$0xff]
  %v2930 = vld [vmem:[%s2921 + $0x40] sm:$0xff]
  %v2931 = vld [vmem:[%s2921 + $0x48] sm:$0xff]
  %v2932 = vld [vmem:[%s2921 + $0x50] sm:$0xff]
  %v2933 = vld [vmem:[%s2921 + $0x58] sm:$0xff]
  %v2934 = vld [vmem:[%s2921 + $0x60] sm:$0xff]
  %v2935 = vld [vmem:[%s2921 + $0x68] sm:$0xff]
  %v2936 = vld [vmem:[%s2921 + $0x70] sm:$0xff]
  %v2937 = vld [vmem:[%s2921 + $0x78] sm:$0xff]
  %v2940 = vrot.slane %v2920, 7
  %v2941 = vsel %vm1156, %v2940, %v2919
  %2943 = vmatprep.subr.mxu0 0.0
  %2944 = vmatpush1.msra.mxu0 %v2922
  %2945 = vmatprep.subr.mxu0 0.0
  %2946 = vmatpush1.msra.mxu0 %v2923
  %2947 = vmatprep.subr.mxu0 0.0
  %2948 = vmatpush1.msra.mxu0 %v2924
  %2949 = vmatprep.subr.mxu0 0.0
  %2950 = vmatpush1.msra.mxu0 %v2925
  %2951 = vmatprep.subr.mxu0 0.0
  %2952 = vmatpush1.msra.mxu0 %v2926
  %2953 = vmatprep.subr.mxu0 0.0
  %2954 = vmatpush1.msra.mxu0 %v2927
  %2955 = vmatprep.subr.mxu0 0.0
  %2956 = vmatpush1.msra.mxu0 %v2928
  %2957 = vmatprep.subr.mxu0 0.0
  %2958 = vmatpush1.msra.mxu0 %v2929
  %2959 = vmatprep.subr.mxu0 0.0
  %2960 = vmatpush1.msra.mxu0 %v2930
  %2961 = vmatprep.subr.mxu0 0.0
  %2962 = vmatpush1.msra.mxu0 %v2931
  %2963 = vmatprep.subr.mxu0 0.0
  %2964 = vmatpush1.msra.mxu0 %v2932
  %2965 = vmatprep.subr.mxu0 0.0
  %2966 = vmatpush1.msra.mxu0 %v2933
  %2967 = vmatprep.subr.mxu0 0.0
  %2968 = vmatpush1.msra.mxu0 %v2934
  %2969 = vmatprep.subr.mxu0 0.0
  %2970 = vmatpush1.msra.mxu0 %v2935
  %2971 = vmatprep.subr.mxu0 0.0
  %2972 = vmatpush1.msra.mxu0 %v2936
  %2973 = vmatprep.subr.mxu0 0.0
  %2974 = vmatpush1.msra.mxu0 %v2937
  %2975 = vmatprep.subr.mxu0 0.0
  %2976 = vmatpush1.msra.mxu0 0.0
  %2977 = vmatprep.subr.mxu0 0.0
  %2978 = vmatpush1.msra.mxu0 0.0
  %2979 = vmatprep.subr.mxu0 0.0
  %2980 = vmatpush1.msra.mxu0 0.0
  %2981 = vmatprep.subr.mxu0 0.0
  %2982 = vmatpush1.msra.mxu0 0.0
  %2983 = vmatprep.subr.mxu0 0.0
  %2984 = vmatpush1.msra.mxu0 0.0
  %2985 = vmatprep.subr.mxu0 0.0
  %2986 = vmatpush1.msra.mxu0 0.0
  %2987 = vmatprep.subr.mxu0 0.0
  %2988 = vmatpush1.msra.mxu0 0.0
  %2989 = vmatprep.subr.mxu0 0.0
  %2990 = vmatpush1.msra.mxu0 0.0
  %2991 = vmatprep.subr.mxu0 0.0
  %2992 = vmatpush1.msra.mxu0 0.0
  %2993 = vmatprep.subr.mxu0 0.0
  %2994 = vmatpush1.msra.mxu0 0.0
  %2995 = vmatprep.subr.mxu0 0.0
  %2996 = vmatpush1.msra.mxu0 0.0
  %2997 = vmatprep.subr.mxu0 0.0
  %2998 = vmatpush1.msra.mxu0 0.0
  %2999 = vmatprep.subr.mxu0 0.0
  %3000 = vmatpush1.msra.mxu0 0.0
  %3001 = vmatprep.subr.mxu0 0.0
  %3002 = vmatpush1.msra.mxu0 0.0
  %3003 = vmatprep.subr.mxu0 0.0
  %3004 = vmatpush1.msra.mxu0 0.0
  %3005 = vmatprep.subr.mxu0 0.0
  %3006 = vmatpush1.msra.mxu0 0.0
  %3007 = vmatprep.mubr.f32.mxu0 0.0
  %3008 = vmatmul.mubr.f32.gmra.mrb[0].mxu0 %v2941
  %v3009 = vpop.f32.mrb[0].mxu0
  %v3010 = vadd.f32 0.0, %v3009
  %v3011 = vpop.f32.mrb[0].mxu0
  %3012 = vdwg.mxu0
  %v3013 = vadd.f32 %v2918, %v3010
  %v3014 = vld [vmem:[#allocation3 + $0x14] sm:$0x1]
  %v3015 = vld [vmem:[#allocation3 + $0x34] sm:$0x1]
  %s3016 = scalar_lea.vmem %s5, 2560
  %v3017 = vld [vmem:[%s3016] sm:$0xff]
  %v3018 = vld [vmem:[%s3016 + $0x8] sm:$0xff]
  %v3019 = vld [vmem:[%s3016 + $0x10] sm:$0xff]
  %v3020 = vld [vmem:[%s3016 + $0x18] sm:$0xff]
  %v3021 = vld [vmem:[%s3016 + $0x20] sm:$0xff]
  %v3022 = vld [vmem:[%s3016 + $0x28] sm:$0xff]
  %v3023 = vld [vmem:[%s3016 + $0x30] sm:$0xff]
  %v3024 = vld [vmem:[%s3016 + $0x38] sm:$0xff]
  %v3025 = vld [vmem:[%s3016 + $0x40] sm:$0xff]
  %v3026 = vld [vmem:[%s3016 + $0x48] sm:$0xff]
  %v3027 = vld [vmem:[%s3016 + $0x50] sm:$0xff]
  %v3028 = vld [vmem:[%s3016 + $0x58] sm:$0xff]
  %v3029 = vld [vmem:[%s3016 + $0x60] sm:$0xff]
  %v3030 = vld [vmem:[%s3016 + $0x68] sm:$0xff]
  %v3031 = vld [vmem:[%s3016 + $0x70] sm:$0xff]
  %v3032 = vld [vmem:[%s3016 + $0x78] sm:$0xff]
  %v3035 = vrot.slane %v3015, 7
  %v3036 = vsel %vm1156, %v3035, %v3014
  %3038 = vmatprep.subr.mxu0 0.0
  %3039 = vmatpush1.msra.mxu0 %v3017
  %3040 = vmatprep.subr.mxu0 0.0
  %3041 = vmatpush1.msra.mxu0 %v3018
  %3042 = vmatprep.subr.mxu0 0.0
  %3043 = vmatpush1.msra.mxu0 %v3019
  %3044 = vmatprep.subr.mxu0 0.0
  %3045 = vmatpush1.msra.mxu0 %v3020
  %3046 = vmatprep.subr.mxu0 0.0
  %3047 = vmatpush1.msra.mxu0 %v3021
  %3048 = vmatprep.subr.mxu0 0.0
  %3049 = vmatpush1.msra.mxu0 %v3022
  %3050 = vmatprep.subr.mxu0 0.0
  %3051 = vmatpush1.msra.mxu0 %v3023
  %3052 = vmatprep.subr.mxu0 0.0
  %3053 = vmatpush1.msra.mxu0 %v3024
  %3054 = vmatprep.subr.mxu0 0.0
  %3055 = vmatpush1.msra.mxu0 %v3025
  %3056 = vmatprep.subr.mxu0 0.0
  %3057 = vmatpush1.msra.mxu0 %v3026
  %3058 = vmatprep.subr.mxu0 0.0
  %3059 = vmatpush1.msra.mxu0 %v3027
  %3060 = vmatprep.subr.mxu0 0.0
  %3061 = vmatpush1.msra.mxu0 %v3028
  %3062 = vmatprep.subr.mxu0 0.0
  %3063 = vmatpush1.msra.mxu0 %v3029
  %3064 = vmatprep.subr.mxu0 0.0
  %3065 = vmatpush1.msra.mxu0 %v3030
  %3066 = vmatprep.subr.mxu0 0.0
  %3067 = vmatpush1.msra.mxu0 %v3031
  %3068 = vmatprep.subr.mxu0 0.0
  %3069 = vmatpush1.msra.mxu0 %v3032
  %3070 = vmatprep.subr.mxu0 0.0
  %3071 = vmatpush1.msra.mxu0 0.0
  %3072 = vmatprep.subr.mxu0 0.0
  %3073 = vmatpush1.msra.mxu0 0.0
  %3074 = vmatprep.subr.mxu0 0.0
  %3075 = vmatpush1.msra.mxu0 0.0
  %3076 = vmatprep.subr.mxu0 0.0
  %3077 = vmatpush1.msra.mxu0 0.0
  %3078 = vmatprep.subr.mxu0 0.0
  %3079 = vmatpush1.msra.mxu0 0.0
  %3080 = vmatprep.subr.mxu0 0.0
  %3081 = vmatpush1.msra.mxu0 0.0
  %3082 = vmatprep.subr.mxu0 0.0
  %3083 = vmatpush1.msra.mxu0 0.0
  %3084 = vmatprep.subr.mxu0 0.0
  %3085 = vmatpush1.msra.mxu0 0.0
  %3086 = vmatprep.subr.mxu0 0.0
  %3087 = vmatpush1.msra.mxu0 0.0
  %3088 = vmatprep.subr.mxu0 0.0
  %3089 = vmatpush1.msra.mxu0 0.0
  %3090 = vmatprep.subr.mxu0 0.0
  %3091 = vmatpush1.msra.mxu0 0.0
  %3092 = vmatprep.subr.mxu0 0.0
  %3093 = vmatpush1.msra.mxu0 0.0
  %3094 = vmatprep.subr.mxu0 0.0
  %3095 = vmatpush1.msra.mxu0 0.0
  %3096 = vmatprep.subr.mxu0 0.0
  %3097 = vmatpush1.msra.mxu0 0.0
  %3098 = vmatprep.subr.mxu0 0.0
  %3099 = vmatpush1.msra.mxu0 0.0
  %3100 = vmatprep.subr.mxu0 0.0
  %3101 = vmatpush1.msra.mxu0 0.0
  %3102 = vmatprep.mubr.f32.mxu0 0.0
  %3103 = vmatmul.mubr.f32.gmra.mrb[0].mxu0 %v3036
  %v3104 = vpop.f32.mrb[0].mxu0
  %v3105 = vadd.f32 0.0, %v3104
  %v3106 = vpop.f32.mrb[0].mxu0
  %3107 = vdwg.mxu0
  %v3108 = vadd.f32 %v3013, %v3105
  %v3109 = vld [vmem:[#allocation3 + $0x15] sm:$0x1]
  %v3110 = vld [vmem:[#allocation3 + $0x35] sm:$0x1]
  %s3111 = scalar_lea.vmem %s5, 2688
  %v3112 = vld [vmem:[%s3111] sm:$0xff]
  %v3113 = vld [vmem:[%s3111 + $0x8] sm:$0xff]
  %v3114 = vld [vmem:[%s3111 + $0x10] sm:$0xff]
  %v3115 = vld [vmem:[%s3111 + $0x18] sm:$0xff]
  %v3116 = vld [vmem:[%s3111 + $0x20] sm:$0xff]
  %v3117 = vld [vmem:[%s3111 + $0x28] sm:$0xff]
  %v3118 = vld [vmem:[%s3111 + $0x30] sm:$0xff]
  %v3119 = vld [vmem:[%s3111 + $0x38] sm:$0xff]
  %v3120 = vld [vmem:[%s3111 + $0x40] sm:$0xff]
  %v3121 = vld [vmem:[%s3111 + $0x48] sm:$0xff]
  %v3122 = vld [vmem:[%s3111 + $0x50] sm:$0xff]
  %v3123 = vld [vmem:[%s3111 + $0x58] sm:$0xff]
  %v3124 = vld [vmem:[%s3111 + $0x60] sm:$0xff]
  %v3125 = vld [vmem:[%s3111 + $0x68] sm:$0xff]
  %v3126 = vld [vmem:[%s3111 + $0x70] sm:$0xff]
  %v3127 = vld [vmem:[%s3111 + $0x78] sm:$0xff]
  %v3130 = vrot.slane %v3110, 7
  %v3131 = vsel %vm1156, %v3130, %v3109
  %3133 = vmatprep.subr.mxu0 0.0
  %3134 = vmatpush1.msra.mxu0 %v3112
  %3135 = vmatprep.subr.mxu0 0.0
  %3136 = vmatpush1.msra.mxu0 %v3113
  %3137 = vmatprep.subr.mxu0 0.0
  %3138 = vmatpush1.msra.mxu0 %v3114
  %3139 = vmatprep.subr.mxu0 0.0
  %3140 = vmatpush1.msra.mxu0 %v3115
  %3141 = vmatprep.subr.mxu0 0.0
  %3142 = vmatpush1.msra.mxu0 %v3116
  %3143 = vmatprep.subr.mxu0 0.0
  %3144 = vmatpush1.msra.mxu0 %v3117
  %3145 = vmatprep.subr.mxu0 0.0
  %3146 = vmatpush1.msra.mxu0 %v3118
  %3147 = vmatprep.subr.mxu0 0.0
  %3148 = vmatpush1.msra.mxu0 %v3119
  %3149 = vmatprep.subr.mxu0 0.0
  %3150 = vmatpush1.msra.mxu0 %v3120
  %3151 = vmatprep.subr.mxu0 0.0
  %3152 = vmatpush1.msra.mxu0 %v3121
  %3153 = vmatprep.subr.mxu0 0.0
  %3154 = vmatpush1.msra.mxu0 %v3122
  %3155 = vmatprep.subr.mxu0 0.0
  %3156 = vmatpush1.msra.mxu0 %v3123
  %3157 = vmatprep.subr.mxu0 0.0
  %3158 = vmatpush1.msra.mxu0 %v3124
  %3159 = vmatprep.subr.mxu0 0.0
  %3160 = vmatpush1.msra.mxu0 %v3125
  %3161 = vmatprep.subr.mxu0 0.0
  %3162 = vmatpush1.msra.mxu0 %v3126
  %3163 = vmatprep.subr.mxu0 0.0
  %3164 = vmatpush1.msra.mxu0 %v3127
  %3165 = vmatprep.subr.mxu0 0.0
  %3166 = vmatpush1.msra.mxu0 0.0
  %3167 = vmatprep.subr.mxu0 0.0
  %3168 = vmatpush1.msra.mxu0 0.0
  %3169 = vmatprep.subr.mxu0 0.0
  %3170 = vmatpush1.msra.mxu0 0.0
  %3171 = vmatprep.subr.mxu0 0.0
  %3172 = vmatpush1.msra.mxu0 0.0
  %3173 = vmatprep.subr.mxu0 0.0
  %3174 = vmatpush1.msra.mxu0 0.0
  %3175 = vmatprep.subr.mxu0 0.0
  %3176 = vmatpush1.msra.mxu0 0.0
  %3177 = vmatprep.subr.mxu0 0.0
  %3178 = vmatpush1.msra.mxu0 0.0
  %3179 = vmatprep.subr.mxu0 0.0
  %3180 = vmatpush1.msra.mxu0 0.0
  %3181 = vmatprep.subr.mxu0 0.0
  %3182 = vmatpush1.msra.mxu0 0.0
  %3183 = vmatprep.subr.mxu0 0.0
  %3184 = vmatpush1.msra.mxu0 0.0
  %3185 = vmatprep.subr.mxu0 0.0
  %3186 = vmatpush1.msra.mxu0 0.0
  %3187 = vmatprep.subr.mxu0 0.0
  %3188 = vmatpush1.msra.mxu0 0.0
  %3189 = vmatprep.subr.mxu0 0.0
  %3190 = vmatpush1.msra.mxu0 0.0
  %3191 = vmatprep.subr.mxu0 0.0
  %3192 = vmatpush1.msra.mxu0 0.0
  %3193 = vmatprep.subr.mxu0 0.0
  %3194 = vmatpush1.msra.mxu0 0.0
  %3195 = vmatprep.subr.mxu0 0.0
  %3196 = vmatpush1.msra.mxu0 0.0
  %3197 = vmatprep.mubr.f32.mxu0 0.0
  %3198 = vmatmul.mubr.f32.gmra.mrb[0].mxu0 %v3131
  %v3199 = vpop.f32.mrb[0].mxu0
  %v3200 = vadd.f32 0.0, %v3199
  %v3201 = vpop.f32.mrb[0].mxu0
  %3202 = vdwg.mxu0
  %v3203 = vadd.f32 %v3108, %v3200
  %v3204 = vld [vmem:[#allocation3 + $0x16] sm:$0x1]
  %v3205 = vld [vmem:[#allocation3 + $0x36] sm:$0x1]
  %s3206 = scalar_lea.vmem %s5, 2816
  %v3207 = vld [vmem:[%s3206] sm:$0xff]
  %v3208 = vld [vmem:[%s3206 + $0x8] sm:$0xff]
  %v3209 = vld [vmem:[%s3206 + $0x10] sm:$0xff]
  %v3210 = vld [vmem:[%s3206 + $0x18] sm:$0xff]
  %v3211 = vld [vmem:[%s3206 + $0x20] sm:$0xff]
  %v3212 = vld [vmem:[%s3206 + $0x28] sm:$0xff]
  %v3213 = vld [vmem:[%s3206 + $0x30] sm:$0xff]
  %v3214 = vld [vmem:[%s3206 + $0x38] sm:$0xff]
  %v3215 = vld [vmem:[%s3206 + $0x40] sm:$0xff]
  %v3216 = vld [vmem:[%s3206 + $0x48] sm:$0xff]
  %v3217 = vld [vmem:[%s3206 + $0x50] sm:$0xff]
  %v3218 = vld [vmem:[%s3206 + $0x58] sm:$0xff]
  %v3219 = vld [vmem:[%s3206 + $0x60] sm:$0xff]
  %v3220 = vld [vmem:[%s3206 + $0x68] sm:$0xff]
  %v3221 = vld [vmem:[%s3206 + $0x70] sm:$0xff]
  %v3222 = vld [vmem:[%s3206 + $0x78] sm:$0xff]
  %v3225 = vrot.slane %v3205, 7
  %v3226 = vsel %vm1156, %v3225, %v3204
  %3228 = vmatprep.subr.mxu0 0.0
  %3229 = vmatpush1.msra.mxu0 %v3207
  %3230 = vmatprep.subr.mxu0 0.0
  %3231 = vmatpush1.msra.mxu0 %v3208
  %3232 = vmatprep.subr.mxu0 0.0
  %3233 = vmatpush1.msra.mxu0 %v3209
  %3234 = vmatprep.subr.mxu0 0.0
  %3235 = vmatpush1.msra.mxu0 %v3210
  %3236 = vmatprep.subr.mxu0 0.0
  %3237 = vmatpush1.msra.mxu0 %v3211
  %3238 = vmatprep.subr.mxu0 0.0
  %3239 = vmatpush1.msra.mxu0 %v3212
  %3240 = vmatprep.subr.mxu0 0.0
  %3241 = vmatpush1.msra.mxu0 %v3213
  %3242 = vmatprep.subr.mxu0 0.0
  %3243 = vmatpush1.msra.mxu0 %v3214
  %3244 = vmatprep.subr.mxu0 0.0
  %3245 = vmatpush1.msra.mxu0 %v3215
  %3246 = vmatprep.subr.mxu0 0.0
  %3247 = vmatpush1.msra.mxu0 %v3216
  %3248 = vmatprep.subr.mxu0 0.0
  %3249 = vmatpush1.msra.mxu0 %v3217
  %3250 = vmatprep.subr.mxu0 0.0
  %3251 = vmatpush1.msra.mxu0 %v3218
  %3252 = vmatprep.subr.mxu0 0.0
  %3253 = vmatpush1.msra.mxu0 %v3219
  %3254 = vmatprep.subr.mxu0 0.0
  %3255 = vmatpush1.msra.mxu0 %v3220
  %3256 = vmatprep.subr.mxu0 0.0
  %3257 = vmatpush1.msra.mxu0 %v3221
  %3258 = vmatprep.subr.mxu0 0.0
  %3259 = vmatpush1.msra.mxu0 %v3222
  %3260 = vmatprep.subr.mxu0 0.0
  %3261 = vmatpush1.msra.mxu0 0.0
  %3262 = vmatprep.subr.mxu0 0.0
  %3263 = vmatpush1.msra.mxu0 0.0
  %3264 = vmatprep.subr.mxu0 0.0
  %3265 = vmatpush1.msra.mxu0 0.0
  %3266 = vmatprep.subr.mxu0 0.0
  %3267 = vmatpush1.msra.mxu0 0.0
  %3268 = vmatprep.subr.mxu0 0.0
  %3269 = vmatpush1.msra.mxu0 0.0
  %3270 = vmatprep.subr.mxu0 0.0
  %3271 = vmatpush1.msra.mxu0 0.0
  %3272 = vmatprep.subr.mxu0 0.0
  %3273 = vmatpush1.msra.mxu0 0.0
  %3274 = vmatprep.subr.mxu0 0.0
  %3275 = vmatpush1.msra.mxu0 0.0
  %3276 = vmatprep.subr.mxu0 0.0
  %3277 = vmatpush1.msra.mxu0 0.0
  %3278 = vmatprep.subr.mxu0 0.0
  %3279 = vmatpush1.msra.mxu0 0.0
  %3280 = vmatprep.subr.mxu0 0.0
  %3281 = vmatpush1.msra.mxu0 0.0
  %3282 = vmatprep.subr.mxu0 0.0
  %3283 = vmatpush1.msra.mxu0 0.0
  %3284 = vmatprep.subr.mxu0 0.0
  %3285 = vmatpush1.msra.mxu0 0.0
  %3286 = vmatprep.subr.mxu0 0.0
  %3287 = vmatpush1.msra.mxu0 0.0
  %3288 = vmatprep.subr.mxu0 0.0
  %3289 = vmatpush1.msra.mxu0 0.0
  %3290 = vmatprep.subr.mxu0 0.0
  %3291 = vmatpush1.msra.mxu0 0.0
  %3292 = vmatprep.mubr.f32.mxu0 0.0
  %3293 = vmatmul.mubr.f32.gmra.mrb[0].mxu0 %v3226
  %v3294 = vpop.f32.mrb[0].mxu0
  %v3295 = vadd.f32 0.0, %v3294
  %v3296 = vpop.f32.mrb[0].mxu0
  %3297 = vdwg.mxu0
  %v3298 = vadd.f32 %v3203, %v3295
  %v3299 = vld [vmem:[#allocation3 + $0x17] sm:$0x1]
  %v3300 = vld [vmem:[#allocation3 + $0x37] sm:$0x1]
  %s3301 = scalar_lea.vmem %s5, 2944
  %v3302 = vld [vmem:[%s3301] sm:$0xff]
  %v3303 = vld [vmem:[%s3301 + $0x8] sm:$0xff]
  %v3304 = vld [vmem:[%s3301 + $0x10] sm:$0xff]
  %v3305 = vld [vmem:[%s3301 + $0x18] sm:$0xff]
  %v3306 = vld [vmem:[%s3301 + $0x20] sm:$0xff]
  %v3307 = vld [vmem:[%s3301 + $0x28] sm:$0xff]
  %v3308 = vld [vmem:[%s3301 + $0x30] sm:$0xff]
  %v3309 = vld [vmem:[%s3301 + $0x38] sm:$0xff]
  %v3310 = vld [vmem:[%s3301 + $0x40] sm:$0xff]
  %v3311 = vld [vmem:[%s3301 + $0x48] sm:$0xff]
  %v3312 = vld [vmem:[%s3301 + $0x50] sm:$0xff]
  %v3313 = vld [vmem:[%s3301 + $0x58] sm:$0xff]
  %v3314 = vld [vmem:[%s3301 + $0x60] sm:$0xff]
  %v3315 = vld [vmem:[%s3301 + $0x68] sm:$0xff]
  %v3316 = vld [vmem:[%s3301 + $0x70] sm:$0xff]
  %v3317 = vld [vmem:[%s3301 + $0x78] sm:$0xff]
  %v3320 = vrot.slane %v3300, 7
  %v3321 = vsel %vm1156, %v3320, %v3299
  %3323 = vmatprep.subr.mxu0 0.0
  %3324 = vmatpush1.msra.mxu0 %v3302
  %3325 = vmatprep.subr.mxu0 0.0
  %3326 = vmatpush1.msra.mxu0 %v3303
  %3327 = vmatprep.subr.mxu0 0.0
  %3328 = vmatpush1.msra.mxu0 %v3304
  %3329 = vmatprep.subr.mxu0 0.0
  %3330 = vmatpush1.msra.mxu0 %v3305
  %3331 = vmatprep.subr.mxu0 0.0
  %3332 = vmatpush1.msra.mxu0 %v3306
  %3333 = vmatprep.subr.mxu0 0.0
  %3334 = vmatpush1.msra.mxu0 %v3307
  %3335 = vmatprep.subr.mxu0 0.0
  %3336 = vmatpush1.msra.mxu0 %v3308
  %3337 = vmatprep.subr.mxu0 0.0
  %3338 = vmatpush1.msra.mxu0 %v3309
  %3339 = vmatprep.subr.mxu0 0.0
  %3340 = vmatpush1.msra.mxu0 %v3310
  %3341 = vmatprep.subr.mxu0 0.0
  %3342 = vmatpush1.msra.mxu0 %v3311
  %3343 = vmatprep.subr.mxu0 0.0
  %3344 = vmatpush1.msra.mxu0 %v3312
  %3345 = vmatprep.subr.mxu0 0.0
  %3346 = vmatpush1.msra.mxu0 %v3313
  %3347 = vmatprep.subr.mxu0 0.0
  %3348 = vmatpush1.msra.mxu0 %v3314
  %3349 = vmatprep.subr.mxu0 0.0
  %3350 = vmatpush1.msra.mxu0 %v3315
  %3351 = vmatprep.subr.mxu0 0.0
  %3352 = vmatpush1.msra.mxu0 %v3316
  %3353 = vmatprep.subr.mxu0 0.0
  %3354 = vmatpush1.msra.mxu0 %v3317
  %3355 = vmatprep.subr.mxu0 0.0
  %3356 = vmatpush1.msra.mxu0 0.0
  %3357 = vmatprep.subr.mxu0 0.0
  %3358 = vmatpush1.msra.mxu0 0.0
  %3359 = vmatprep.subr.mxu0 0.0
  %3360 = vmatpush1.msra.mxu0 0.0
  %3361 = vmatprep.subr.mxu0 0.0
  %3362 = vmatpush1.msra.mxu0 0.0
  %3363 = vmatprep.subr.mxu0 0.0
  %3364 = vmatpush1.msra.mxu0 0.0
  %3365 = vmatprep.subr.mxu0 0.0
  %3366 = vmatpush1.msra.mxu0 0.0
  %3367 = vmatprep.subr.mxu0 0.0
  %3368 = vmatpush1.msra.mxu0 0.0
  %3369 = vmatprep.subr.mxu0 0.0
  %3370 = vmatpush1.msra.mxu0 0.0
  %3371 = vmatprep.subr.mxu0 0.0
  %3372 = vmatpush1.msra.mxu0 0.0
  %3373 = vmatprep.subr.mxu0 0.0
  %3374 = vmatpush1.msra.mxu0 0.0
  %3375 = vmatprep.subr.mxu0 0.0
  %3376 = vmatpush1.msra.mxu0 0.0
  %3377 = vmatprep.subr.mxu0 0.0
  %3378 = vmatpush1.msra.mxu0 0.0
  %3379 = vmatprep.subr.mxu0 0.0
  %3380 = vmatpush1.msra.mxu0 0.0
  %3381 = vmatprep.subr.mxu0 0.0
  %3382 = vmatpush1.msra.mxu0 0.0
  %3383 = vmatprep.subr.mxu0 0.0
  %3384 = vmatpush1.msra.mxu0 0.0
  %3385 = vmatprep.subr.mxu0 0.0
  %3386 = vmatpush1.msra.mxu0 0.0
  %3387 = vmatprep.mubr.f32.mxu0 0.0
  %3388 = vmatmul.mubr.f32.gmra.mrb[0].mxu0 %v3321
  %v3389 = vpop.f32.mrb[0].mxu0
  %v3390 = vadd.f32 0.0, %v3389
  %v3391 = vpop.f32.mrb[0].mxu0
  %3392 = vdwg.mxu0
  %v3393 = vadd.f32 %v3298, %v3390
  %v3394 = vld [vmem:[#allocation3 + $0x18] sm:$0x1]
  %v3395 = vld [vmem:[#allocation3 + $0x38] sm:$0x1]
  %s3396 = scalar_lea.vmem %s5, 3072
  %v3397 = vld [vmem:[%s3396] sm:$0xff]
  %v3398 = vld [vmem:[%s3396 + $0x8] sm:$0xff]
  %v3399 = vld [vmem:[%s3396 + $0x10] sm:$0xff]
  %v3400 = vld [vmem:[%s3396 + $0x18] sm:$0xff]
  %v3401 = vld [vmem:[%s3396 + $0x20] sm:$0xff]
  %v3402 = vld [vmem:[%s3396 + $0x28] sm:$0xff]
  %v3403 = vld [vmem:[%s3396 + $0x30] sm:$0xff]
  %v3404 = vld [vmem:[%s3396 + $0x38] sm:$0xff]
  %v3405 = vld [vmem:[%s3396 + $0x40] sm:$0xff]
  %v3406 = vld [vmem:[%s3396 + $0x48] sm:$0xff]
  %v3407 = vld [vmem:[%s3396 + $0x50] sm:$0xff]
  %v3408 = vld [vmem:[%s3396 + $0x58] sm:$0xff]
  %v3409 = vld [vmem:[%s3396 + $0x60] sm:$0xff]
  %v3410 = vld [vmem:[%s3396 + $0x68] sm:$0xff]
  %v3411 = vld [vmem:[%s3396 + $0x70] sm:$0xff]
  %v3412 = vld [vmem:[%s3396 + $0x78] sm:$0xff]
  %v3415 = vrot.slane %v3395, 7
  %v3416 = vsel %vm1156, %v3415, %v3394
  %3418 = vmatprep.subr.mxu0 0.0
  %3419 = vmatpush1.msra.mxu0 %v3397
  %3420 = vmatprep.subr.mxu0 0.0
  %3421 = vmatpush1.msra.mxu0 %v3398
  %3422 = vmatprep.subr.mxu0 0.0
  %3423 = vmatpush1.msra.mxu0 %v3399
  %3424 = vmatprep.subr.mxu0 0.0
  %3425 = vmatpush1.msra.mxu0 %v3400
  %3426 = vmatprep.subr.mxu0 0.0
  %3427 = vmatpush1.msra.mxu0 %v3401
  %3428 = vmatprep.subr.mxu0 0.0
  %3429 = vmatpush1.msra.mxu0 %v3402
  %3430 = vmatprep.subr.mxu0 0.0
  %3431 = vmatpush1.msra.mxu0 %v3403
  %3432 = vmatprep.subr.mxu0 0.0
  %3433 = vmatpush1.msra.mxu0 %v3404
  %3434 = vmatprep.subr.mxu0 0.0
  %3435 = vmatpush1.msra.mxu0 %v3405
  %3436 = vmatprep.subr.mxu0 0.0
  %3437 = vmatpush1.msra.mxu0 %v3406
  %3438 = vmatprep.subr.mxu0 0.0
  %3439 = vmatpush1.msra.mxu0 %v3407
  %3440 = vmatprep.subr.mxu0 0.0
  %3441 = vmatpush1.msra.mxu0 %v3408
  %3442 = vmatprep.subr.mxu0 0.0
  %3443 = vmatpush1.msra.mxu0 %v3409
  %3444 = vmatprep.subr.mxu0 0.0
  %3445 = vmatpush1.msra.mxu0 %v3410
  %3446 = vmatprep.subr.mxu0 0.0
  %3447 = vmatpush1.msra.mxu0 %v3411
  %3448 = vmatprep.subr.mxu0 0.0
  %3449 = vmatpush1.msra.mxu0 %v3412
  %3450 = vmatprep.subr.mxu0 0.0
  %3451 = vmatpush1.msra.mxu0 0.0
  %3452 = vmatprep.subr.mxu0 0.0
  %3453 = vmatpush1.msra.mxu0 0.0
  %3454 = vmatprep.subr.mxu0 0.0
  %3455 = vmatpush1.msra.mxu0 0.0
  %3456 = vmatprep.subr.mxu0 0.0
  %3457 = vmatpush1.msra.mxu0 0.0
  %3458 = vmatprep.subr.mxu0 0.0
  %3459 = vmatpush1.msra.mxu0 0.0
  %3460 = vmatprep.subr.mxu0 0.0
  %3461 = vmatpush1.msra.mxu0 0.0
  %3462 = vmatprep.subr.mxu0 0.0
  %3463 = vmatpush1.msra.mxu0 0.0
  %3464 = vmatprep.subr.mxu0 0.0
  %3465 = vmatpush1.msra.mxu0 0.0
  %3466 = vmatprep.subr.mxu0 0.0
  %3467 = vmatpush1.msra.mxu0 0.0
  %3468 = vmatprep.subr.mxu0 0.0
  %3469 = vmatpush1.msra.mxu0 0.0
  %3470 = vmatprep.subr.mxu0 0.0
  %3471 = vmatpush1.msra.mxu0 0.0
  %3472 = vmatprep.subr.mxu0 0.0
  %3473 = vmatpush1.msra.mxu0 0.0
  %3474 = vmatprep.subr.mxu0 0.0
  %3475 = vmatpush1.msra.mxu0 0.0
  %3476 = vmatprep.subr.mxu0 0.0
  %3477 = vmatpush1.msra.mxu0 0.0
  %3478 = vmatprep.subr.mxu0 0.0
  %3479 = vmatpush1.msra.mxu0 0.0
  %3480 = vmatprep.subr.mxu0 0.0
  %3481 = vmatpush1.msra.mxu0 0.0
  %3482 = vmatprep.mubr.f32.mxu0 0.0
  %3483 = vmatmul.mubr.f32.gmra.mrb[0].mxu0 %v3416
  %v3484 = vpop.f32.mrb[0].mxu0
  %v3485 = vadd.f32 0.0, %v3484
  %v3486 = vpop.f32.mrb[0].mxu0
  %3487 = vdwg.mxu0
  %v3488 = vadd.f32 %v3393, %v3485
  %v3489 = vld [vmem:[#allocation3 + $0x19] sm:$0x1]
  %v3490 = vld [vmem:[#allocation3 + $0x39] sm:$0x1]
  %s3491 = scalar_lea.vmem %s5, 3200
  %v3492 = vld [vmem:[%s3491] sm:$0xff]
  %v3493 = vld [vmem:[%s3491 + $0x8] sm:$0xff]
  %v3494 = vld [vmem:[%s3491 + $0x10] sm:$0xff]
  %v3495 = vld [vmem:[%s3491 + $0x18] sm:$0xff]
  %v3496 = vld [vmem:[%s3491 + $0x20] sm:$0xff]
  %v3497 = vld [vmem:[%s3491 + $0x28] sm:$0xff]
  %v3498 = vld [vmem:[%s3491 + $0x30] sm:$0xff]
  %v3499 = vld [vmem:[%s3491 + $0x38] sm:$0xff]
  %v3500 = vld [vmem:[%s3491 + $0x40] sm:$0xff]
  %v3501 = vld [vmem:[%s3491 + $0x48] sm:$0xff]
  %v3502 = vld [vmem:[%s3491 + $0x50] sm:$0xff]
  %v3503 = vld [vmem:[%s3491 + $0x58] sm:$0xff]
  %v3504 = vld [vmem:[%s3491 + $0x60] sm:$0xff]
  %v3505 = vld [vmem:[%s3491 + $0x68] sm:$0xff]
  %v3506 = vld [vmem:[%s3491 + $0x70] sm:$0xff]
  %v3507 = vld [vmem:[%s3491 + $0x78] sm:$0xff]
  %v3510 = vrot.slane %v3490, 7
  %v3511 = vsel %vm1156, %v3510, %v3489
  %3513 = vmatprep.subr.mxu0 0.0
  %3514 = vmatpush1.msra.mxu0 %v3492
  %3515 = vmatprep.subr.mxu0 0.0
  %3516 = vmatpush1.msra.mxu0 %v3493
  %3517 = vmatprep.subr.mxu0 0.0
  %3518 = vmatpush1.msra.mxu0 %v3494
  %3519 = vmatprep.subr.mxu0 0.0
  %3520 = vmatpush1.msra.mxu0 %v3495
  %3521 = vmatprep.subr.mxu0 0.0
  %3522 = vmatpush1.msra.mxu0 %v3496
  %3523 = vmatprep.subr.mxu0 0.0
  %3524 = vmatpush1.msra.mxu0 %v3497
  %3525 = vmatprep.subr.mxu0 0.0
  %3526 = vmatpush1.msra.mxu0 %v3498
  %3527 = vmatprep.subr.mxu0 0.0
  %3528 = vmatpush1.msra.mxu0 %v3499
  %3529 = vmatprep.subr.mxu0 0.0
  %3530 = vmatpush1.msra.mxu0 %v3500
  %3531 = vmatprep.subr.mxu0 0.0
  %3532 = vmatpush1.msra.mxu0 %v3501
  %3533 = vmatprep.subr.mxu0 0.0
  %3534 = vmatpush1.msra.mxu0 %v3502
  %3535 = vmatprep.subr.mxu0 0.0
  %3536 = vmatpush1.msra.mxu0 %v3503
  %3537 = vmatprep.subr.mxu0 0.0
  %3538 = vmatpush1.msra.mxu0 %v3504
  %3539 = vmatprep.subr.mxu0 0.0
  %3540 = vmatpush1.msra.mxu0 %v3505
  %3541 = vmatprep.subr.mxu0 0.0
  %3542 = vmatpush1.msra.mxu0 %v3506
  %3543 = vmatprep.subr.mxu0 0.0
  %3544 = vmatpush1.msra.mxu0 %v3507
  %3545 = vmatprep.subr.mxu0 0.0
  %3546 = vmatpush1.msra.mxu0 0.0
  %3547 = vmatprep.subr.mxu0 0.0
  %3548 = vmatpush1.msra.mxu0 0.0
  %3549 = vmatprep.subr.mxu0 0.0
  %3550 = vmatpush1.msra.mxu0 0.0
  %3551 = vmatprep.subr.mxu0 0.0
  %3552 = vmatpush1.msra.mxu0 0.0
  %3553 = vmatprep.subr.mxu0 0.0
  %3554 = vmatpush1.msra.mxu0 0.0
  %3555 = vmatprep.subr.mxu0 0.0
  %3556 = vmatpush1.msra.mxu0 0.0
  %3557 = vmatprep.subr.mxu0 0.0
  %3558 = vmatpush1.msra.mxu0 0.0
  %3559 = vmatprep.subr.mxu0 0.0
  %3560 = vmatpush1.msra.mxu0 0.0
  %3561 = vmatprep.subr.mxu0 0.0
  %3562 = vmatpush1.msra.mxu0 0.0
  %3563 = vmatprep.subr.mxu0 0.0
  %3564 = vmatpush1.msra.mxu0 0.0
  %3565 = vmatprep.subr.mxu0 0.0
  %3566 = vmatpush1.msra.mxu0 0.0
  %3567 = vmatprep.subr.mxu0 0.0
  %3568 = vmatpush1.msra.mxu0 0.0
  %3569 = vmatprep.subr.mxu0 0.0
  %3570 = vmatpush1.msra.mxu0 0.0
  %3571 = vmatprep.subr.mxu0 0.0
  %3572 = vmatpush1.msra.mxu0 0.0
  %3573 = vmatprep.subr.mxu0 0.0
  %3574 = vmatpush1.msra.mxu0 0.0
  %3575 = vmatprep.subr.mxu0 0.0
  %3576 = vmatpush1.msra.mxu0 0.0
  %3577 = vmatprep.mubr.f32.mxu0 0.0
  %3578 = vmatmul.mubr.f32.gmra.mrb[0].mxu0 %v3511
  %v3579 = vpop.f32.mrb[0].mxu0
  %v3580 = vadd.f32 0.0, %v3579
  %v3581 = vpop.f32.mrb[0].mxu0
  %3582 = vdwg.mxu0
  %v3583 = vadd.f32 %v3488, %v3580
  %v3584 = vld [vmem:[#allocation3 + $0x1a] sm:$0x1]
  %v3585 = vld [vmem:[#allocation3 + $0x3a] sm:$0x1]
  %s3586 = scalar_lea.vmem %s5, 3328
  %v3587 = vld [vmem:[%s3586] sm:$0xff]
  %v3588 = vld [vmem:[%s3586 + $0x8] sm:$0xff]
  %v3589 = vld [vmem:[%s3586 + $0x10] sm:$0xff]
  %v3590 = vld [vmem:[%s3586 + $0x18] sm:$0xff]
  %v3591 = vld [vmem:[%s3586 + $0x20] sm:$0xff]
  %v3592 = vld [vmem:[%s3586 + $0x28] sm:$0xff]
  %v3593 = vld [vmem:[%s3586 + $0x30] sm:$0xff]
  %v3594 = vld [vmem:[%s3586 + $0x38] sm:$0xff]
  %v3595 = vld [vmem:[%s3586 + $0x40] sm:$0xff]
  %v3596 = vld [vmem:[%s3586 + $0x48] sm:$0xff]
  %v3597 = vld [vmem:[%s3586 + $0x50] sm:$0xff]
  %v3598 = vld [vmem:[%s3586 + $0x58] sm:$0xff]
  %v3599 = vld [vmem:[%s3586 + $0x60] sm:$0xff]
  %v3600 = vld [vmem:[%s3586 + $0x68] sm:$0xff]
  %v3601 = vld [vmem:[%s3586 + $0x70] sm:$0xff]
  %v3602 = vld [vmem:[%s3586 + $0x78] sm:$0xff]
  %v3605 = vrot.slane %v3585, 7
  %v3606 = vsel %vm1156, %v3605, %v3584
  %3608 = vmatprep.subr.mxu0 0.0
  %3609 = vmatpush1.msra.mxu0 %v3587
  %3610 = vmatprep.subr.mxu0 0.0
  %3611 = vmatpush1.msra.mxu0 %v3588
  %3612 = vmatprep.subr.mxu0 0.0
  %3613 = vmatpush1.msra.mxu0 %v3589
  %3614 = vmatprep.subr.mxu0 0.0
  %3615 = vmatpush1.msra.mxu0 %v3590
  %3616 = vmatprep.subr.mxu0 0.0
  %3617 = vmatpush1.msra.mxu0 %v3591
  %3618 = vmatprep.subr.mxu0 0.0
  %3619 = vmatpush1.msra.mxu0 %v3592
  %3620 = vmatprep.subr.mxu0 0.0
  %3621 = vmatpush1.msra.mxu0 %v3593
  %3622 = vmatprep.subr.mxu0 0.0
  %3623 = vmatpush1.msra.mxu0 %v3594
  %3624 = vmatprep.subr.mxu0 0.0
  %3625 = vmatpush1.msra.mxu0 %v3595
  %3626 = vmatprep.subr.mxu0 0.0
  %3627 = vmatpush1.msra.mxu0 %v3596
  %3628 = vmatprep.subr.mxu0 0.0
  %3629 = vmatpush1.msra.mxu0 %v3597
  %3630 = vmatprep.subr.mxu0 0.0
  %3631 = vmatpush1.msra.mxu0 %v3598
  %3632 = vmatprep.subr.mxu0 0.0
  %3633 = vmatpush1.msra.mxu0 %v3599
  %3634 = vmatprep.subr.mxu0 0.0
  %3635 = vmatpush1.msra.mxu0 %v3600
  %3636 = vmatprep.subr.mxu0 0.0
  %3637 = vmatpush1.msra.mxu0 %v3601
  %3638 = vmatprep.subr.mxu0 0.0
  %3639 = vmatpush1.msra.mxu0 %v3602
  %3640 = vmatprep.subr.mxu0 0.0
  %3641 = vmatpush1.msra.mxu0 0.0
  %3642 = vmatprep.subr.mxu0 0.0
  %3643 = vmatpush1.msra.mxu0 0.0
  %3644 = vmatprep.subr.mxu0 0.0
  %3645 = vmatpush1.msra.mxu0 0.0
  %3646 = vmatprep.subr.mxu0 0.0
  %3647 = vmatpush1.msra.mxu0 0.0
  %3648 = vmatprep.subr.mxu0 0.0
  %3649 = vmatpush1.msra.mxu0 0.0
  %3650 = vmatprep.subr.mxu0 0.0
  %3651 = vmatpush1.msra.mxu0 0.0
  %3652 = vmatprep.subr.mxu0 0.0
  %3653 = vmatpush1.msra.mxu0 0.0
  %3654 = vmatprep.subr.mxu0 0.0
  %3655 = vmatpush1.msra.mxu0 0.0
  %3656 = vmatprep.subr.mxu0 0.0
  %3657 = vmatpush1.msra.mxu0 0.0
  %3658 = vmatprep.subr.mxu0 0.0
  %3659 = vmatpush1.msra.mxu0 0.0
  %3660 = vmatprep.subr.mxu0 0.0
  %3661 = vmatpush1.msra.mxu0 0.0
  %3662 = vmatprep.subr.mxu0 0.0
  %3663 = vmatpush1.msra.mxu0 0.0
  %3664 = vmatprep.subr.mxu0 0.0
  %3665 = vmatpush1.msra.mxu0 0.0
  %3666 = vmatprep.subr.mxu0 0.0
  %3667 = vmatpush1.msra.mxu0 0.0
  %3668 = vmatprep.subr.mxu0 0.0
  %3669 = vmatpush1.msra.mxu0 0.0
  %3670 = vmatprep.subr.mxu0 0.0
  %3671 = vmatpush1.msra.mxu0 0.0
  %3672 = vmatprep.mubr.f32.mxu0 0.0
  %3673 = vmatmul.mubr.f32.gmra.mrb[0].mxu0 %v3606
  %v3674 = vpop.f32.mrb[0].mxu0
  %v3675 = vadd.f32 0.0, %v3674
  %v3676 = vpop.f32.mrb[0].mxu0
  %3677 = vdwg.mxu0
  %v3678 = vadd.f32 %v3583, %v3675
  %v3679 = vld [vmem:[#allocation3 + $0x1b] sm:$0x1]
  %v3680 = vld [vmem:[#allocation3 + $0x3b] sm:$0x1]
  %s3681 = scalar_lea.vmem %s5, 3456
  %v3682 = vld [vmem:[%s3681] sm:$0xff]
  %v3683 = vld [vmem:[%s3681 + $0x8] sm:$0xff]
  %v3684 = vld [vmem:[%s3681 + $0x10] sm:$0xff]
  %v3685 = vld [vmem:[%s3681 + $0x18] sm:$0xff]
  %v3686 = vld [vmem:[%s3681 + $0x20] sm:$0xff]
  %v3687 = vld [vmem:[%s3681 + $0x28] sm:$0xff]
  %v3688 = vld [vmem:[%s3681 + $0x30] sm:$0xff]
  %v3689 = vld [vmem:[%s3681 + $0x38] sm:$0xff]
  %v3690 = vld [vmem:[%s3681 + $0x40] sm:$0xff]
  %v3691 = vld [vmem:[%s3681 + $0x48] sm:$0xff]
  %v3692 = vld [vmem:[%s3681 + $0x50] sm:$0xff]
  %v3693 = vld [vmem:[%s3681 + $0x58] sm:$0xff]
  %v3694 = vld [vmem:[%s3681 + $0x60] sm:$0xff]
  %v3695 = vld [vmem:[%s3681 + $0x68] sm:$0xff]
  %v3696 = vld [vmem:[%s3681 + $0x70] sm:$0xff]
  %v3697 = vld [vmem:[%s3681 + $0x78] sm:$0xff]
  %v3700 = vrot.slane %v3680, 7
  %v3701 = vsel %vm1156, %v3700, %v3679
  %3703 = vmatprep.subr.mxu0 0.0
  %3704 = vmatpush1.msra.mxu0 %v3682
  %3705 = vmatprep.subr.mxu0 0.0
  %3706 = vmatpush1.msra.mxu0 %v3683
  %3707 = vmatprep.subr.mxu0 0.0
  %3708 = vmatpush1.msra.mxu0 %v3684
  %3709 = vmatprep.subr.mxu0 0.0
  %3710 = vmatpush1.msra.mxu0 %v3685
  %3711 = vmatprep.subr.mxu0 0.0
  %3712 = vmatpush1.msra.mxu0 %v3686
  %3713 = vmatprep.subr.mxu0 0.0
  %3714 = vmatpush1.msra.mxu0 %v3687
  %3715 = vmatprep.subr.mxu0 0.0
  %3716 = vmatpush1.msra.mxu0 %v3688
  %3717 = vmatprep.subr.mxu0 0.0
  %3718 = vmatpush1.msra.mxu0 %v3689
  %3719 = vmatprep.subr.mxu0 0.0
  %3720 = vmatpush1.msra.mxu0 %v3690
  %3721 = vmatprep.subr.mxu0 0.0
  %3722 = vmatpush1.msra.mxu0 %v3691
  %3723 = vmatprep.subr.mxu0 0.0
  %3724 = vmatpush1.msra.mxu0 %v3692
  %3725 = vmatprep.subr.mxu0 0.0
  %3726 = vmatpush1.msra.mxu0 %v3693
  %3727 = vmatprep.subr.mxu0 0.0
  %3728 = vmatpush1.msra.mxu0 %v3694
  %3729 = vmatprep.subr.mxu0 0.0
  %3730 = vmatpush1.msra.mxu0 %v3695
  %3731 = vmatprep.subr.mxu0 0.0
  %3732 = vmatpush1.msra.mxu0 %v3696
  %3733 = vmatprep.subr.mxu0 0.0
  %3734 = vmatpush1.msra.mxu0 %v3697
  %3735 = vmatprep.subr.mxu0 0.0
  %3736 = vmatpush1.msra.mxu0 0.0
  %3737 = vmatprep.subr.mxu0 0.0
  %3738 = vmatpush1.msra.mxu0 0.0
  %3739 = vmatprep.subr.mxu0 0.0
  %3740 = vmatpush1.msra.mxu0 0.0
  %3741 = vmatprep.subr.mxu0 0.0
  %3742 = vmatpush1.msra.mxu0 0.0
  %3743 = vmatprep.subr.mxu0 0.0
  %3744 = vmatpush1.msra.mxu0 0.0
  %3745 = vmatprep.subr.mxu0 0.0
  %3746 = vmatpush1.msra.mxu0 0.0
  %3747 = vmatprep.subr.mxu0 0.0
  %3748 = vmatpush1.msra.mxu0 0.0
  %3749 = vmatprep.subr.mxu0 0.0
  %3750 = vmatpush1.msra.mxu0 0.0
  %3751 = vmatprep.subr.mxu0 0.0
  %3752 = vmatpush1.msra.mxu0 0.0
  %3753 = vmatprep.subr.mxu0 0.0
  %3754 = vmatpush1.msra.mxu0 0.0
  %3755 = vmatprep.subr.mxu0 0.0
  %3756 = vmatpush1.msra.mxu0 0.0
  %3757 = vmatprep.subr.mxu0 0.0
  %3758 = vmatpush1.msra.mxu0 0.0
  %3759 = vmatprep.subr.mxu0 0.0
  %3760 = vmatpush1.msra.mxu0 0.0
  %3761 = vmatprep.subr.mxu0 0.0
  %3762 = vmatpush1.msra.mxu0 0.0
  %3763 = vmatprep.subr.mxu0 0.0
  %3764 = vmatpush1.msra.mxu0 0.0
  %3765 = vmatprep.subr.mxu0 0.0
  %3766 = vmatpush1.msra.mxu0 0.0
  %3767 = vmatprep.mubr.f32.mxu0 0.0
  %3768 = vmatmul.mubr.f32.gmra.mrb[0].mxu0 %v3701
  %v3769 = vpop.f32.mrb[0].mxu0
  %v3770 = vadd.f32 0.0, %v3769
  %v3771 = vpop.f32.mrb[0].mxu0
  %3772 = vdwg.mxu0
  %v3773 = vadd.f32 %v3678, %v3770
  %v3774 = vld [vmem:[#allocation3 + $0x1c] sm:$0x1]
  %v3775 = vld [vmem:[#allocation3 + $0x3c] sm:$0x1]
  %s3776 = scalar_lea.vmem %s5, 3584
  %v3777 = vld [vmem:[%s3776] sm:$0xff]
  %v3778 = vld [vmem:[%s3776 + $0x8] sm:$0xff]
  %v3779 = vld [vmem:[%s3776 + $0x10] sm:$0xff]
  %v3780 = vld [vmem:[%s3776 + $0x18] sm:$0xff]
  %v3781 = vld [vmem:[%s3776 + $0x20] sm:$0xff]
  %v3782 = vld [vmem:[%s3776 + $0x28] sm:$0xff]
  %v3783 = vld [vmem:[%s3776 + $0x30] sm:$0xff]
  %v3784 = vld [vmem:[%s3776 + $0x38] sm:$0xff]
  %v3785 = vld [vmem:[%s3776 + $0x40] sm:$0xff]
  %v3786 = vld [vmem:[%s3776 + $0x48] sm:$0xff]
  %v3787 = vld [vmem:[%s3776 + $0x50] sm:$0xff]
  %v3788 = vld [vmem:[%s3776 + $0x58] sm:$0xff]
  %v3789 = vld [vmem:[%s3776 + $0x60] sm:$0xff]
  %v3790 = vld [vmem:[%s3776 + $0x68] sm:$0xff]
  %v3791 = vld [vmem:[%s3776 + $0x70] sm:$0xff]
  %v3792 = vld [vmem:[%s3776 + $0x78] sm:$0xff]
  %v3795 = vrot.slane %v3775, 7
  %v3796 = vsel %vm1156, %v3795, %v3774
  %3798 = vmatprep.subr.mxu0 0.0
  %3799 = vmatpush1.msra.mxu0 %v3777
  %3800 = vmatprep.subr.mxu0 0.0
  %3801 = vmatpush1.msra.mxu0 %v3778
  %3802 = vmatprep.subr.mxu0 0.0
  %3803 = vmatpush1.msra.mxu0 %v3779
  %3804 = vmatprep.subr.mxu0 0.0
  %3805 = vmatpush1.msra.mxu0 %v3780
  %3806 = vmatprep.subr.mxu0 0.0
  %3807 = vmatpush1.msra.mxu0 %v3781
  %3808 = vmatprep.subr.mxu0 0.0
  %3809 = vmatpush1.msra.mxu0 %v3782
  %3810 = vmatprep.subr.mxu0 0.0
  %3811 = vmatpush1.msra.mxu0 %v3783
  %3812 = vmatprep.subr.mxu0 0.0
  %3813 = vmatpush1.msra.mxu0 %v3784
  %3814 = vmatprep.subr.mxu0 0.0
  %3815 = vmatpush1.msra.mxu0 %v3785
  %3816 = vmatprep.subr.mxu0 0.0
  %3817 = vmatpush1.msra.mxu0 %v3786
  %3818 = vmatprep.subr.mxu0 0.0
  %3819 = vmatpush1.msra.mxu0 %v3787
  %3820 = vmatprep.subr.mxu0 0.0
  %3821 = vmatpush1.msra.mxu0 %v3788
  %3822 = vmatprep.subr.mxu0 0.0
  %3823 = vmatpush1.msra.mxu0 %v3789
  %3824 = vmatprep.subr.mxu0 0.0
  %3825 = vmatpush1.msra.mxu0 %v3790
  %3826 = vmatprep.subr.mxu0 0.0
  %3827 = vmatpush1.msra.mxu0 %v3791
  %3828 = vmatprep.subr.mxu0 0.0
  %3829 = vmatpush1.msra.mxu0 %v3792
  %3830 = vmatprep.subr.mxu0 0.0
  %3831 = vmatpush1.msra.mxu0 0.0
  %3832 = vmatprep.subr.mxu0 0.0
  %3833 = vmatpush1.msra.mxu0 0.0
  %3834 = vmatprep.subr.mxu0 0.0
  %3835 = vmatpush1.msra.mxu0 0.0
  %3836 = vmatprep.subr.mxu0 0.0
  %3837 = vmatpush1.msra.mxu0 0.0
  %3838 = vmatprep.subr.mxu0 0.0
  %3839 = vmatpush1.msra.mxu0 0.0
  %3840 = vmatprep.subr.mxu0 0.0
  %3841 = vmatpush1.msra.mxu0 0.0
  %3842 = vmatprep.subr.mxu0 0.0
  %3843 = vmatpush1.msra.mxu0 0.0
  %3844 = vmatprep.subr.mxu0 0.0
  %3845 = vmatpush1.msra.mxu0 0.0
  %3846 = vmatprep.subr.mxu0 0.0
  %3847 = vmatpush1.msra.mxu0 0.0
  %3848 = vmatprep.subr.mxu0 0.0
  %3849 = vmatpush1.msra.mxu0 0.0
  %3850 = vmatprep.subr.mxu0 0.0
  %3851 = vmatpush1.msra.mxu0 0.0
  %3852 = vmatprep.subr.mxu0 0.0
  %3853 = vmatpush1.msra.mxu0 0.0
  %3854 = vmatprep.subr.mxu0 0.0
  %3855 = vmatpush1.msra.mxu0 0.0
  %3856 = vmatprep.subr.mxu0 0.0
  %3857 = vmatpush1.msra.mxu0 0.0
  %3858 = vmatprep.subr.mxu0 0.0
  %3859 = vmatpush1.msra.mxu0 0.0
  %3860 = vmatprep.subr.mxu0 0.0
  %3861 = vmatpush1.msra.mxu0 0.0
  %3862 = vmatprep.mubr.f32.mxu0 0.0
  %3863 = vmatmul.mubr.f32.gmra.mrb[0].mxu0 %v3796
  %v3864 = vpop.f32.mrb[0].mxu0
  %v3865 = vadd.f32 0.0, %v3864
  %v3866 = vpop.f32.mrb[0].mxu0
  %3867 = vdwg.mxu0
  %v3868 = vadd.f32 %v3773, %v3865
  %v3869 = vld [vmem:[#allocation3 + $0x1d] sm:$0x1]
  %v3870 = vld [vmem:[#allocation3 + $0x3d] sm:$0x1]
  %s3871 = scalar_lea.vmem %s5, 3712
  %v3872 = vld [vmem:[%s3871] sm:$0xff]
  %v3873 = vld [vmem:[%s3871 + $0x8] sm:$0xff]
  %v3874 = vld [vmem:[%s3871 + $0x10] sm:$0xff]
  %v3875 = vld [vmem:[%s3871 + $0x18] sm:$0xff]
  %v3876 = vld [vmem:[%s3871 + $0x20] sm:$0xff]
  %v3877 = vld [vmem:[%s3871 + $0x28] sm:$0xff]
  %v3878 = vld [vmem:[%s3871 + $0x30] sm:$0xff]
  %v3879 = vld [vmem:[%s3871 + $0x38] sm:$0xff]
  %v3880 = vld [vmem:[%s3871 + $0x40] sm:$0xff]
  %v3881 = vld [vmem:[%s3871 + $0x48] sm:$0xff]
  %v3882 = vld [vmem:[%s3871 + $0x50] sm:$0xff]
  %v3883 = vld [vmem:[%s3871 + $0x58] sm:$0xff]
  %v3884 = vld [vmem:[%s3871 + $0x60] sm:$0xff]
  %v3885 = vld [vmem:[%s3871 + $0x68] sm:$0xff]
  %v3886 = vld [vmem:[%s3871 + $0x70] sm:$0xff]
  %v3887 = vld [vmem:[%s3871 + $0x78] sm:$0xff]
  %v3890 = vrot.slane %v3870, 7
  %v3891 = vsel %vm1156, %v3890, %v3869
  %3893 = vmatprep.subr.mxu0 0.0
  %3894 = vmatpush1.msra.mxu0 %v3872
  %3895 = vmatprep.subr.mxu0 0.0
  %3896 = vmatpush1.msra.mxu0 %v3873
  %3897 = vmatprep.subr.mxu0 0.0
  %3898 = vmatpush1.msra.mxu0 %v3874
  %3899 = vmatprep.subr.mxu0 0.0
  %3900 = vmatpush1.msra.mxu0 %v3875
  %3901 = vmatprep.subr.mxu0 0.0
  %3902 = vmatpush1.msra.mxu0 %v3876
  %3903 = vmatprep.subr.mxu0 0.0
  %3904 = vmatpush1.msra.mxu0 %v3877
  %3905 = vmatprep.subr.mxu0 0.0
  %3906 = vmatpush1.msra.mxu0 %v3878
  %3907 = vmatprep.subr.mxu0 0.0
  %3908 = vmatpush1.msra.mxu0 %v3879
  %3909 = vmatprep.subr.mxu0 0.0
  %3910 = vmatpush1.msra.mxu0 %v3880
  %3911 = vmatprep.subr.mxu0 0.0
  %3912 = vmatpush1.msra.mxu0 %v3881
  %3913 = vmatprep.subr.mxu0 0.0
  %3914 = vmatpush1.msra.mxu0 %v3882
  %3915 = vmatprep.subr.mxu0 0.0
  %3916 = vmatpush1.msra.mxu0 %v3883
  %3917 = vmatprep.subr.mxu0 0.0
  %3918 = vmatpush1.msra.mxu0 %v3884
  %3919 = vmatprep.subr.mxu0 0.0
  %3920 = vmatpush1.msra.mxu0 %v3885
  %3921 = vmatprep.subr.mxu0 0.0
  %3922 = vmatpush1.msra.mxu0 %v3886
  %3923 = vmatprep.subr.mxu0 0.0
  %3924 = vmatpush1.msra.mxu0 %v3887
  %3925 = vmatprep.subr.mxu0 0.0
  %3926 = vmatpush1.msra.mxu0 0.0
  %3927 = vmatprep.subr.mxu0 0.0
  %3928 = vmatpush1.msra.mxu0 0.0
  %3929 = vmatprep.subr.mxu0 0.0
  %3930 = vmatpush1.msra.mxu0 0.0
  %3931 = vmatprep.subr.mxu0 0.0
  %3932 = vmatpush1.msra.mxu0 0.0
  %3933 = vmatprep.subr.mxu0 0.0
  %3934 = vmatpush1.msra.mxu0 0.0
  %3935 = vmatprep.subr.mxu0 0.0
  %3936 = vmatpush1.msra.mxu0 0.0
  %3937 = vmatprep.subr.mxu0 0.0
  %3938 = vmatpush1.msra.mxu0 0.0
  %3939 = vmatprep.subr.mxu0 0.0
  %3940 = vmatpush1.msra.mxu0 0.0
  %3941 = vmatprep.subr.mxu0 0.0
  %3942 = vmatpush1.msra.mxu0 0.0
  %3943 = vmatprep.subr.mxu0 0.0
  %3944 = vmatpush1.msra.mxu0 0.0
  %3945 = vmatprep.subr.mxu0 0.0
  %3946 = vmatpush1.msra.mxu0 0.0
  %3947 = vmatprep.subr.mxu0 0.0
  %3948 = vmatpush1.msra.mxu0 0.0
  %3949 = vmatprep.subr.mxu0 0.0
  %3950 = vmatpush1.msra.mxu0 0.0
  %3951 = vmatprep.subr.mxu0 0.0
  %3952 = vmatpush1.msra.mxu0 0.0
  %3953 = vmatprep.subr.mxu0 0.0
  %3954 = vmatpush1.msra.mxu0 0.0
  %3955 = vmatprep.subr.mxu0 0.0
  %3956 = vmatpush1.msra.mxu0 0.0
  %3957 = vmatprep.mubr.f32.mxu0 0.0
  %3958 = vmatmul.mubr.f32.gmra.mrb[0].mxu0 %v3891
  %v3959 = vpop.f32.mrb[0].mxu0
  %v3960 = vadd.f32 0.0, %v3959
  %v3961 = vpop.f32.mrb[0].mxu0
  %3962 = vdwg.mxu0
  %v3963 = vadd.f32 %v3868, %v3960
  %v3964 = vld [vmem:[#allocation3 + $0x1e] sm:$0x1]
  %v3965 = vld [vmem:[#allocation3 + $0x3e] sm:$0x1]
  %s3966 = scalar_lea.vmem %s5, 3840
  %v3967 = vld [vmem:[%s3966] sm:$0xff]
  %v3968 = vld [vmem:[%s3966 + $0x8] sm:$0xff]
  %v3969 = vld [vmem:[%s3966 + $0x10] sm:$0xff]
  %v3970 = vld [vmem:[%s3966 + $0x18] sm:$0xff]
  %v3971 = vld [vmem:[%s3966 + $0x20] sm:$0xff]
  %v3972 = vld [vmem:[%s3966 + $0x28] sm:$0xff]
  %v3973 = vld [vmem:[%s3966 + $0x30] sm:$0xff]
  %v3974 = vld [vmem:[%s3966 + $0x38] sm:$0xff]
  %v3975 = vld [vmem:[%s3966 + $0x40] sm:$0xff]
  %v3976 = vld [vmem:[%s3966 + $0x48] sm:$0xff]
  %v3977 = vld [vmem:[%s3966 + $0x50] sm:$0xff]
  %v3978 = vld [vmem:[%s3966 + $0x58] sm:$0xff]
  %v3979 = vld [vmem:[%s3966 + $0x60] sm:$0xff]
  %v3980 = vld [vmem:[%s3966 + $0x68] sm:$0xff]
  %v3981 = vld [vmem:[%s3966 + $0x70] sm:$0xff]
  %v3982 = vld [vmem:[%s3966 + $0x78] sm:$0xff]
  %v3985 = vrot.slane %v3965, 7
  %v3986 = vsel %vm1156, %v3985, %v3964
  %3988 = vmatprep.subr.mxu0 0.0
  %3989 = vmatpush1.msra.mxu0 %v3967
  %3990 = vmatprep.subr.mxu0 0.0
  %3991 = vmatpush1.msra.mxu0 %v3968
  %3992 = vmatprep.subr.mxu0 0.0
  %3993 = vmatpush1.msra.mxu0 %v3969
  %3994 = vmatprep.subr.mxu0 0.0
  %3995 = vmatpush1.msra.mxu0 %v3970
  %3996 = vmatprep.subr.mxu0 0.0
  %3997 = vmatpush1.msra.mxu0 %v3971
  %3998 = vmatprep.subr.mxu0 0.0
  %3999 = vmatpush1.msra.mxu0 %v3972
  %4000 = vmatprep.subr.mxu0 0.0
  %4001 = vmatpush1.msra.mxu0 %v3973
  %4002 = vmatprep.subr.mxu0 0.0
  %4003 = vmatpush1.msra.mxu0 %v3974
  %4004 = vmatprep.subr.mxu0 0.0
  %4005 = vmatpush1.msra.mxu0 %v3975
  %4006 = vmatprep.subr.mxu0 0.0
  %4007 = vmatpush1.msra.mxu0 %v3976
  %4008 = vmatprep.subr.mxu0 0.0
  %4009 = vmatpush1.msra.mxu0 %v3977
  %4010 = vmatprep.subr.mxu0 0.0
  %4011 = vmatpush1.msra.mxu0 %v3978
  %4012 = vmatprep.subr.mxu0 0.0
  %4013 = vmatpush1.msra.mxu0 %v3979
  %4014 = vmatprep.subr.mxu0 0.0
  %4015 = vmatpush1.msra.mxu0 %v3980
  %4016 = vmatprep.subr.mxu0 0.0
  %4017 = vmatpush1.msra.mxu0 %v3981
  %4018 = vmatprep.subr.mxu0 0.0
  %4019 = vmatpush1.msra.mxu0 %v3982
  %4020 = vmatprep.subr.mxu0 0.0
  %4021 = vmatpush1.msra.mxu0 0.0
  %4022 = vmatprep.subr.mxu0 0.0
  %4023 = vmatpush1.msra.mxu0 0.0
  %4024 = vmatprep.subr.mxu0 0.0
  %4025 = vmatpush1.msra.mxu0 0.0
  %4026 = vmatprep.subr.mxu0 0.0
  %4027 = vmatpush1.msra.mxu0 0.0
  %4028 = vmatprep.subr.mxu0 0.0
  %4029 = vmatpush1.msra.mxu0 0.0
  %4030 = vmatprep.subr.mxu0 0.0
  %4031 = vmatpush1.msra.mxu0 0.0
  %4032 = vmatprep.subr.mxu0 0.0
  %4033 = vmatpush1.msra.mxu0 0.0
  %4034 = vmatprep.subr.mxu0 0.0
  %4035 = vmatpush1.msra.mxu0 0.0
  %4036 = vmatprep.subr.mxu0 0.0
  %4037 = vmatpush1.msra.mxu0 0.0
  %4038 = vmatprep.subr.mxu0 0.0
  %4039 = vmatpush1.msra.mxu0 0.0
  %4040 = vmatprep.subr.mxu0 0.0
  %4041 = vmatpush1.msra.mxu0 0.0
  %4042 = vmatprep.subr.mxu0 0.0
  %4043 = vmatpush1.msra.mxu0 0.0
  %4044 = vmatprep.subr.mxu0 0.0
  %4045 = vmatpush1.msra.mxu0 0.0
  %4046 = vmatprep.subr.mxu0 0.0
  %4047 = vmatpush1.msra.mxu0 0.0
  %4048 = vmatprep.subr.mxu0 0.0
  %4049 = vmatpush1.msra.mxu0 0.0
  %4050 = vmatprep.subr.mxu0 0.0
  %4051 = vmatpush1.msra.mxu0 0.0
  %4052 = vmatprep.mubr.f32.mxu0 0.0
  %4053 = vmatmul.mubr.f32.gmra.mrb[0].mxu0 %v3986
  %v4054 = vpop.f32.mrb[0].mxu0
  %v4055 = vadd.f32 0.0, %v4054
  %v4056 = vpop.f32.mrb[0].mxu0
  %4057 = vdwg.mxu0
  %v4058 = vadd.f32 %v3963, %v4055
  %v4059 = vld [vmem:[#allocation3 + $0x1f] sm:$0x1]
  %v4060 = vld [vmem:[#allocation3 + $0x3f] sm:$0x1]
  %s4061 = scalar_lea.vmem %s5, 3968
  %v4062 = vld [vmem:[%s4061] sm:$0xff]
  %v4063 = vld [vmem:[%s4061 + $0x8] sm:$0xff]
  %v4064 = vld [vmem:[%s4061 + $0x10] sm:$0xff]
  %v4065 = vld [vmem:[%s4061 + $0x18] sm:$0xff]
  %v4066 = vld [vmem:[%s4061 + $0x20] sm:$0xff]
  %v4067 = vld [vmem:[%s4061 + $0x28] sm:$0xff]
  %v4068 = vld [vmem:[%s4061 + $0x30] sm:$0xff]
  %v4069 = vld [vmem:[%s4061 + $0x38] sm:$0xff]
  %v4070 = vld [vmem:[%s4061 + $0x40] sm:$0xff]
  %v4071 = vld [vmem:[%s4061 + $0x48] sm:$0xff]
  %v4072 = vld [vmem:[%s4061 + $0x50] sm:$0xff]
  %v4073 = vld [vmem:[%s4061 + $0x58] sm:$0xff]
  %v4074 = vld [vmem:[%s4061 + $0x60] sm:$0xff]
  %v4075 = vld [vmem:[%s4061 + $0x68] sm:$0xff]
  %v4076 = vld [vmem:[%s4061 + $0x70] sm:$0xff]
  %v4077 = vld [vmem:[%s4061 + $0x78] sm:$0xff]
  %v4080 = vrot.slane %v4060, 7
  %v4081 = vsel %vm1156, %v4080, %v4059
  %4083 = vmatprep.subr.mxu0 0.0
  %4084 = vmatpush1.msra.mxu0 %v4062
  %4085 = vmatprep.subr.mxu0 0.0
  %4086 = vmatpush1.msra.mxu0 %v4063
  %4087 = vmatprep.subr.mxu0 0.0
  %4088 = vmatpush1.msra.mxu0 %v4064
  %4089 = vmatprep.subr.mxu0 0.0
  %4090 = vmatpush1.msra.mxu0 %v4065
  %4091 = vmatprep.subr.mxu0 0.0
  %4092 = vmatpush1.msra.mxu0 %v4066
  %4093 = vmatprep.subr.mxu0 0.0
  %4094 = vmatpush1.msra.mxu0 %v4067
  %4095 = vmatprep.subr.mxu0 0.0
  %4096 = vmatpush1.msra.mxu0 %v4068
  %4097 = vmatprep.subr.mxu0 0.0
  %4098 = vmatpush1.msra.mxu0 %v4069
  %4099 = vmatprep.subr.mxu0 0.0
  %4100 = vmatpush1.msra.mxu0 %v4070
  %4101 = vmatprep.subr.mxu0 0.0
  %4102 = vmatpush1.msra.mxu0 %v4071
  %4103 = vmatprep.subr.mxu0 0.0
  %4104 = vmatpush1.msra.mxu0 %v4072
  %4105 = vmatprep.subr.mxu0 0.0
  %4106 = vmatpush1.msra.mxu0 %v4073
  %4107 = vmatprep.subr.mxu0 0.0
  %4108 = vmatpush1.msra.mxu0 %v4074
  %4109 = vmatprep.subr.mxu0 0.0
  %4110 = vmatpush1.msra.mxu0 %v4075
  %4111 = vmatprep.subr.mxu0 0.0
  %4112 = vmatpush1.msra.mxu0 %v4076
  %4113 = vmatprep.subr.mxu0 0.0
  %4114 = vmatpush1.msra.mxu0 %v4077
  %4115 = vmatprep.subr.mxu0 0.0
  %4116 = vmatpush1.msra.mxu0 0.0
  %4117 = vmatprep.subr.mxu0 0.0
  %4118 = vmatpush1.msra.mxu0 0.0
  %4119 = vmatprep.subr.mxu0 0.0
  %4120 = vmatpush1.msra.mxu0 0.0
  %4121 = vmatprep.subr.mxu0 0.0
  %4122 = vmatpush1.msra.mxu0 0.0
  %4123 = vmatprep.subr.mxu0 0.0
  %4124 = vmatpush1.msra.mxu0 0.0
  %4125 = vmatprep.subr.mxu0 0.0
  %4126 = vmatpush1.msra.mxu0 0.0
  %4127 = vmatprep.subr.mxu0 0.0
  %4128 = vmatpush1.msra.mxu0 0.0
  %4129 = vmatprep.subr.mxu0 0.0
  %4130 = vmatpush1.msra.mxu0 0.0
  %4131 = vmatprep.subr.mxu0 0.0
  %4132 = vmatpush1.msra.mxu0 0.0
  %4133 = vmatprep.subr.mxu0 0.0
  %4134 = vmatpush1.msra.mxu0 0.0
  %4135 = vmatprep.subr.mxu0 0.0
  %4136 = vmatpush1.msra.mxu0 0.0
  %4137 = vmatprep.subr.mxu0 0.0
  %4138 = vmatpush1.msra.mxu0 0.0
  %4139 = vmatprep.subr.mxu0 0.0
  %4140 = vmatpush1.msra.mxu0 0.0
  %4141 = vmatprep.subr.mxu0 0.0
  %4142 = vmatpush1.msra.mxu0 0.0
  %4143 = vmatprep.subr.mxu0 0.0
  %4144 = vmatpush1.msra.mxu0 0.0
  %4145 = vmatprep.subr.mxu0 0.0
  %4146 = vmatpush1.msra.mxu0 0.0
  %4147 = vmatprep.mubr.f32.mxu0 0.0
  %4148 = vmatmul.mubr.f32.gmra.mrb[0].mxu0 %v4081
  %v4149 = vpop.f32.mrb[0].mxu0
  %v4150 = vadd.f32 0.0, %v4149
  %v4151 = vpop.f32.mrb[0].mxu0
  %4152 = vdwg.mxu0
  %v4153 = vadd.f32 %v4058, %v4150
  %v4154 = vld [vmem:[#allocation2] sm:$0x3]
  %v4155 = vadd.f32 %v4154, %v4153
  %vm4156 = vcmask 517120
  %4157 = vst.msk [vmem:[#allocation2] sm:$0x3] %vm4156, %v4155
  // Predicated region
  $region65: #{tpu_custom_call.1} parent=0 // pred_check
    %p4158 = pneg %p46
  $region66: #{tpu_custom_call.1} parent=0 // pred_check_branch
    %4160 = sbr.rel (%p4158) target = $region68
  $region67: #{tpu_custom_call.1} parent=0 // pred_region
    %v4161 = vld [vmem:[#allocation2] sm:$0x3]
    %v4162 = vld [vmem:[%s6] sm:$0x1]
    %v4164 = vlaneseq
    %v4165 = vshrl.u32 %v4164, 7
    %v4166 = vsub.s32 0, %v4165
    %v4167 = vrot.slane %v4162, %v4166
    %v4169 = vadd.f32 %v4161, %v4167
    %v4170 = vmax.f32 %v4169, 0.0
    %v4171 = vld [vmem:[%s7] sm:$0xff]
    %v4172 = vld [vmem:[%s7 + $0x8] sm:$0xff]
    %v4173 = vld [vmem:[%s7 + $0x10] sm:$0xff]
    %v4174 = vld [vmem:[%s7 + $0x18] sm:$0xff]
    %v4175 = vld [vmem:[%s7 + $0x20] sm:$0xff]
    %v4176 = vld [vmem:[%s7 + $0x28] sm:$0xff]
    %v4177 = vld [vmem:[%s7 + $0x30] sm:$0xff]
    %v4178 = vld [vmem:[%s7 + $0x38] sm:$0xff]
    %v4179 = vld [vmem:[%s8] sm:$0x1]
    %v4181 = vlaneseq
    %v4182 = vshrl.u32 %v4181, 7
    %v4183 = vsub.s32 0, %v4182
    %v4184 = vrot.slane %v4179, %v4183
    %vm4186 = vcmask 523264
    %v4188 = vsel %vm4186, %v4170, 0
    %4190 = vmatprep.subr.mxu0 0.0
    %4191 = vmatpush1.msra.mxu0 %v4171
    %4192 = vmatprep.subr.mxu0 0.0
    %4193 = vmatpush1.msra.mxu0 %v4172
    %4194 = vmatprep.subr.mxu0 0.0
    %4195 = vmatpush1.msra.mxu0 %v4173
    %4196 = vmatprep.subr.mxu0 0.0
    %4197 = vmatpush1.msra.mxu0 %v4174
    %4198 = vmatprep.subr.mxu0 0.0
    %4199 = vmatpush1.msra.mxu0 %v4175
    %4200 = vmatprep.subr.mxu0 0.0
    %4201 = vmatpush1.msra.mxu0 %v4176
    %4202 = vmatprep.subr.mxu0 0.0
    %4203 = vmatpush1.msra.mxu0 %v4177
    %4204 = vmatprep.subr.mxu0 0.0
    %4205 = vmatpush1.msra.mxu0 %v4178
    %4206 = vmatprep.subr.mxu0 0.0
    %4207 = vmatpush1.msra.mxu0 0.0
    %4208 = vmatprep.subr.mxu0 0.0
    %4209 = vmatpush1.msra.mxu0 0.0
    %4210 = vmatprep.subr.mxu0 0.0
    %4211 = vmatpush1.msra.mxu0 0.0
    %4212 = vmatprep.subr.mxu0 0.0
    %4213 = vmatpush1.msra.mxu0 0.0
    %4214 = vmatprep.subr.mxu0 0.0
    %4215 = vmatpush1.msra.mxu0 0.0
    %4216 = vmatprep.subr.mxu0 0.0
    %4217 = vmatpush1.msra.mxu0 0.0
    %4218 = vmatprep.subr.mxu0 0.0
    %4219 = vmatpush1.msra.mxu0 0.0
    %4220 = vmatprep.subr.mxu0 0.0
    %4221 = vmatpush1.msra.mxu0 0.0
    %4222 = vmatprep.subr.mxu0 0.0
    %4223 = vmatpush1.msra.mxu0 0.0
    %4224 = vmatprep.subr.mxu0 0.0
    %4225 = vmatpush1.msra.mxu0 0.0
    %4226 = vmatprep.subr.mxu0 0.0
    %4227 = vmatpush1.msra.mxu0 0.0
    %4228 = vmatprep.subr.mxu0 0.0
    %4229 = vmatpush1.msra.mxu0 0.0
    %4230 = vmatprep.subr.mxu0 0.0
    %4231 = vmatpush1.msra.mxu0 0.0
    %4232 = vmatprep.subr.mxu0 0.0
    %4233 = vmatpush1.msra.mxu0 0.0
    %4234 = vmatprep.subr.mxu0 0.0
    %4235 = vmatpush1.msra.mxu0 0.0
    %4236 = vmatprep.subr.mxu0 0.0
    %4237 = vmatpush1.msra.mxu0 0.0
    %4238 = vmatprep.subr.mxu0 0.0
    %4239 = vmatpush1.msra.mxu0 0.0
    %4240 = vmatprep.subr.mxu0 0.0
    %4241 = vmatpush1.msra.mxu0 0.0
    %4242 = vmatprep.subr.mxu0 0.0
    %4243 = vmatpush1.msra.mxu0 0.0
    %4244 = vmatprep.subr.mxu0 0.0
    %4245 = vmatpush1.msra.mxu0 0.0
    %4246 = vmatprep.subr.mxu0 0.0
    %4247 = vmatpush1.msra.mxu0 0.0
    %4248 = vmatprep.subr.mxu0 0.0
    %4249 = vmatpush1.msra.mxu0 0.0
    %4250 = vmatprep.subr.mxu0 0.0
    %4251 = vmatpush1.msra.mxu0 0.0
    %4252 = vmatprep.subr.mxu0 0.0
    %4253 = vmatpush1.msra.mxu0 0.0
    %4254 = vmatprep.mubr.f32.mxu0 0.0
    %4255 = vmatmul.mubr.f32.gmra.mrb[0].mxu0 %v4188
    %v4256 = vpop.f32.mrb[0].mxu0
    %v4257 = vadd.f32 %v4184, %v4256
    %v4258 = vpop.f32.mrb[0].mxu0
    %4259 = vdwg.mxu0
    %v4260 = vmax.f32 %v4257, 0.0
    %v4261 = vld [vmem:[%s9] sm:$0xff]
    %v4262 = vld [vmem:[%s9 + $0x8] sm:$0x3]
    %v4263 = vld [vmem:[%s10] sm:$0x1]
    %v4265 = vlaneseq
    %v4266 = vshrl.u32 %v4265, 7
    %v4267 = vsub.s32 0, %v4266
    %v4268 = vrot.slane %v4263, %v4267
    %vm4270 = vcmask 80896
    %v4272 = vsel %vm4270, %v4260, 0
    %vm4274 = vcmask 1041408
    %v4276 = vsel %vm4274, %v4262, 0
    %4278 = vmatprep.subr.mxu0 0.0
    %4279 = vmatpush1.msra.mxu0 %v4261
    %4280 = vmatprep.subr.mxu0 0.0
    %4281 = vmatpush1.msra.mxu0 %v4276
    %4282 = vmatprep.subr.mxu0 0.0
    %4283 = vmatpush1.msra.mxu0 0.0
    %4284 = vmatprep.subr.mxu0 0.0
    %4285 = vmatpush1.msra.mxu0 0.0
    %4286 = vmatprep.subr.mxu0 0.0
    %4287 = vmatpush1.msra.mxu0 0.0
    %4288 = vmatprep.subr.mxu0 0.0
    %4289 = vmatpush1.msra.mxu0 0.0
    %4290 = vmatprep.subr.mxu0 0.0
    %4291 = vmatpush1.msra.mxu0 0.0
    %4292 = vmatprep.subr.mxu0 0.0
    %4293 = vmatpush1.msra.mxu0 0.0
    %4294 = vmatprep.subr.mxu0 0.0
    %4295 = vmatpush1.msra.mxu0 0.0
    %4296 = vmatprep.subr.mxu0 0.0
    %4297 = vmatpush1.msra.mxu0 0.0
    %4298 = vmatprep.subr.mxu0 0.0
    %4299 = vmatpush1.msra.mxu0 0.0
    %4300 = vmatprep.subr.mxu0 0.0
    %4301 = vmatpush1.msra.mxu0 0.0
    %4302 = vmatprep.subr.mxu0 0.0
    %4303 = vmatpush1.msra.mxu0 0.0
    %4304 = vmatprep.subr.mxu0 0.0
    %4305 = vmatpush1.msra.mxu0 0.0
    %4306 = vmatprep.subr.mxu0 0.0
    %4307 = vmatpush1.msra.mxu0 0.0
    %4308 = vmatprep.subr.mxu0 0.0
    %4309 = vmatpush1.msra.mxu0 0.0
    %4310 = vmatprep.subr.mxu0 0.0
    %4311 = vmatpush1.msra.mxu0 0.0
    %4312 = vmatprep.subr.mxu0 0.0
    %4313 = vmatpush1.msra.mxu0 0.0
    %4314 = vmatprep.subr.mxu0 0.0
    %4315 = vmatpush1.msra.mxu0 0.0
    %4316 = vmatprep.subr.mxu0 0.0
    %4317 = vmatpush1.msra.mxu0 0.0
    %4318 = vmatprep.subr.mxu0 0.0
    %4319 = vmatpush1.msra.mxu0 0.0
    %4320 = vmatprep.subr.mxu0 0.0
    %4321 = vmatpush1.msra.mxu0 0.0
    %4322 = vmatprep.subr.mxu0 0.0
    %4323 = vmatpush1.msra.mxu0 0.0
    %4324 = vmatprep.subr.mxu0 0.0
    %4325 = vmatpush1.msra.mxu0 0.0
    %4326 = vmatprep.subr.mxu0 0.0
    %4327 = vmatpush1.msra.mxu0 0.0
    %4328 = vmatprep.subr.mxu0 0.0
    %4329 = vmatpush1.msra.mxu0 0.0
    %4330 = vmatprep.subr.mxu0 0.0
    %4331 = vmatpush1.msra.mxu0 0.0
    %4332 = vmatprep.subr.mxu0 0.0
    %4333 = vmatpush1.msra.mxu0 0.0
    %4334 = vmatprep.subr.mxu0 0.0
    %4335 = vmatpush1.msra.mxu0 0.0
    %4336 = vmatprep.subr.mxu0 0.0
    %4337 = vmatpush1.msra.mxu0 0.0
    %4338 = vmatprep.subr.mxu0 0.0
    %4339 = vmatpush1.msra.mxu0 0.0
    %4340 = vmatprep.subr.mxu0 0.0
    %4341 = vmatpush1.msra.mxu0 0.0
    %4342 = vmatprep.mubr.f32.mxu0 0.0
    %4343 = vmatmul.mubr.f32.gmra.mrb[0].mxu0 %v4272
    %v4344 = vpop.f32.mrb[0].mxu0
    %v4345 = vadd.f32 %v4268, %v4344
    %v4346 = vpop.f32.mrb[0].mxu0
    %4347 = vdwg.mxu0
    %v4348 = vmax.f32 %v4345, 0.0
    %v4349 = vld [vmem:[%s11] sm:$0xff]
    %v4350 = vld [vmem:[#allocation4] sm:$0x1]
    %v4352 = vlaneseq
    %v4353 = vshrl.u32 %v4352, 7
    %v4354 = vsub.s32 0, %v4353
    %v4355 = vrot.slane %v4350, %v4354
    %vm4357 = vcmask 64512
    %v4359 = vsel %vm4357, %v4348, 0
    %4361 = vmatprep.subr.mxu0 0.0
    %4362 = vmatpush1.msra.mxu0 %v4349
    %4363 = vmatprep.subr.mxu0 0.0
    %4364 = vmatpush1.msra.mxu0 0.0
    %4365 = vmatprep.subr.mxu0 0.0
    %4366 = vmatpush1.msra.mxu0 0.0
    %4367 = vmatprep.subr.mxu0 0.0
    %4368 = vmatpush1.msra.mxu0 0.0
    %4369 = vmatprep.subr.mxu0 0.0
    %4370 = vmatpush1.msra.mxu0 0.0
    %4371 = vmatprep.subr.mxu0 0.0
    %4372 = vmatpush1.msra.mxu0 0.0
    %4373 = vmatprep.subr.mxu0 0.0
    %4374 = vmatpush1.msra.mxu0 0.0
    %4375 = vmatprep.subr.mxu0 0.0
    %4376 = vmatpush1.msra.mxu0 0.0
    %4377 = vmatprep.subr.mxu0 0.0
    %4378 = vmatpush1.msra.mxu0 0.0
    %4379 = vmatprep.subr.mxu0 0.0
    %4380 = vmatpush1.msra.mxu0 0.0
    %4381 = vmatprep.subr.mxu0 0.0
    %4382 = vmatpush1.msra.mxu0 0.0
    %4383 = vmatprep.subr.mxu0 0.0
    %4384 = vmatpush1.msra.mxu0 0.0
    %4385 = vmatprep.subr.mxu0 0.0
    %4386 = vmatpush1.msra.mxu0 0.0
    %4387 = vmatprep.subr.mxu0 0.0
    %4388 = vmatpush1.msra.mxu0 0.0
    %4389 = vmatprep.subr.mxu0 0.0
    %4390 = vmatpush1.msra.mxu0 0.0
    %4391 = vmatprep.subr.mxu0 0.0
    %4392 = vmatpush1.msra.mxu0 0.0
    %4393 = vmatprep.subr.mxu0 0.0
    %4394 = vmatpush1.msra.mxu0 0.0
    %4395 = vmatprep.subr.mxu0 0.0
    %4396 = vmatpush1.msra.mxu0 0.0
    %4397 = vmatprep.subr.mxu0 0.0
    %4398 = vmatpush1.msra.mxu0 0.0
    %4399 = vmatprep.subr.mxu0 0.0
    %4400 = vmatpush1.msra.mxu0 0.0
    %4401 = vmatprep.subr.mxu0 0.0
    %4402 = vmatpush1.msra.mxu0 0.0
    %4403 = vmatprep.subr.mxu0 0.0
    %4404 = vmatpush1.msra.mxu0 0.0
    %4405 = vmatprep.subr.mxu0 0.0
    %4406 = vmatpush1.msra.mxu0 0.0
    %4407 = vmatprep.subr.mxu0 0.0
    %4408 = vmatpush1.msra.mxu0 0.0
    %4409 = vmatprep.subr.mxu0 0.0
    %4410 = vmatpush1.msra.mxu0 0.0
    %4411 = vmatprep.subr.mxu0 0.0
    %4412 = vmatpush1.msra.mxu0 0.0
    %4413 = vmatprep.subr.mxu0 0.0
    %4414 = vmatpush1.msra.mxu0 0.0
    %4415 = vmatprep.subr.mxu0 0.0
    %4416 = vmatpush1.msra.mxu0 0.0
    %4417 = vmatprep.subr.mxu0 0.0
    %4418 = vmatpush1.msra.mxu0 0.0
    %4419 = vmatprep.subr.mxu0 0.0
    %4420 = vmatpush1.msra.mxu0 0.0
    %4421 = vmatprep.subr.mxu0 0.0
    %4422 = vmatpush1.msra.mxu0 0.0
    %4423 = vmatprep.subr.mxu0 0.0
    %4424 = vmatpush1.msra.mxu0 0.0
    %4425 = vmatprep.mubr.f32.mxu0 0.0
    %4426 = vmatmul.mubr.f32.gmra.mrb[0].mxu0 %v4359
    %v4427 = vpop.f32.mrb[0].mxu0
    %v4428 = vadd.f32 %v4355, %v4427
    %v4429 = vpop.f32.mrb[0].mxu0
    %4430 = vdwg.mxu0
    %v4431 = vxor.u32 %v4428, 2147483648
    %v4432 = vmul.f32 %v4431, 1.442695
    %v4433 = vpow.pop %v4432
    %v4434 = vadd.f32 %v4433, 1.0
    %v4435 = vrcp.pop %v4434
    %v4436 = vmul.f32 1.0, %v4435
    %vm4437 = vcmask 1024
    %4438 = vst.msk [vmem:[%s13] sm:$0x3] %vm4437, %v4436
  $region68: #{tpu_custom_call.1} parent=0 // pred_fallthru
    _
  // Predicated region
  $region69: #{tpu_custom_call.1} parent=0 // pred_check
    _
  $region70: #{tpu_custom_call.1} parent=0 // pred_check_branch
    %4440 = sbr.rel (0) target = $region72
  $region71: #{tpu_custom_call.1} parent=0 // pred_region
    _
  $region72: #{tpu_custom_call.1} parent=0 // pred_fallthru
    _
  // Predicated region
  $region73: #{tpu_custom_call.1} parent=0 // pred_check
    _
  $region74: #{tpu_custom_call.1} parent=0 // pred_check_branch
    %4442 = sbr.rel (0) target = $region76
  $region75: #{tpu_custom_call.1} parent=0 // pred_region
    _
  $region76: #{tpu_custom_call.1} parent=0 // pred_fallthru
    _

</llo_original>
